<compile_context>
chip_gen: v6e
topology: v6e:2x2x1
jax: 0.10.0
libtpu: 0.0.40
codegen_flags: <defaults>
</compile_context>

<pallas_src>
import functools
import math

import jax
import jax.numpy as jnp
from jax.experimental import pallas as pl
from jax.experimental.pallas import tpu as pltpu

# ----------------------------------------------------------------------------
# Small synthetic config (consistent with CognitiveConfig, scaled down)
# ----------------------------------------------------------------------------
CFG = dict(
    hidden_size=64,
    intermediate_size=128,
    num_attention_heads=4,
    num_key_value_heads=2,
    num_hidden_layers=4,
    layer_idx=3,                 # == num_hidden_layers-1 -> all cognitive modules on
    working_memory_size=32,
    working_memory_update_freq=1,
    num_reasoning_heads=2,
    reasoning_dim=32,
    reasoning_layers=(3,),
    num_states=8,
    state_dim=32,
    action_space_size=16,
    rms_norm_eps=1e-6,
    rope_theta=10000.0,
)


# ----------------------------------------------------------------------------
# Shared math helpers (pure jnp: used both inside the kernel and by the reference)
# ----------------------------------------------------------------------------
def _rmsnorm(x, w, eps):
    var = jnp.mean(x * x, axis=-1, keepdims=True)
    return x * jax.lax.rsqrt(var + eps) * w


def _softmax_rows(s):
    m = jnp.max(s, axis=-1, keepdims=True)
    e = jnp.exp(s - m)
    return e / jnp.sum(e, axis=-1, keepdims=True)      # exact divide (PyTorch parity)


_sigmoid = jax.nn.sigmoid


def _mm(a, b):
    return jnp.dot(a, b, preferred_element_type=jnp.float32)


def _dot_nt(a, b):
    # a @ b^T (contract last dims of both operands), f32 accumulation.
    return jax.lax.dot_general(a, b, (((1,), (1,)), ((), ())),
                               preferred_element_type=jnp.float32)


# ----------------------------------------------------------------------------
# The full layer math, on flat [B*S, H] activations.  Called by the kernel (on VMEM
# refs' values) and by the pure-JAX reference (on arrays) so both paths share math.
# ----------------------------------------------------------------------------
def _layer_math(x, ln1, wqkv, wo, cos_t, sin_t,
                mem, wmq, wmk, wmv, wmo,
                ln2, wgu, wd,
                lnr, wqkvr, wor, wg, bg, wstep, bstep, wconf, bconf,
                cur, sew, seb, sdw, sdb,
                t1w, t1b, t2w, t2b,
                p1w, p1b, p2w, p2b,
                *, B, S, nH, nKV, Dh, nR, Rd, Sd, inter, eps):
    H = x.shape[-1]
    half = Dh // 2
    n_rep = nH // nKV
    x = x.astype(jnp.float32)

    # ---- stage 1: rmsnorm -> fused QKV -> RoPE -> GQA attention -> o_proj -> residual ----
    hn = _rmsnorm(x, ln1, eps)
    qkv = _mm(hn, wqkv)                                       # [B*S, (nH+2*nKV)*Dh]

    def rope(t):                                              # HF half-form RoPE
        t1, t2 = t[:, :half], t[:, half:]
        return jnp.concatenate([t1 * cos_t - t2 * sin_t,
                                t2 * cos_t + t1 * sin_t], axis=-1)

    koff, voff = nH * Dh, (nH + nKV) * Dh
    q_rot = [rope(qkv[:, h * Dh:(h + 1) * Dh]) for h in range(nH)]
    k_rot = [rope(qkv[:, koff + j * Dh:koff + (j + 1) * Dh]) for j in range(nKV)]
    v_kv = [qkv[:, voff + j * Dh:voff + (j + 1) * Dh] for j in range(nKV)]

    scale = 1.0 / math.sqrt(Dh)
    rows = []
    for b in range(B):                                        # static unroll (B small)
        r0, r1 = b * S, (b + 1) * S
        heads = []
        for h in range(nH):                                   # static unroll over heads
            j = h // n_rep                                    # GQA kv head (no repeat)
            p = _softmax_rows(_dot_nt(q_rot[h][r0:r1], k_rot[j][r0:r1]) * scale)
            heads.append(_mm(p, v_kv[j][r0:r1]))              # [S, Dh]
        rows.append(jnp.concatenate(heads, axis=-1))          # [S, nH*Dh]
    attn = jnp.concatenate(rows, axis=0)                      # [B*S, nH*Dh]
    h1 = x + _mm(attn, wo)                                    # one merged o_proj matmul

    # ---- stage 2: WorkingMemoryModule (+ 0.1 * residual blend) ----
    q = _mm(h1, wmq)                                          # [B*S, H]
    k = _mm(mem, wmk)                                         # [Mm, H]
    v = _mm(mem, wmv)                                         # [Mm, H]
    p = _softmax_rows(_dot_nt(q, k) * (1.0 / math.sqrt(H)))   # [B*S, Mm]
    h2 = h1 + 0.1 * _mm(_mm(p, v), wmo)

    # ---- stage 3: MLP (rmsnorm -> gate|up -> SiLU*up -> down -> residual) ----
    hn2 = _rmsnorm(h2, ln2, eps)
    gu = _mm(hn2, wgu)                                        # [B*S, 2I]; split at 128 lanes
    g, u = gu[:, :inter], gu[:, inter:]
    h3 = h2 + _mm(g * _sigmoid(g) * u, wd)

    # ---- stage 4: ReasoningModule (attn + gate mix + step / confidence heads) ----
    hnr = _rmsnorm(h3, lnr, eps)
    qkvr = _mm(hnr, wqkvr)                                    # [B*S, 3*nR*Rd]
    rscale = 1.0 / math.sqrt(Rd)
    rrows = []
    for b in range(B):
        r0, r1 = b * S, (b + 1) * S
        heads = []
        for r in range(nR):
            qh = qkvr[r0:r1, r * Rd:(r + 1) * Rd]
            kh = qkvr[r0:r1, (nR + r) * Rd:(nR + r + 1) * Rd]
            vh = qkvr[r0:r1, (2 * nR + r) * Rd:(2 * nR + r + 1) * Rd]
            pr = _softmax_rows(_dot_nt(qh, kh) * rscale)
            heads.append(_mm(pr, vh))
        rrows.append(jnp.concatenate(heads, axis=-1))         # [S, nR*Rd]
    r_out = _mm(jnp.concatenate(rrows, axis=0), wor)          # one merged o_proj matmul
    gate = _sigmoid(_mm(h3, wg) + bg)
    rout = gate * r_out + (1.0 - gate) * h3                   # [B*S, H]

    rout_last = jnp.concatenate(
        [rout[(b + 1) * S - 1:(b + 1) * S] for b in range(B)], axis=0)   # [B, H]
    step = _mm(rout_last, wstep) + bstep                      # step head on last token only
    conf = _sigmoid(_mm(rout, wconf) + bconf)                 # [B*S, 1]

    # ---- stage 5: StateTrackingModule (encoder / transition / planning / decoder) ----
    enc = _mm(rout, sew) + seb                                # [B*S, Sd]
    # transition_net(cat([cur, enc])) without materializing the concat:
    t1 = jnp.maximum(_mm(cur, t1w[:Sd, :]) + _mm(enc, t1w[Sd:, :]) + t1b, 0.0)
    state_logits = _mm(t1, t2w) + t2b                         # [B*S, num_states]
    # planning_net(cat([cur, hidden])):
    p1 = jnp.maximum(_mm(cur, p1w[:Sd, :]) + _mm(rout, p1w[Sd:, :]) + p1b, 0.0)
    act_logits = _mm(p1, p2w) + p2b                           # [B*S, action_space]
    hid = _mm(enc, sdw) + sdb                                 # state_enhanced -> layer output

    return hid, step, conf, state_logits, act_logits


# ----------------------------------------------------------------------------
# Fused kernel: reads all VMEM refs once, runs the whole layer, writes 5 outputs.
# ----------------------------------------------------------------------------
def _cognitive_layer_kernel(*refs, B, S, nH, nKV, Dh, nR, Rd, Sd, inter, eps):
    *in_refs, hid_ref, step_ref, conf_ref, state_ref, act_ref = refs
    vals = [r[...] for r in in_refs]
    hid, step, conf, st, act = _layer_math(
        *vals, B=B, S=S, nH=nH, nKV=nKV, Dh=Dh, nR=nR, Rd=Rd, Sd=Sd, inter=inter, eps=eps)
    hid_ref[...] = hid.astype(hid_ref.dtype)
    step_ref[...] = step.astype(step_ref.dtype)
    conf_ref[...] = conf.astype(conf_ref.dtype)
    state_ref[...] = st.astype(state_ref.dtype)
    act_ref[...] = act.astype(act_ref.dtype)


# ----------------------------------------------------------------------------
# Argument preparation shared by the Pallas wrapper and the pure-JAX reference.
# ----------------------------------------------------------------------------
def _prepare_inputs(params, cfg, x):
    B, S, H = x.shape
    nH = cfg["num_attention_heads"]
    nKV = cfg["num_key_value_heads"]
    Dh = H // nH
    nR = cfg["num_reasoning_heads"]
    Rd = cfg["reasoning_dim"]
    Sd = cfg["state_dim"]
    inter = cfg["intermediate_size"]
    NS = cfg["num_states"]
    AS = cfg["action_space_size"]

    # RoPE half tables (HF layout: both Dh/2 halves share cos/sin), tiled over batch so
    # rows match x.reshape(B*S, H).  Constant-folded under jit (params/cfg are closures).
    inv_freq = 1.0 / (cfg["rope_theta"] ** (jnp.arange(0, Dh, 2, dtype=jnp.float32) / Dh))
    freqs = jnp.arange(S, dtype=jnp.float32)[:, None] * inv_freq[None, :]    # [S, Dh//2]
    cos_t = jnp.tile(jnp.cos(freqs), (B, 1))                                 # [B*S, Dh//2]
    sin_t = jnp.tile(jnp.sin(freqs), (B, 1))

    # Fused projection weights (fewer, wider MXU pushes).
    wqkv = jnp.concatenate([params["q_w"], params["k_w"], params["v_w"]], axis=1)
    wgu = jnp.concatenate([params["gate_w"], params["up_w"]], axis=1)
    wqkv_r = jnp.concatenate([params["rq_w"], params["rk_w"], params["rv_w"]], axis=1)

    args = (
        x.reshape(B * S, H),
        params["input_ln_w"].reshape(1, H), wqkv, params["o_w"], cos_t, sin_t,
        params["memory_bank"],
        params["wm_q_w"], params["wm_k_w"], params["wm_v_w"], params["wm_o_w"],
        params["post_ln_w"].reshape(1, H), wgu, params["down_w"],
        params["r_ln_w"].reshape(1, H), wqkv_r, params["ro_w"],
        params["rgate_w"], params["rgate_b"].reshape(1, H),
        params["step_w"], params["step_b"].reshape(1, 8),
        params["conf_w"], params["conf_b"].reshape(1, 1),
        params["current_state"].reshape(1, Sd),
        params["se_w"], params["se_b"].reshape(1, Sd),
        params["sd_w"], params["sd_b"].reshape(1, H),
        params["t1_w"], params["t1_b"].reshape(1, Sd),
        params["t2_w"], params["t2_b"].reshape(1, NS),
        params["p1_w"], params["p1_b"].reshape(1, Sd),
        params["p2_w"], params["p2_b"].reshape(1, AS),
    )
    statics = dict(B=B, S=S, nH=nH, nKV=nKV, Dh=Dh, nR=nR, Rd=Rd, Sd=Sd, inter=inter,
                   eps=cfg["rms_norm_eps"])
    return args, statics


def _package(outs, B, S, cfg):
    hid, step, conf, st, act = outs
    H = cfg["hidden_size"]
    hidden = hid.reshape(B, S, H)
    reasoning = {"step_logits": step.reshape(B, 1, 8),
                 "confidence": conf.reshape(B, S, 1)}
    state = {"state_logits": st.reshape(B, S, cfg["num_states"]),
             "action_logits": act.reshape(B, S, cfg["action_space_size"])}
    return hidden, reasoning, state


# ----------------------------------------------------------------------------
# Full layer forward (mirrors CognitiveTransformerLayer.forward, attention_mask=None)
# ----------------------------------------------------------------------------
def cognitive_layer_forward(params, cfg, x):
    B, S, H = x.shape
    BS = B * S
    NS = cfg["num_states"]
    AS = cfg["action_space_size"]
    args, statics = _prepare_inputs(params, cfg, x)

    # Rough cost hints for the XLA scheduler (advisory only).
    nH, nKV, Dh = statics["nH"], statics["nKV"], statics["Dh"]
    nR, Rd, Sd, inter = statics["nR"], statics["Rd"], statics["Sd"], statics["inter"]
    Mm = cfg["working_memory_size"]
    QKV = (nH + 2 * nKV) * Dh
    flops = 2 * (BS * H * QKV + 2 * B * nH * S * S * Dh + BS * nH * Dh * H
                 + 2 * BS * H * H + 2 * Mm * H * H + 2 * BS * Mm * H
                 + 2 * BS * H * inter + BS * inter * H
                 + BS * H * 3 * nR * Rd + 2 * B * nR * S * S * Rd + BS * nR * Rd * H
                 + BS * H * H + B * H * 8 + BS * H
                 + 2 * BS * H * Sd + 2 * BS * Sd * Sd + BS * Sd * (NS + AS))
    transcendentals = BS * (nH * S + Mm + nR * S + inter + H + 1)
    bytes_accessed = 4 * (sum(int(a.size) for a in args)
                          + BS * H + B * 8 + BS + BS * NS + BS * AS)

    out_shape = (
        jax.ShapeDtypeStruct((BS, H), x.dtype),       # state_enhanced hidden states
        jax.ShapeDtypeStruct((B, 8), x.dtype),        # step logits (last token only)
        jax.ShapeDtypeStruct((BS, 1), x.dtype),       # confidence
        jax.ShapeDtypeStruct((BS, NS), x.dtype),      # state logits
        jax.ShapeDtypeStruct((BS, AS), x.dtype),      # action logits
    )
    vmem = pl.BlockSpec(memory_space=pltpu.MemorySpace.VMEM)
    outs = pl.pallas_call(
        functools.partial(_cognitive_layer_kernel, **statics),
        out_shape=out_shape,
        in_specs=[vmem] * len(args),
        out_specs=(vmem,) * len(out_shape),
        cost_estimate=pl.CostEstimate(flops=int(flops),
                                      transcendentals=int(transcendentals),
                                      bytes_accessed=int(bytes_accessed)),
    )(*args)
    # TODO(synk): HF Llama's model-level causal mask is not applied here; the layer-level
    # default (attention_mask=None) is mask-free, matching the reference module call.
    # TODO(synk): memory_bank GRU update and current_state EMA update are in-place
    # parameter mutations that do not affect this forward's outputs; not kernelized.
    # TODO(synk): ToolCallingModule is an identity here (tool_registry=None); its
    # data-dependent Python tool loop has no Pallas equivalent.
    return _package(outs, B, S, cfg)


def cognitive_layer_reference(params, cfg, x):
    """Pure-jnp mirror (same math via _layer_math) used only as a correctness check."""
    args, statics = _prepare_inputs(params, cfg, x)
    outs = _layer_math(*[a.astype(jnp.float32) for a in args], **statics)
    return _package(outs, x.shape[0], x.shape[1], cfg)


# ----------------------------------------------------------------------------
# Parameters (deterministic synthetic init; weights stored as [in, out])
# ----------------------------------------------------------------------------
def init_params(key, cfg):
    H = cfg["hidden_size"]
    I = cfg["intermediate_size"]
    nH = cfg["num_attention_heads"]
    nKV = cfg["num_key_value_heads"]
    Dh = H // nH
    nR = cfg["num_reasoning_heads"]
    Rd = cfg["reasoning_dim"]
    Sd = cfg["state_dim"]
    Mm = cfg["working_memory_size"]

    ks = iter(jax.random.split(key, 40))

    def w(*shape):
        return (0.02 * jax.random.normal(next(ks), shape)).astype(jnp.float32)

    return {
        # LlamaAttention + norms + MLP
        "input_ln_w": jnp.ones((H,), jnp.float32),
        "q_w": w(H, nH * Dh), "k_w": w(H, nKV * Dh), "v_w": w(H, nKV * Dh),
        "o_w": w(nH * Dh, H),
        "post_ln_w": jnp.ones((H,), jnp.float32),
        "gate_w": w(H, I), "up_w": w(H, I), "down_w": w(I, H),
        # WorkingMemoryModule
        "memory_bank": w(Mm, H),
        "wm_q_w": w(H, H), "wm_k_w": w(H, H), "wm_v_w": w(H, H), "wm_o_w": w(H, H),
        # ReasoningModule
        "r_ln_w": jnp.ones((H,), jnp.float32),
        "rq_w": w(H, nR * Rd), "rk_w": w(H, nR * Rd), "rv_w": w(H, nR * Rd),
        "ro_w": w(nR * Rd, H),
        "rgate_w": w(H, H), "rgate_b": jnp.zeros((H,), jnp.float32),
        "step_w": w(H, 8), "step_b": jnp.zeros((8,), jnp.float32),
        "conf_w": w(H, 1), "conf_b": jnp.zeros((1,), jnp.float32),
        # StateTrackingModule
        "se_w": w(H, Sd), "se_b": jnp.zeros((Sd,), jnp.float32),
        "sd_w": w(Sd, H), "sd_b": jnp.zeros((H,), jnp.float32),
        "t1_w": w(2 * Sd, Sd), "t1_b": jnp.zeros((Sd,), jnp.float32),
        "t2_w": w(Sd, cfg["num_states"]), "t2_b": jnp.zeros((cfg["num_states"],), jnp.float32),
        "p1_w": w(Sd + H, Sd), "p1_b": jnp.zeros((Sd,), jnp.float32),
        "p2_w": w(Sd, cfg["action_space_size"]),
        "p2_b": jnp.zeros((cfg["action_space_size"],), jnp.float32),
        "current_state": jnp.zeros((Sd,), jnp.float32),
    }


# ----------------------------------------------------------------------------
if __name__ == "__main__":
    key = jax.random.PRNGKey(0)
    pkey, xkey = jax.random.split(key)
    params = init_params(pkey, CFG)

    B, S, H = 2, 8, CFG["hidden_size"]
    x = jax.random.normal(xkey, (B, S, H), dtype=jnp.float32)

    fwd = jax.jit(lambda xx: cognitive_layer_forward(params, CFG, xx))
    hidden_out, reasoning_outputs, state_outputs = fwd(x)
    jax.block_until_ready((hidden_out, reasoning_outputs, state_outputs))

    # Shape / sanity checks
    assert hidden_out.shape == (B, S, H)
    assert reasoning_outputs["step_logits"].shape == (B, 1, 8)
    assert reasoning_outputs["confidence"].shape == (B, S, 1)
    assert state_outputs["state_logits"].shape == (B, S, CFG["num_states"])
    assert state_outputs["action_logits"].shape == (B, S, CFG["action_space_size"])
    assert bool(jnp.isfinite(hidden_out).all())

    # Parity check against the pure-JAX (XLA) version of the same math.
    ref_hidden, ref_reason, ref_state = jax.jit(
        lambda xx: cognitive_layer_reference(params, CFG, xx))(x)
    assert bool(jnp.allclose(hidden_out, ref_hidden, rtol=2e-3, atol=2e-3))
    assert bool(jnp.allclose(reasoning_outputs["step_logits"],
                             ref_reason["step_logits"], rtol=2e-3, atol=2e-3))
    assert bool(jnp.allclose(reasoning_outputs["confidence"],
                             ref_reason["confidence"], rtol=2e-3, atol=2e-3))
    assert bool(jnp.allclose(state_outputs["state_logits"],
                             ref_state["state_logits"], rtol=2e-3, atol=2e-3))
    assert bool(jnp.allclose(state_outputs["action_logits"],
                             ref_state["action_logits"], rtol=2e-3, atol=2e-3))

    print("KERNEL_OK")
</pallas_src>

<mosaic_0001>
module attributes {stable_mosaic.version = 11 : i64} {
  func.func @_cognitive_layer_kernel(%arg0: memref<16x64xf32, #tpu.memory_space<vmem>>, %arg1: memref<1x64xf32, #tpu.memory_space<vmem>>, %arg2: memref<64x128xf32, #tpu.memory_space<vmem>>, %arg3: memref<64x64xf32, #tpu.memory_space<vmem>>, %arg4: memref<16x8xf32, #tpu.memory_space<vmem>>, %arg5: memref<16x8xf32, #tpu.memory_space<vmem>>, %arg6: memref<32x64xf32, #tpu.memory_space<vmem>>, %arg7: memref<64x64xf32, #tpu.memory_space<vmem>>, %arg8: memref<64x64xf32, #tpu.memory_space<vmem>>, %arg9: memref<64x64xf32, #tpu.memory_space<vmem>>, %arg10: memref<64x64xf32, #tpu.memory_space<vmem>>, %arg11: memref<1x64xf32, #tpu.memory_space<vmem>>, %arg12: memref<64x256xf32, #tpu.memory_space<vmem>>, %arg13: memref<128x64xf32, #tpu.memory_space<vmem>>, %arg14: memref<1x64xf32, #tpu.memory_space<vmem>>, %arg15: memref<64x192xf32, #tpu.memory_space<vmem>>, %arg16: memref<64x64xf32, #tpu.memory_space<vmem>>, %arg17: memref<64x64xf32, #tpu.memory_space<vmem>>, %arg18: memref<1x64xf32, #tpu.memory_space<vmem>>, %arg19: memref<64x8xf32, #tpu.memory_space<vmem>>, %arg20: memref<1x8xf32, #tpu.memory_space<vmem>>, %arg21: memref<64x1xf32, #tpu.memory_space<vmem>>, %arg22: memref<1x1xf32, #tpu.memory_space<vmem>>, %arg23: memref<1x32xf32, #tpu.memory_space<vmem>>, %arg24: memref<64x32xf32, #tpu.memory_space<vmem>>, %arg25: memref<1x32xf32, #tpu.memory_space<vmem>>, %arg26: memref<32x64xf32, #tpu.memory_space<vmem>>, %arg27: memref<1x64xf32, #tpu.memory_space<vmem>>, %arg28: memref<64x32xf32, #tpu.memory_space<vmem>>, %arg29: memref<1x32xf32, #tpu.memory_space<vmem>>, %arg30: memref<32x8xf32, #tpu.memory_space<vmem>>, %arg31: memref<1x8xf32, #tpu.memory_space<vmem>>, %arg32: memref<96x32xf32, #tpu.memory_space<vmem>>, %arg33: memref<1x32xf32, #tpu.memory_space<vmem>>, %arg34: memref<32x16xf32, #tpu.memory_space<vmem>>, %arg35: memref<1x16xf32, #tpu.memory_space<vmem>>, %arg36: memref<16x64xf32, #tpu.memory_space<vmem>>, %arg37: memref<2x8xf32, #tpu.memory_space<vmem>>, %arg38: memref<16x1xf32, #tpu.memory_space<vmem>>, %arg39: memref<16x8xf32, #tpu.memory_space<vmem>>, %arg40: memref<16x16xf32, #tpu.memory_space<vmem>>) attributes {dimension_semantics = [], scalar_prefetch = 0 : i64, scratch_operands = 0 : i64, tpu.core_type = #tpu.core_type<tc>} {
    %c0 = arith.constant 0 : index
    %c0_0 = arith.constant 0 : index
    %0 = vector.load %arg0[%c0, %c0_0] : memref<16x64xf32, #tpu.memory_space<vmem>>, vector<16x64xf32>
    %c0_1 = arith.constant 0 : index
    %c0_2 = arith.constant 0 : index
    %1 = vector.load %arg1[%c0_1, %c0_2] : memref<1x64xf32, #tpu.memory_space<vmem>>, vector<1x64xf32>
    %c0_3 = arith.constant 0 : index
    %c0_4 = arith.constant 0 : index
    %2 = vector.load %arg2[%c0_3, %c0_4] : memref<64x128xf32, #tpu.memory_space<vmem>>, vector<64x128xf32>
    %c0_5 = arith.constant 0 : index
    %c0_6 = arith.constant 0 : index
    %3 = vector.load %arg3[%c0_5, %c0_6] : memref<64x64xf32, #tpu.memory_space<vmem>>, vector<64x64xf32>
    %c0_7 = arith.constant 0 : index
    %c0_8 = arith.constant 0 : index
    %4 = vector.load %arg4[%c0_7, %c0_8] : memref<16x8xf32, #tpu.memory_space<vmem>>, vector<16x8xf32>
    %c0_9 = arith.constant 0 : index
    %c0_10 = arith.constant 0 : index
    %5 = vector.load %arg5[%c0_9, %c0_10] : memref<16x8xf32, #tpu.memory_space<vmem>>, vector<16x8xf32>
    %c0_11 = arith.constant 0 : index
    %c0_12 = arith.constant 0 : index
    %6 = vector.load %arg6[%c0_11, %c0_12] : memref<32x64xf32, #tpu.memory_space<vmem>>, vector<32x64xf32>
    %c0_13 = arith.constant 0 : index
    %c0_14 = arith.constant 0 : index
    %7 = vector.load %arg7[%c0_13, %c0_14] : memref<64x64xf32, #tpu.memory_space<vmem>>, vector<64x64xf32>
    %c0_15 = arith.constant 0 : index
    %c0_16 = arith.constant 0 : index
    %8 = vector.load %arg8[%c0_15, %c0_16] : memref<64x64xf32, #tpu.memory_space<vmem>>, vector<64x64xf32>
    %c0_17 = arith.constant 0 : index
    %c0_18 = arith.constant 0 : index
    %9 = vector.load %arg9[%c0_17, %c0_18] : memref<64x64xf32, #tpu.memory_space<vmem>>, vector<64x64xf32>
    %c0_19 = arith.constant 0 : index
    %c0_20 = arith.constant 0 : index
    %10 = vector.load %arg10[%c0_19, %c0_20] : memref<64x64xf32, #tpu.memory_space<vmem>>, vector<64x64xf32>
    %c0_21 = arith.constant 0 : index
    %c0_22 = arith.constant 0 : index
    %11 = vector.load %arg11[%c0_21, %c0_22] : memref<1x64xf32, #tpu.memory_space<vmem>>, vector<1x64xf32>
    %c0_23 = arith.constant 0 : index
    %c0_24 = arith.constant 0 : index
    %12 = vector.load %arg12[%c0_23, %c0_24] : memref<64x256xf32, #tpu.memory_space<vmem>>, vector<64x256xf32>
    %c0_25 = arith.constant 0 : index
    %c0_26 = arith.constant 0 : index
    %13 = vector.load %arg13[%c0_25, %c0_26] : memref<128x64xf32, #tpu.memory_space<vmem>>, vector<128x64xf32>
    %c0_27 = arith.constant 0 : index
    %c0_28 = arith.constant 0 : index
    %14 = vector.load %arg14[%c0_27, %c0_28] : memref<1x64xf32, #tpu.memory_space<vmem>>, vector<1x64xf32>
    %c0_29 = arith.constant 0 : index
    %c0_30 = arith.constant 0 : index
    %15 = vector.load %arg15[%c0_29, %c0_30] : memref<64x192xf32, #tpu.memory_space<vmem>>, vector<64x192xf32>
    %c0_31 = arith.constant 0 : index
    %c0_32 = arith.constant 0 : index
    %16 = vector.load %arg16[%c0_31, %c0_32] : memref<64x64xf32, #tpu.memory_space<vmem>>, vector<64x64xf32>
    %c0_33 = arith.constant 0 : index
    %c0_34 = arith.constant 0 : index
    %17 = vector.load %arg17[%c0_33, %c0_34] : memref<64x64xf32, #tpu.memory_space<vmem>>, vector<64x64xf32>
    %c0_35 = arith.constant 0 : index
    %c0_36 = arith.constant 0 : index
    %18 = vector.load %arg18[%c0_35, %c0_36] : memref<1x64xf32, #tpu.memory_space<vmem>>, vector<1x64xf32>
    %c0_37 = arith.constant 0 : index
    %c0_38 = arith.constant 0 : index
    %19 = vector.load %arg19[%c0_37, %c0_38] : memref<64x8xf32, #tpu.memory_space<vmem>>, vector<64x8xf32>
    %c0_39 = arith.constant 0 : index
    %c0_40 = arith.constant 0 : index
    %20 = vector.load %arg20[%c0_39, %c0_40] : memref<1x8xf32, #tpu.memory_space<vmem>>, vector<1x8xf32>
    %c0_41 = arith.constant 0 : index
    %c0_42 = arith.constant 0 : index
    %21 = vector.load %arg21[%c0_41, %c0_42] : memref<64x1xf32, #tpu.memory_space<vmem>>, vector<64x1xf32>
    %c0_43 = arith.constant 0 : index
    %c0_44 = arith.constant 0 : index
    %22 = vector.load %arg22[%c0_43, %c0_44] : memref<1x1xf32, #tpu.memory_space<vmem>>, vector<1x1xf32>
    %c0_45 = arith.constant 0 : index
    %c0_46 = arith.constant 0 : index
    %23 = vector.load %arg23[%c0_45, %c0_46] : memref<1x32xf32, #tpu.memory_space<vmem>>, vector<1x32xf32>
    %c0_47 = arith.constant 0 : index
    %c0_48 = arith.constant 0 : index
    %24 = vector.load %arg24[%c0_47, %c0_48] : memref<64x32xf32, #tpu.memory_space<vmem>>, vector<64x32xf32>
    %c0_49 = arith.constant 0 : index
    %c0_50 = arith.constant 0 : index
    %25 = vector.load %arg25[%c0_49, %c0_50] : memref<1x32xf32, #tpu.memory_space<vmem>>, vector<1x32xf32>
    %c0_51 = arith.constant 0 : index
    %c0_52 = arith.constant 0 : index
    %26 = vector.load %arg26[%c0_51, %c0_52] : memref<32x64xf32, #tpu.memory_space<vmem>>, vector<32x64xf32>
    %c0_53 = arith.constant 0 : index
    %c0_54 = arith.constant 0 : index
    %27 = vector.load %arg27[%c0_53, %c0_54] : memref<1x64xf32, #tpu.memory_space<vmem>>, vector<1x64xf32>
    %c0_55 = arith.constant 0 : index
    %c0_56 = arith.constant 0 : index
    %28 = vector.load %arg28[%c0_55, %c0_56] : memref<64x32xf32, #tpu.memory_space<vmem>>, vector<64x32xf32>
    %c0_57 = arith.constant 0 : index
    %c0_58 = arith.constant 0 : index
    %29 = vector.load %arg29[%c0_57, %c0_58] : memref<1x32xf32, #tpu.memory_space<vmem>>, vector<1x32xf32>
    %c0_59 = arith.constant 0 : index
    %c0_60 = arith.constant 0 : index
    %30 = vector.load %arg30[%c0_59, %c0_60] : memref<32x8xf32, #tpu.memory_space<vmem>>, vector<32x8xf32>
    %c0_61 = arith.constant 0 : index
    %c0_62 = arith.constant 0 : index
    %31 = vector.load %arg31[%c0_61, %c0_62] : memref<1x8xf32, #tpu.memory_space<vmem>>, vector<1x8xf32>
    %c0_63 = arith.constant 0 : index
    %c0_64 = arith.constant 0 : index
    %32 = vector.load %arg32[%c0_63, %c0_64] : memref<96x32xf32, #tpu.memory_space<vmem>>, vector<96x32xf32>
    %c0_65 = arith.constant 0 : index
    %c0_66 = arith.constant 0 : index
    %33 = vector.load %arg33[%c0_65, %c0_66] : memref<1x32xf32, #tpu.memory_space<vmem>>, vector<1x32xf32>
    %c0_67 = arith.constant 0 : index
    %c0_68 = arith.constant 0 : index
    %34 = vector.load %arg34[%c0_67, %c0_68] : memref<32x16xf32, #tpu.memory_space<vmem>>, vector<32x16xf32>
    %c0_69 = arith.constant 0 : index
    %c0_70 = arith.constant 0 : index
    %35 = vector.load %arg35[%c0_69, %c0_70] : memref<1x16xf32, #tpu.memory_space<vmem>>, vector<1x16xf32>
    %36 = arith.mulf %0, %0 : vector<16x64xf32>
    %cst = arith.constant dense<0.000000e+00> : vector<16xf32>
    %37 = vector.multi_reduction <add>, %36, %cst [1] : vector<16x64xf32> to vector<16xf32>
    %38 = vector.shape_cast %37 : vector<16xf32> to vector<16x1xf32>
    %cst_71 = arith.constant 6.400000e+01 : f32
    %39 = vector.broadcast %cst_71 : f32 to vector<16x1xf32>
    %40 = arith.divf %38, %39 : vector<16x1xf32>
    %cst_72 = arith.constant 9.99999997E-7 : f32
    %41 = vector.broadcast %cst_72 : f32 to vector<16x1xf32>
    %42 = arith.addf %40, %41 : vector<16x1xf32>
    %43 = math.rsqrt %42 : vector<16x1xf32>
    %44 = vector.broadcast %43 : vector<16x1xf32> to vector<16x64xf32>
    %45 = arith.mulf %0, %44 : vector<16x64xf32>
    %46 = vector.broadcast %1 : vector<1x64xf32> to vector<16x64xf32>
    %47 = arith.mulf %45, %46 : vector<16x64xf32>
    %cst_73 = arith.constant dense<0.000000e+00> : vector<16x128xf32>
    %48 = tpu.matmul %47, %2, %cst_73 {dimension_numbers = #tpu.dot_dimension_numbers<[1], [0], [0], [1], [0, 0, 1, 1], [], []>} : vector<16x64xf32>, vector<64x128xf32>, vector<16x128xf32> -> vector<16x128xf32>
    %49 = vector.extract_strided_slice %48 {offsets = [0, 0], sizes = [16, 16], strides = [1, 1]} : vector<16x128xf32> to vector<16x16xf32>
    %50 = vector.extract_strided_slice %49 {offsets = [0, 0], sizes = [16, 8], strides = [1, 1]} : vector<16x16xf32> to vector<16x8xf32>
    %51 = vector.extract_strided_slice %49 {offsets = [0, 8], sizes = [16, 8], strides = [1, 1]} : vector<16x16xf32> to vector<16x8xf32>
    %52 = arith.mulf %50, %4 : vector<16x8xf32>
    %53 = arith.mulf %51, %5 : vector<16x8xf32>
    %54 = arith.subf %52, %53 : vector<16x8xf32>
    %55 = arith.mulf %51, %4 : vector<16x8xf32>
    %56 = arith.mulf %50, %5 : vector<16x8xf32>
    %57 = arith.addf %55, %56 : vector<16x8xf32>
    %58 = tpu.concatenate %54, %57 in 1 : vector<16x8xf32>, vector<16x8xf32> -> vector<16x16xf32>
    %59 = vector.extract_strided_slice %48 {offsets = [0, 16], sizes = [16, 16], strides = [1, 1]} : vector<16x128xf32> to vector<16x16xf32>
    %60 = vector.extract_strided_slice %59 {offsets = [0, 0], sizes = [16, 8], strides = [1, 1]} : vector<16x16xf32> to vector<16x8xf32>
    %61 = vector.extract_strided_slice %59 {offsets = [0, 8], sizes = [16, 8], strides = [1, 1]} : vector<16x16xf32> to vector<16x8xf32>
    %62 = arith.mulf %60, %4 : vector<16x8xf32>
    %63 = arith.mulf %61, %5 : vector<16x8xf32>
    %64 = arith.subf %62, %63 : vector<16x8xf32>
    %65 = arith.mulf %61, %4 : vector<16x8xf32>
    %66 = arith.mulf %60, %5 : vector<16x8xf32>
    %67 = arith.addf %65, %66 : vector<16x8xf32>
    %68 = tpu.concatenate %64, %67 in 1 : vector<16x8xf32>, vector<16x8xf32> -> vector<16x16xf32>
    %69 = vector.extract_strided_slice %48 {offsets = [0, 32], sizes = [16, 16], strides = [1, 1]} : vector<16x128xf32> to vector<16x16xf32>
    %70 = vector.extract_strided_slice %69 {offsets = [0, 0], sizes = [16, 8], strides = [1, 1]} : vector<16x16xf32> to vector<16x8xf32>
    %71 = vector.extract_strided_slice %69 {offsets = [0, 8], sizes = [16, 8], strides = [1, 1]} : vector<16x16xf32> to vector<16x8xf32>
    %72 = arith.mulf %70, %4 : vector<16x8xf32>
    %73 = arith.mulf %71, %5 : vector<16x8xf32>
    %74 = arith.subf %72, %73 : vector<16x8xf32>
    %75 = arith.mulf %71, %4 : vector<16x8xf32>
    %76 = arith.mulf %70, %5 : vector<16x8xf32>
    %77 = arith.addf %75, %76 : vector<16x8xf32>
    %78 = tpu.concatenate %74, %77 in 1 : vector<16x8xf32>, vector<16x8xf32> -> vector<16x16xf32>
    %79 = vector.extract_strided_slice %48 {offsets = [0, 48], sizes = [16, 16], strides = [1, 1]} : vector<16x128xf32> to vector<16x16xf32>
    %80 = vector.extract_strided_slice %79 {offsets = [0, 0], sizes = [16, 8], strides = [1, 1]} : vector<16x16xf32> to vector<16x8xf32>
    %81 = vector.extract_strided_slice %79 {offsets = [0, 8], sizes = [16, 8], strides = [1, 1]} : vector<16x16xf32> to vector<16x8xf32>
    %82 = arith.mulf %80, %4 : vector<16x8xf32>
    %83 = arith.mulf %81, %5 : vector<16x8xf32>
    %84 = arith.subf %82, %83 : vector<16x8xf32>
    %85 = arith.mulf %81, %4 : vector<16x8xf32>
    %86 = arith.mulf %80, %5 : vector<16x8xf32>
    %87 = arith.addf %85, %86 : vector<16x8xf32>
    %88 = tpu.concatenate %84, %87 in 1 : vector<16x8xf32>, vector<16x8xf32> -> vector<16x16xf32>
    %89 = vector.extract_strided_slice %48 {offsets = [0, 64], sizes = [16, 16], strides = [1, 1]} : vector<16x128xf32> to vector<16x16xf32>
    %90 = vector.extract_strided_slice %89 {offsets = [0, 0], sizes = [16, 8], strides = [1, 1]} : vector<16x16xf32> to vector<16x8xf32>
    %91 = vector.extract_strided_slice %89 {offsets = [0, 8], sizes = [16, 8], strides = [1, 1]} : vector<16x16xf32> to vector<16x8xf32>
    %92 = arith.mulf %90, %4 : vector<16x8xf32>
    %93 = arith.mulf %91, %5 : vector<16x8xf32>
    %94 = arith.subf %92, %93 : vector<16x8xf32>
    %95 = arith.mulf %91, %4 : vector<16x8xf32>
    %96 = arith.mulf %90, %5 : vector<16x8xf32>
    %97 = arith.addf %95, %96 : vector<16x8xf32>
    %98 = tpu.concatenate %94, %97 in 1 : vector<16x8xf32>, vector<16x8xf32> -> vector<16x16xf32>
    %99 = vector.extract_strided_slice %48 {offsets = [0, 80], sizes = [16, 16], strides = [1, 1]} : vector<16x128xf32> to vector<16x16xf32>
    %100 = vector.extract_strided_slice %99 {offsets = [0, 0], sizes = [16, 8], strides = [1, 1]} : vector<16x16xf32> to vector<16x8xf32>
    %101 = vector.extract_strided_slice %99 {offsets = [0, 8], sizes = [16, 8], strides = [1, 1]} : vector<16x16xf32> to vector<16x8xf32>
    %102 = arith.mulf %100, %4 : vector<16x8xf32>
    %103 = arith.mulf %101, %5 : vector<16x8xf32>
    %104 = arith.subf %102, %103 : vector<16x8xf32>
    %105 = arith.mulf %101, %4 : vector<16x8xf32>
    %106 = arith.mulf %100, %5 : vector<16x8xf32>
    %107 = arith.addf %105, %106 : vector<16x8xf32>
    %108 = tpu.concatenate %104, %107 in 1 : vector<16x8xf32>, vector<16x8xf32> -> vector<16x16xf32>
    %109 = vector.extract_strided_slice %48 {offsets = [0, 96], sizes = [16, 16], strides = [1, 1]} : vector<16x128xf32> to vector<16x16xf32>
    %110 = vector.extract_strided_slice %48 {offsets = [0, 112], sizes = [16, 16], strides = [1, 1]} : vector<16x128xf32> to vector<16x16xf32>
    %111 = vector.extract_strided_slice %58 {offsets = [0, 0], sizes = [8, 16], strides = [1, 1]} : vector<16x16xf32> to vector<8x16xf32>
    %112 = vector.extract_strided_slice %98 {offsets = [0, 0], sizes = [8, 16], strides = [1, 1]} : vector<16x16xf32> to vector<8x16xf32>
    %cst_74 = arith.constant dense<0.000000e+00> : vector<8x8xf32>
    %113 = tpu.matmul %111, %112, %cst_74 {dimension_numbers = #tpu.dot_dimension_numbers<[1], [1], [0], [0], [0, 0, 1, 0], [], []>} : vector<8x16xf32>, vector<8x16xf32>, vector<8x8xf32> -> vector<8x8xf32>
    %cst_75 = arith.constant 2.500000e-01 : f32
    %114 = vector.broadcast %cst_75 : f32 to vector<8x8xf32>
    %115 = arith.mulf %113, %114 : vector<8x8xf32>
    %cst_76 = arith.constant dense<0xFF800000> : vector<8xf32>
    %116 = vector.multi_reduction <maximumf>, %115, %cst_76 [1] : vector<8x8xf32> to vector<8xf32>
    %117 = vector.shape_cast %116 : vector<8xf32> to vector<8x1xf32>
    %118 = vector.broadcast %117 : vector<8x1xf32> to vector<8x8xf32>
    %119 = arith.subf %115, %118 : vector<8x8xf32>
    %120 = math.exp %119 : vector<8x8xf32>
    %cst_77 = arith.constant dense<0.000000e+00> : vector<8xf32>
    %121 = vector.multi_reduction <add>, %120, %cst_77 [1] : vector<8x8xf32> to vector<8xf32>
    %122 = vector.shape_cast %121 : vector<8xf32> to vector<8x1xf32>
    %123 = vector.broadcast %122 : vector<8x1xf32> to vector<8x8xf32>
    %124 = arith.divf %120, %123 : vector<8x8xf32>
    %125 = vector.extract_strided_slice %109 {offsets = [0, 0], sizes = [8, 16], strides = [1, 1]} : vector<16x16xf32> to vector<8x16xf32>
    %cst_78 = arith.constant dense<0.000000e+00> : vector<8x16xf32>
    %126 = tpu.matmul %124, %125, %cst_78 {dimension_numbers = #tpu.dot_dimension_numbers<[1], [0], [0], [1], [0, 0, 1, 1], [], []>} : vector<8x8xf32>, vector<8x16xf32>, vector<8x16xf32> -> vector<8x16xf32>
    %127 = vector.extract_strided_slice %68 {offsets = [0, 0], sizes = [8, 16], strides = [1, 1]} : vector<16x16xf32> to vector<8x16xf32>
    %128 = vector.extract_strided_slice %98 {offsets = [0, 0], sizes = [8, 16], strides = [1, 1]} : vector<16x16xf32> to vector<8x16xf32>
    %cst_79 = arith.constant dense<0.000000e+00> : vector<8x8xf32>
    %129 = tpu.matmul %127, %128, %cst_79 {dimension_numbers = #tpu.dot_dimension_numbers<[1], [1], [0], [0], [0, 0, 1, 0], [], []>} : vector<8x16xf32>, vector<8x16xf32>, vector<8x8xf32> -> vector<8x8xf32>
    %cst_80 = arith.constant 2.500000e-01 : f32
    %130 = vector.broadcast %cst_80 : f32 to vector<8x8xf32>
    %131 = arith.mulf %129, %130 : vector<8x8xf32>
    %cst_81 = arith.constant dense<0xFF800000> : vector<8xf32>
    %132 = vector.multi_reduction <maximumf>, %131, %cst_81 [1] : vector<8x8xf32> to vector<8xf32>
    %133 = vector.shape_cast %132 : vector<8xf32> to vector<8x1xf32>
    %134 = vector.broadcast %133 : vector<8x1xf32> to vector<8x8xf32>
    %135 = arith.subf %131, %134 : vector<8x8xf32>
    %136 = math.exp %135 : vector<8x8xf32>
    %cst_82 = arith.constant dense<0.000000e+00> : vector<8xf32>
    %137 = vector.multi_reduction <add>, %136, %cst_82 [1] : vector<8x8xf32> to vector<8xf32>
    %138 = vector.shape_cast %137 : vector<8xf32> to vector<8x1xf32>
    %139 = vector.broadcast %138 : vector<8x1xf32> to vector<8x8xf32>
    %140 = arith.divf %136, %139 : vector<8x8xf32>
    %141 = vector.extract_strided_slice %109 {offsets = [0, 0], sizes = [8, 16], strides = [1, 1]} : vector<16x16xf32> to vector<8x16xf32>
    %cst_83 = arith.constant dense<0.000000e+00> : vector<8x16xf32>
    %142 = tpu.matmul %140, %141, %cst_83 {dimension_numbers = #tpu.dot_dimension_numbers<[1], [0], [0], [1], [0, 0, 1, 1], [], []>} : vector<8x8xf32>, vector<8x16xf32>, vector<8x16xf32> -> vector<8x16xf32>
    %143 = vector.extract_strided_slice %78 {offsets = [0, 0], sizes = [8, 16], strides = [1, 1]} : vector<16x16xf32> to vector<8x16xf32>
    %144 = vector.extract_strided_slice %108 {offsets = [0, 0], sizes = [8, 16], strides = [1, 1]} : vector<16x16xf32> to vector<8x16xf32>
    %cst_84 = arith.constant dense<0.000000e+00> : vector<8x8xf32>
    %145 = tpu.matmul %143, %144, %cst_84 {dimension_numbers = #tpu.dot_dimension_numbers<[1], [1], [0], [0], [0, 0, 1, 0], [], []>} : vector<8x16xf32>, vector<8x16xf32>, vector<8x8xf32> -> vector<8x8xf32>
    %cst_85 = arith.constant 2.500000e-01 : f32
    %146 = vector.broadcast %cst_85 : f32 to vector<8x8xf32>
    %147 = arith.mulf %145, %146 : vector<8x8xf32>
    %cst_86 = arith.constant dense<0xFF800000> : vector<8xf32>
    %148 = vector.multi_reduction <maximumf>, %147, %cst_86 [1] : vector<8x8xf32> to vector<8xf32>
    %149 = vector.shape_cast %148 : vector<8xf32> to vector<8x1xf32>
    %150 = vector.broadcast %149 : vector<8x1xf32> to vector<8x8xf32>
    %151 = arith.subf %147, %150 : vector<8x8xf32>
    %152 = math.exp %151 : vector<8x8xf32>
    %cst_87 = arith.constant dense<0.000000e+00> : vector<8xf32>
    %153 = vector.multi_reduction <add>, %152, %cst_87 [1] : vector<8x8xf32> to vector<8xf32>
    %154 = vector.shape_cast %153 : vector<8xf32> to vector<8x1xf32>
    %155 = vector.broadcast %154 : vector<8x1xf32> to vector<8x8xf32>
    %156 = arith.divf %152, %155 : vector<8x8xf32>
    %157 = vector.extract_strided_slice %110 {offsets = [0, 0], sizes = [8, 16], strides = [1, 1]} : vector<16x16xf32> to vector<8x16xf32>
    %cst_88 = arith.constant dense<0.000000e+00> : vector<8x16xf32>
    %158 = tpu.matmul %156, %157, %cst_88 {dimension_numbers = #tpu.dot_dimension_numbers<[1], [0], [0], [1], [0, 0, 1, 1], [], []>} : vector<8x8xf32>, vector<8x16xf32>, vector<8x16xf32> -> vector<8x16xf32>
    %159 = vector.extract_strided_slice %88 {offsets = [0, 0], sizes = [8, 16], strides = [1, 1]} : vector<16x16xf32> to vector<8x16xf32>
    %160 = vector.extract_strided_slice %108 {offsets = [0, 0], sizes = [8, 16], strides = [1, 1]} : vector<16x16xf32> to vector<8x16xf32>
    %cst_89 = arith.constant dense<0.000000e+00> : vector<8x8xf32>
    %161 = tpu.matmul %159, %160, %cst_89 {dimension_numbers = #tpu.dot_dimension_numbers<[1], [1], [0], [0], [0, 0, 1, 0], [], []>} : vector<8x16xf32>, vector<8x16xf32>, vector<8x8xf32> -> vector<8x8xf32>
    %cst_90 = arith.constant 2.500000e-01 : f32
    %162 = vector.broadcast %cst_90 : f32 to vector<8x8xf32>
    %163 = arith.mulf %161, %162 : vector<8x8xf32>
    %cst_91 = arith.constant dense<0xFF800000> : vector<8xf32>
    %164 = vector.multi_reduction <maximumf>, %163, %cst_91 [1] : vector<8x8xf32> to vector<8xf32>
    %165 = vector.shape_cast %164 : vector<8xf32> to vector<8x1xf32>
    %166 = vector.broadcast %165 : vector<8x1xf32> to vector<8x8xf32>
    %167 = arith.subf %163, %166 : vector<8x8xf32>
    %168 = math.exp %167 : vector<8x8xf32>
    %cst_92 = arith.constant dense<0.000000e+00> : vector<8xf32>
    %169 = vector.multi_reduction <add>, %168, %cst_92 [1] : vector<8x8xf32> to vector<8xf32>
    %170 = vector.shape_cast %169 : vector<8xf32> to vector<8x1xf32>
    %171 = vector.broadcast %170 : vector<8x1xf32> to vector<8x8xf32>
    %172 = arith.divf %168, %171 : vector<8x8xf32>
    %173 = vector.extract_strided_slice %110 {offsets = [0, 0], sizes = [8, 16], strides = [1, 1]} : vector<16x16xf32> to vector<8x16xf32>
    %cst_93 = arith.constant dense<0.000000e+00> : vector<8x16xf32>
    %174 = tpu.matmul %172, %173, %cst_93 {dimension_numbers = #tpu.dot_dimension_numbers<[1], [0], [0], [1], [0, 0, 1, 1], [], []>} : vector<8x8xf32>, vector<8x16xf32>, vector<8x16xf32> -> vector<8x16xf32>
    %175 = tpu.concatenate %126, %142, %158, %174 in 1 : vector<8x16xf32>, vector<8x16xf32>, vector<8x16xf32>, vector<8x16xf32> -> vector<8x64xf32>
    %176 = vector.extract_strided_slice %58 {offsets = [8, 0], sizes = [8, 16], strides = [1, 1]} : vector<16x16xf32> to vector<8x16xf32>
    %177 = vector.extract_strided_slice %98 {offsets = [8, 0], sizes = [8, 16], strides = [1, 1]} : vector<16x16xf32> to vector<8x16xf32>
    %cst_94 = arith.constant dense<0.000000e+00> : vector<8x8xf32>
    %178 = tpu.matmul %176, %177, %cst_94 {dimension_numbers = #tpu.dot_dimension_numbers<[1], [1], [0], [0], [0, 0, 1, 0], [], []>} : vector<8x16xf32>, vector<8x16xf32>, vector<8x8xf32> -> vector<8x8xf32>
    %cst_95 = arith.constant 2.500000e-01 : f32
    %179 = vector.broadcast %cst_95 : f32 to vector<8x8xf32>
    %180 = arith.mulf %178, %179 : vector<8x8xf32>
    %cst_96 = arith.constant dense<0xFF800000> : vector<8xf32>
    %181 = vector.multi_reduction <maximumf>, %180, %cst_96 [1] : vector<8x8xf32> to vector<8xf32>
    %182 = vector.shape_cast %181 : vector<8xf32> to vector<8x1xf32>
    %183 = vector.broadcast %182 : vector<8x1xf32> to vector<8x8xf32>
    %184 = arith.subf %180, %183 : vector<8x8xf32>
    %185 = math.exp %184 : vector<8x8xf32>
    %cst_97 = arith.constant dense<0.000000e+00> : vector<8xf32>
    %186 = vector.multi_reduction <add>, %185, %cst_97 [1] : vector<8x8xf32> to vector<8xf32>
    %187 = vector.shape_cast %186 : vector<8xf32> to vector<8x1xf32>
    %188 = vector.broadcast %187 : vector<8x1xf32> to vector<8x8xf32>
    %189 = arith.divf %185, %188 : vector<8x8xf32>
    %190 = vector.extract_strided_slice %109 {offsets = [8, 0], sizes = [8, 16], strides = [1, 1]} : vector<16x16xf32> to vector<8x16xf32>
    %cst_98 = arith.constant dense<0.000000e+00> : vector<8x16xf32>
    %191 = tpu.matmul %189, %190, %cst_98 {dimension_numbers = #tpu.dot_dimension_numbers<[1], [0], [0], [1], [0, 0, 1, 1], [], []>} : vector<8x8xf32>, vector<8x16xf32>, vector<8x16xf32> -> vector<8x16xf32>
    %192 = vector.extract_strided_slice %68 {offsets = [8, 0], sizes = [8, 16], strides = [1, 1]} : vector<16x16xf32> to vector<8x16xf32>
    %193 = vector.extract_strided_slice %98 {offsets = [8, 0], sizes = [8, 16], strides = [1, 1]} : vector<16x16xf32> to vector<8x16xf32>
    %cst_99 = arith.constant dense<0.000000e+00> : vector<8x8xf32>
    %194 = tpu.matmul %192, %193, %cst_99 {dimension_numbers = #tpu.dot_dimension_numbers<[1], [1], [0], [0], [0, 0, 1, 0], [], []>} : vector<8x16xf32>, vector<8x16xf32>, vector<8x8xf32> -> vector<8x8xf32>
    %cst_100 = arith.constant 2.500000e-01 : f32
    %195 = vector.broadcast %cst_100 : f32 to vector<8x8xf32>
    %196 = arith.mulf %194, %195 : vector<8x8xf32>
    %cst_101 = arith.constant dense<0xFF800000> : vector<8xf32>
    %197 = vector.multi_reduction <maximumf>, %196, %cst_101 [1] : vector<8x8xf32> to vector<8xf32>
    %198 = vector.shape_cast %197 : vector<8xf32> to vector<8x1xf32>
    %199 = vector.broadcast %198 : vector<8x1xf32> to vector<8x8xf32>
    %200 = arith.subf %196, %199 : vector<8x8xf32>
    %201 = math.exp %200 : vector<8x8xf32>
    %cst_102 = arith.constant dense<0.000000e+00> : vector<8xf32>
    %202 = vector.multi_reduction <add>, %201, %cst_102 [1] : vector<8x8xf32> to vector<8xf32>
    %203 = vector.shape_cast %202 : vector<8xf32> to vector<8x1xf32>
    %204 = vector.broadcast %203 : vector<8x1xf32> to vector<8x8xf32>
    %205 = arith.divf %201, %204 : vector<8x8xf32>
    %206 = vector.extract_strided_slice %109 {offsets = [8, 0], sizes = [8, 16], strides = [1, 1]} : vector<16x16xf32> to vector<8x16xf32>
    %cst_103 = arith.constant dense<0.000000e+00> : vector<8x16xf32>
    %207 = tpu.matmul %205, %206, %cst_103 {dimension_numbers = #tpu.dot_dimension_numbers<[1], [0], [0], [1], [0, 0, 1, 1], [], []>} : vector<8x8xf32>, vector<8x16xf32>, vector<8x16xf32> -> vector<8x16xf32>
    %208 = vector.extract_strided_slice %78 {offsets = [8, 0], sizes = [8, 16], strides = [1, 1]} : vector<16x16xf32> to vector<8x16xf32>
    %209 = vector.extract_strided_slice %108 {offsets = [8, 0], sizes = [8, 16], strides = [1, 1]} : vector<16x16xf32> to vector<8x16xf32>
    %cst_104 = arith.constant dense<0.000000e+00> : vector<8x8xf32>
    %210 = tpu.matmul %208, %209, %cst_104 {dimension_numbers = #tpu.dot_dimension_numbers<[1], [1], [0], [0], [0, 0, 1, 0], [], []>} : vector<8x16xf32>, vector<8x16xf32>, vector<8x8xf32> -> vector<8x8xf32>
    %cst_105 = arith.constant 2.500000e-01 : f32
    %211 = vector.broadcast %cst_105 : f32 to vector<8x8xf32>
    %212 = arith.mulf %210, %211 : vector<8x8xf32>
    %cst_106 = arith.constant dense<0xFF800000> : vector<8xf32>
    %213 = vector.multi_reduction <maximumf>, %212, %cst_106 [1] : vector<8x8xf32> to vector<8xf32>
    %214 = vector.shape_cast %213 : vector<8xf32> to vector<8x1xf32>
    %215 = vector.broadcast %214 : vector<8x1xf32> to vector<8x8xf32>
    %216 = arith.subf %212, %215 : vector<8x8xf32>
    %217 = math.exp %216 : vector<8x8xf32>
    %cst_107 = arith.constant dense<0.000000e+00> : vector<8xf32>
    %218 = vector.multi_reduction <add>, %217, %cst_107 [1] : vector<8x8xf32> to vector<8xf32>
    %219 = vector.shape_cast %218 : vector<8xf32> to vector<8x1xf32>
    %220 = vector.broadcast %219 : vector<8x1xf32> to vector<8x8xf32>
    %221 = arith.divf %217, %220 : vector<8x8xf32>
    %222 = vector.extract_strided_slice %110 {offsets = [8, 0], sizes = [8, 16], strides = [1, 1]} : vector<16x16xf32> to vector<8x16xf32>
    %cst_108 = arith.constant dense<0.000000e+00> : vector<8x16xf32>
    %223 = tpu.matmul %221, %222, %cst_108 {dimension_numbers = #tpu.dot_dimension_numbers<[1], [0], [0], [1], [0, 0, 1, 1], [], []>} : vector<8x8xf32>, vector<8x16xf32>, vector<8x16xf32> -> vector<8x16xf32>
    %224 = vector.extract_strided_slice %88 {offsets = [8, 0], sizes = [8, 16], strides = [1, 1]} : vector<16x16xf32> to vector<8x16xf32>
    %225 = vector.extract_strided_slice %108 {offsets = [8, 0], sizes = [8, 16], strides = [1, 1]} : vector<16x16xf32> to vector<8x16xf32>
    %cst_109 = arith.constant dense<0.000000e+00> : vector<8x8xf32>
    %226 = tpu.matmul %224, %225, %cst_109 {dimension_numbers = #tpu.dot_dimension_numbers<[1], [1], [0], [0], [0, 0, 1, 0], [], []>} : vector<8x16xf32>, vector<8x16xf32>, vector<8x8xf32> -> vector<8x8xf32>
    %cst_110 = arith.constant 2.500000e-01 : f32
    %227 = vector.broadcast %cst_110 : f32 to vector<8x8xf32>
    %228 = arith.mulf %226, %227 : vector<8x8xf32>
    %cst_111 = arith.constant dense<0xFF800000> : vector<8xf32>
    %229 = vector.multi_reduction <maximumf>, %228, %cst_111 [1] : vector<8x8xf32> to vector<8xf32>
    %230 = vector.shape_cast %229 : vector<8xf32> to vector<8x1xf32>
    %231 = vector.broadcast %230 : vector<8x1xf32> to vector<8x8xf32>
    %232 = arith.subf %228, %231 : vector<8x8xf32>
    %233 = math.exp %232 : vector<8x8xf32>
    %cst_112 = arith.constant dense<0.000000e+00> : vector<8xf32>
    %234 = vector.multi_reduction <add>, %233, %cst_112 [1] : vector<8x8xf32> to vector<8xf32>
    %235 = vector.shape_cast %234 : vector<8xf32> to vector<8x1xf32>
    %236 = vector.broadcast %235 : vector<8x1xf32> to vector<8x8xf32>
    %237 = arith.divf %233, %236 : vector<8x8xf32>
    %238 = vector.extract_strided_slice %110 {offsets = [8, 0], sizes = [8, 16], strides = [1, 1]} : vector<16x16xf32> to vector<8x16xf32>
    %cst_113 = arith.constant dense<0.000000e+00> : vector<8x16xf32>
    %239 = tpu.matmul %237, %238, %cst_113 {dimension_numbers = #tpu.dot_dimension_numbers<[1], [0], [0], [1], [0, 0, 1, 1], [], []>} : vector<8x8xf32>, vector<8x16xf32>, vector<8x16xf32> -> vector<8x16xf32>
    %240 = tpu.concatenate %191, %207, %223, %239 in 1 : vector<8x16xf32>, vector<8x16xf32>, vector<8x16xf32>, vector<8x16xf32> -> vector<8x64xf32>
    %241 = tpu.concatenate %175, %240 in 0 : vector<8x64xf32>, vector<8x64xf32> -> vector<16x64xf32>
    %cst_114 = arith.constant dense<0.000000e+00> : vector<16x64xf32>
    %242 = tpu.matmul %241, %3, %cst_114 {dimension_numbers = #tpu.dot_dimension_numbers<[1], [0], [0], [1], [0, 0, 1, 1], [], []>} : vector<16x64xf32>, vector<64x64xf32>, vector<16x64xf32> -> vector<16x64xf32>
    %243 = arith.addf %0, %242 : vector<16x64xf32>
    %cst_115 = arith.constant dense<0.000000e+00> : vector<16x64xf32>
    %244 = tpu.matmul %243, %7, %cst_115 {dimension_numbers = #tpu.dot_dimension_numbers<[1], [0], [0], [1], [0, 0, 1, 1], [], []>} : vector<16x64xf32>, vector<64x64xf32>, vector<16x64xf32> -> vector<16x64xf32>
    %cst_116 = arith.constant dense<0.000000e+00> : vector<32x64xf32>
    %245 = tpu.matmul %6, %8, %cst_116 {dimension_numbers = #tpu.dot_dimension_numbers<[1], [0], [0], [1], [0, 0, 1, 1], [], []>} : vector<32x64xf32>, vector<64x64xf32>, vector<32x64xf32> -> vector<32x64xf32>
    %cst_117 = arith.constant dense<0.000000e+00> : vector<32x64xf32>
    %246 = tpu.matmul %6, %9, %cst_117 {dimension_numbers = #tpu.dot_dimension_numbers<[1], [0], [0], [1], [0, 0, 1, 1], [], []>} : vector<32x64xf32>, vector<64x64xf32>, vector<32x64xf32> -> vector<32x64xf32>
    %cst_118 = arith.constant dense<0.000000e+00> : vector<16x32xf32>
    %247 = tpu.matmul %244, %245, %cst_118 {dimension_numbers = #tpu.dot_dimension_numbers<[1], [1], [0], [0], [0, 0, 1, 0], [], []>} : vector<16x64xf32>, vector<32x64xf32>, vector<16x32xf32> -> vector<16x32xf32>
    %cst_119 = arith.constant 1.250000e-01 : f32
    %248 = vector.broadcast %cst_119 : f32 to vector<16x32xf32>
    %249 = arith.mulf %247, %248 : vector<16x32xf32>
    %cst_120 = arith.constant dense<0xFF800000> : vector<16xf32>
    %250 = vector.multi_reduction <maximumf>, %249, %cst_120 [1] : vector<16x32xf32> to vector<16xf32>
    %251 = vector.shape_cast %250 : vector<16xf32> to vector<16x1xf32>
    %252 = vector.broadcast %251 : vector<16x1xf32> to vector<16x32xf32>
    %253 = arith.subf %249, %252 : vector<16x32xf32>
    %254 = math.exp %253 : vector<16x32xf32>
    %cst_121 = arith.constant dense<0.000000e+00> : vector<16xf32>
    %255 = vector.multi_reduction <add>, %254, %cst_121 [1] : vector<16x32xf32> to vector<16xf32>
    %256 = vector.shape_cast %255 : vector<16xf32> to vector<16x1xf32>
    %257 = vector.broadcast %256 : vector<16x1xf32> to vector<16x32xf32>
    %258 = arith.divf %254, %257 : vector<16x32xf32>
    %cst_122 = arith.constant dense<0.000000e+00> : vector<16x64xf32>
    %259 = tpu.matmul %258, %246, %cst_122 {dimension_numbers = #tpu.dot_dimension_numbers<[1], [0], [0], [1], [0, 0, 1, 1], [], []>} : vector<16x32xf32>, vector<32x64xf32>, vector<16x64xf32> -> vector<16x64xf32>
    %cst_123 = arith.constant dense<0.000000e+00> : vector<16x64xf32>
    %260 = tpu.matmul %259, %10, %cst_123 {dimension_numbers = #tpu.dot_dimension_numbers<[1], [0], [0], [1], [0, 0, 1, 1], [], []>} : vector<16x64xf32>, vector<64x64xf32>, vector<16x64xf32> -> vector<16x64xf32>
    %cst_124 = arith.constant 1.000000e-01 : f32
    %261 = vector.broadcast %cst_124 : f32 to vector<16x64xf32>
    %262 = arith.mulf %261, %260 : vector<16x64xf32>
    %263 = arith.addf %243, %262 : vector<16x64xf32>
    %264 = arith.mulf %263, %263 : vector<16x64xf32>
    %cst_125 = arith.constant dense<0.000000e+00> : vector<16xf32>
    %265 = vector.multi_reduction <add>, %264, %cst_125 [1] : vector<16x64xf32> to vector<16xf32>
    %266 = vector.shape_cast %265 : vector<16xf32> to vector<16x1xf32>
    %cst_126 = arith.constant 6.400000e+01 : f32
    %267 = vector.broadcast %cst_126 : f32 to vector<16x1xf32>
    %268 = arith.divf %266, %267 : vector<16x1xf32>
    %cst_127 = arith.constant 9.99999997E-7 : f32
    %269 = vector.broadcast %cst_127 : f32 to vector<16x1xf32>
    %270 = arith.addf %268, %269 : vector<16x1xf32>
    %271 = math.rsqrt %270 : vector<16x1xf32>
    %272 = vector.broadcast %271 : vector<16x1xf32> to vector<16x64xf32>
    %273 = arith.mulf %263, %272 : vector<16x64xf32>
    %274 = vector.broadcast %11 : vector<1x64xf32> to vector<16x64xf32>
    %275 = arith.mulf %273, %274 : vector<16x64xf32>
    %cst_128 = arith.constant dense<0.000000e+00> : vector<16x256xf32>
    %276 = tpu.matmul %275, %12, %cst_128 {dimension_numbers = #tpu.dot_dimension_numbers<[1], [0], [0], [1], [0, 0, 1, 1], [], []>} : vector<16x64xf32>, vector<64x256xf32>, vector<16x256xf32> -> vector<16x256xf32>
    %277 = vector.extract_strided_slice %276 {offsets = [0, 0], sizes = [16, 128], strides = [1, 1]} : vector<16x256xf32> to vector<16x128xf32>
    %278 = vector.extract_strided_slice %276 {offsets = [0, 128], sizes = [16, 128], strides = [1, 1]} : vector<16x256xf32> to vector<16x128xf32>
    %279 = arith.negf %277 : vector<16x128xf32>
    %280 = math.exp %279 : vector<16x128xf32>
    %cst_129 = arith.constant 1.000000e+00 : f32
    %281 = vector.broadcast %cst_129 : f32 to vector<16x128xf32>
    %282 = arith.addf %281, %280 : vector<16x128xf32>
    %283 = arith.divf %281, %282 : vector<16x128xf32>
    %284 = arith.mulf %277, %283 : vector<16x128xf32>
    %285 = arith.mulf %284, %278 : vector<16x128xf32>
    %cst_130 = arith.constant dense<0.000000e+00> : vector<16x64xf32>
    %286 = tpu.matmul %285, %13, %cst_130 {dimension_numbers = #tpu.dot_dimension_numbers<[1], [0], [0], [1], [0, 0, 1, 1], [], []>} : vector<16x128xf32>, vector<128x64xf32>, vector<16x64xf32> -> vector<16x64xf32>
    %287 = arith.addf %263, %286 : vector<16x64xf32>
    %288 = arith.mulf %287, %287 : vector<16x64xf32>
    %cst_131 = arith.constant dense<0.000000e+00> : vector<16xf32>
    %289 = vector.multi_reduction <add>, %288, %cst_131 [1] : vector<16x64xf32> to vector<16xf32>
    %290 = vector.shape_cast %289 : vector<16xf32> to vector<16x1xf32>
    %cst_132 = arith.constant 6.400000e+01 : f32
    %291 = vector.broadcast %cst_132 : f32 to vector<16x1xf32>
    %292 = arith.divf %290, %291 : vector<16x1xf32>
    %cst_133 = arith.constant 9.99999997E-7 : f32
    %293 = vector.broadcast %cst_133 : f32 to vector<16x1xf32>
    %294 = arith.addf %292, %293 : vector<16x1xf32>
    %295 = math.rsqrt %294 : vector<16x1xf32>
    %296 = vector.broadcast %295 : vector<16x1xf32> to vector<16x64xf32>
    %297 = arith.mulf %287, %296 : vector<16x64xf32>
    %298 = vector.broadcast %14 : vector<1x64xf32> to vector<16x64xf32>
    %299 = arith.mulf %297, %298 : vector<16x64xf32>
    %cst_134 = arith.constant dense<0.000000e+00> : vector<16x192xf32>
    %300 = tpu.matmul %299, %15, %cst_134 {dimension_numbers = #tpu.dot_dimension_numbers<[1], [0], [0], [1], [0, 0, 1, 1], [], []>} : vector<16x64xf32>, vector<64x192xf32>, vector<16x192xf32> -> vector<16x192xf32>
    %301 = vector.extract_strided_slice %300 {offsets = [0, 0], sizes = [8, 32], strides = [1, 1]} : vector<16x192xf32> to vector<8x32xf32>
    %302 = vector.extract_strided_slice %300 {offsets = [0, 64], sizes = [8, 32], strides = [1, 1]} : vector<16x192xf32> to vector<8x32xf32>
    %303 = vector.extract_strided_slice %300 {offsets = [0, 128], sizes = [8, 32], strides = [1, 1]} : vector<16x192xf32> to vector<8x32xf32>
    %cst_135 = arith.constant dense<0.000000e+00> : vector<8x8xf32>
    %304 = tpu.matmul %301, %302, %cst_135 {dimension_numbers = #tpu.dot_dimension_numbers<[1], [1], [0], [0], [0, 0, 1, 0], [], []>} : vector<8x32xf32>, vector<8x32xf32>, vector<8x8xf32> -> vector<8x8xf32>
    %cst_136 = arith.constant 0.176776692 : f32
    %305 = vector.broadcast %cst_136 : f32 to vector<8x8xf32>
    %306 = arith.mulf %304, %305 : vector<8x8xf32>
    %cst_137 = arith.constant dense<0xFF800000> : vector<8xf32>
    %307 = vector.multi_reduction <maximumf>, %306, %cst_137 [1] : vector<8x8xf32> to vector<8xf32>
    %308 = vector.shape_cast %307 : vector<8xf32> to vector<8x1xf32>
    %309 = vector.broadcast %308 : vector<8x1xf32> to vector<8x8xf32>
    %310 = arith.subf %306, %309 : vector<8x8xf32>
    %311 = math.exp %310 : vector<8x8xf32>
    %cst_138 = arith.constant dense<0.000000e+00> : vector<8xf32>
    %312 = vector.multi_reduction <add>, %311, %cst_138 [1] : vector<8x8xf32> to vector<8xf32>
    %313 = vector.shape_cast %312 : vector<8xf32> to vector<8x1xf32>
    %314 = vector.broadcast %313 : vector<8x1xf32> to vector<8x8xf32>
    %315 = arith.divf %311, %314 : vector<8x8xf32>
    %cst_139 = arith.constant dense<0.000000e+00> : vector<8x32xf32>
    %316 = tpu.matmul %315, %303, %cst_139 {dimension_numbers = #tpu.dot_dimension_numbers<[1], [0], [0], [1], [0, 0, 1, 1], [], []>} : vector<8x8xf32>, vector<8x32xf32>, vector<8x32xf32> -> vector<8x32xf32>
    %317 = vector.extract_strided_slice %300 {offsets = [0, 32], sizes = [8, 32], strides = [1, 1]} : vector<16x192xf32> to vector<8x32xf32>
    %318 = vector.extract_strided_slice %300 {offsets = [0, 96], sizes = [8, 32], strides = [1, 1]} : vector<16x192xf32> to vector<8x32xf32>
    %319 = vector.extract_strided_slice %300 {offsets = [0, 160], sizes = [8, 32], strides = [1, 1]} : vector<16x192xf32> to vector<8x32xf32>
    %cst_140 = arith.constant dense<0.000000e+00> : vector<8x8xf32>
    %320 = tpu.matmul %317, %318, %cst_140 {dimension_numbers = #tpu.dot_dimension_numbers<[1], [1], [0], [0], [0, 0, 1, 0], [], []>} : vector<8x32xf32>, vector<8x32xf32>, vector<8x8xf32> -> vector<8x8xf32>
    %cst_141 = arith.constant 0.176776692 : f32
    %321 = vector.broadcast %cst_141 : f32 to vector<8x8xf32>
    %322 = arith.mulf %320, %321 : vector<8x8xf32>
    %cst_142 = arith.constant dense<0xFF800000> : vector<8xf32>
    %323 = vector.multi_reduction <maximumf>, %322, %cst_142 [1] : vector<8x8xf32> to vector<8xf32>
    %324 = vector.shape_cast %323 : vector<8xf32> to vector<8x1xf32>
    %325 = vector.broadcast %324 : vector<8x1xf32> to vector<8x8xf32>
    %326 = arith.subf %322, %325 : vector<8x8xf32>
    %327 = math.exp %326 : vector<8x8xf32>
    %cst_143 = arith.constant dense<0.000000e+00> : vector<8xf32>
    %328 = vector.multi_reduction <add>, %327, %cst_143 [1] : vector<8x8xf32> to vector<8xf32>
    %329 = vector.shape_cast %328 : vector<8xf32> to vector<8x1xf32>
    %330 = vector.broadcast %329 : vector<8x1xf32> to vector<8x8xf32>
    %331 = arith.divf %327, %330 : vector<8x8xf32>
    %cst_144 = arith.constant dense<0.000000e+00> : vector<8x32xf32>
    %332 = tpu.matmul %331, %319, %cst_144 {dimension_numbers = #tpu.dot_dimension_numbers<[1], [0], [0], [1], [0, 0, 1, 1], [], []>} : vector<8x8xf32>, vector<8x32xf32>, vector<8x32xf32> -> vector<8x32xf32>
    %333 = tpu.concatenate %316, %332 in 1 : vector<8x32xf32>, vector<8x32xf32> -> vector<8x64xf32>
    %334 = vector.extract_strided_slice %300 {offsets = [8, 0], sizes = [8, 32], strides = [1, 1]} : vector<16x192xf32> to vector<8x32xf32>
    %335 = vector.extract_strided_slice %300 {offsets = [8, 64], sizes = [8, 32], strides = [1, 1]} : vector<16x192xf32> to vector<8x32xf32>
    %336 = vector.extract_strided_slice %300 {offsets = [8, 128], sizes = [8, 32], strides = [1, 1]} : vector<16x192xf32> to vector<8x32xf32>
    %cst_145 = arith.constant dense<0.000000e+00> : vector<8x8xf32>
    %337 = tpu.matmul %334, %335, %cst_145 {dimension_numbers = #tpu.dot_dimension_numbers<[1], [1], [0], [0], [0, 0, 1, 0], [], []>} : vector<8x32xf32>, vector<8x32xf32>, vector<8x8xf32> -> vector<8x8xf32>
    %cst_146 = arith.constant 0.176776692 : f32
    %338 = vector.broadcast %cst_146 : f32 to vector<8x8xf32>
    %339 = arith.mulf %337, %338 : vector<8x8xf32>
    %cst_147 = arith.constant dense<0xFF800000> : vector<8xf32>
    %340 = vector.multi_reduction <maximumf>, %339, %cst_147 [1] : vector<8x8xf32> to vector<8xf32>
    %341 = vector.shape_cast %340 : vector<8xf32> to vector<8x1xf32>
    %342 = vector.broadcast %341 : vector<8x1xf32> to vector<8x8xf32>
    %343 = arith.subf %339, %342 : vector<8x8xf32>
    %344 = math.exp %343 : vector<8x8xf32>
    %cst_148 = arith.constant dense<0.000000e+00> : vector<8xf32>
    %345 = vector.multi_reduction <add>, %344, %cst_148 [1] : vector<8x8xf32> to vector<8xf32>
    %346 = vector.shape_cast %345 : vector<8xf32> to vector<8x1xf32>
    %347 = vector.broadcast %346 : vector<8x1xf32> to vector<8x8xf32>
    %348 = arith.divf %344, %347 : vector<8x8xf32>
    %cst_149 = arith.constant dense<0.000000e+00> : vector<8x32xf32>
    %349 = tpu.matmul %348, %336, %cst_149 {dimension_numbers = #tpu.dot_dimension_numbers<[1], [0], [0], [1], [0, 0, 1, 1], [], []>} : vector<8x8xf32>, vector<8x32xf32>, vector<8x32xf32> -> vector<8x32xf32>
    %350 = vector.extract_strided_slice %300 {offsets = [8, 32], sizes = [8, 32], strides = [1, 1]} : vector<16x192xf32> to vector<8x32xf32>
    %351 = vector.extract_strided_slice %300 {offsets = [8, 96], sizes = [8, 32], strides = [1, 1]} : vector<16x192xf32> to vector<8x32xf32>
    %352 = vector.extract_strided_slice %300 {offsets = [8, 160], sizes = [8, 32], strides = [1, 1]} : vector<16x192xf32> to vector<8x32xf32>
    %cst_150 = arith.constant dense<0.000000e+00> : vector<8x8xf32>
    %353 = tpu.matmul %350, %351, %cst_150 {dimension_numbers = #tpu.dot_dimension_numbers<[1], [1], [0], [0], [0, 0, 1, 0], [], []>} : vector<8x32xf32>, vector<8x32xf32>, vector<8x8xf32> -> vector<8x8xf32>
    %cst_151 = arith.constant 0.176776692 : f32
    %354 = vector.broadcast %cst_151 : f32 to vector<8x8xf32>
    %355 = arith.mulf %353, %354 : vector<8x8xf32>
    %cst_152 = arith.constant dense<0xFF800000> : vector<8xf32>
    %356 = vector.multi_reduction <maximumf>, %355, %cst_152 [1] : vector<8x8xf32> to vector<8xf32>
    %357 = vector.shape_cast %356 : vector<8xf32> to vector<8x1xf32>
    %358 = vector.broadcast %357 : vector<8x1xf32> to vector<8x8xf32>
    %359 = arith.subf %355, %358 : vector<8x8xf32>
    %360 = math.exp %359 : vector<8x8xf32>
    %cst_153 = arith.constant dense<0.000000e+00> : vector<8xf32>
    %361 = vector.multi_reduction <add>, %360, %cst_153 [1] : vector<8x8xf32> to vector<8xf32>
    %362 = vector.shape_cast %361 : vector<8xf32> to vector<8x1xf32>
    %363 = vector.broadcast %362 : vector<8x1xf32> to vector<8x8xf32>
    %364 = arith.divf %360, %363 : vector<8x8xf32>
    %cst_154 = arith.constant dense<0.000000e+00> : vector<8x32xf32>
    %365 = tpu.matmul %364, %352, %cst_154 {dimension_numbers = #tpu.dot_dimension_numbers<[1], [0], [0], [1], [0, 0, 1, 1], [], []>} : vector<8x8xf32>, vector<8x32xf32>, vector<8x32xf32> -> vector<8x32xf32>
    %366 = tpu.concatenate %349, %365 in 1 : vector<8x32xf32>, vector<8x32xf32> -> vector<8x64xf32>
    %367 = tpu.concatenate %333, %366 in 0 : vector<8x64xf32>, vector<8x64xf32> -> vector<16x64xf32>
    %cst_155 = arith.constant dense<0.000000e+00> : vector<16x64xf32>
    %368 = tpu.matmul %367, %16, %cst_155 {dimension_numbers = #tpu.dot_dimension_numbers<[1], [0], [0], [1], [0, 0, 1, 1], [], []>} : vector<16x64xf32>, vector<64x64xf32>, vector<16x64xf32> -> vector<16x64xf32>
    %cst_156 = arith.constant dense<0.000000e+00> : vector<16x64xf32>
    %369 = tpu.matmul %287, %17, %cst_156 {dimension_numbers = #tpu.dot_dimension_numbers<[1], [0], [0], [1], [0, 0, 1, 1], [], []>} : vector<16x64xf32>, vector<64x64xf32>, vector<16x64xf32> -> vector<16x64xf32>
    %370 = vector.broadcast %18 : vector<1x64xf32> to vector<16x64xf32>
    %371 = arith.addf %369, %370 : vector<16x64xf32>
    %372 = arith.negf %371 : vector<16x64xf32>
    %373 = math.exp %372 : vector<16x64xf32>
    %cst_157 = arith.constant 1.000000e+00 : f32
    %374 = vector.broadcast %cst_157 : f32 to vector<16x64xf32>
    %375 = arith.addf %374, %373 : vector<16x64xf32>
    %376 = arith.divf %374, %375 : vector<16x64xf32>
    %377 = arith.mulf %376, %368 : vector<16x64xf32>
    %cst_158 = arith.constant 1.000000e+00 : f32
    %378 = vector.broadcast %cst_158 : f32 to vector<16x64xf32>
    %379 = arith.subf %378, %376 : vector<16x64xf32>
    %380 = arith.mulf %379, %287 : vector<16x64xf32>
    %381 = arith.addf %377, %380 : vector<16x64xf32>
    %382 = vector.extract_strided_slice %381 {offsets = [7, 0], sizes = [1, 64], strides = [1, 1]} : vector<16x64xf32> to vector<1x64xf32>
    %383 = vector.extract_strided_slice %381 {offsets = [15, 0], sizes = [1, 64], strides = [1, 1]} : vector<16x64xf32> to vector<1x64xf32>
    %384 = tpu.concatenate %382, %383 in 0 : vector<1x64xf32>, vector<1x64xf32> -> vector<2x64xf32>
    %cst_159 = arith.constant dense<0.000000e+00> : vector<2x8xf32>
    %385 = tpu.matmul %384, %19, %cst_159 {dimension_numbers = #tpu.dot_dimension_numbers<[1], [0], [0], [1], [0, 0, 1, 1], [], []>} : vector<2x64xf32>, vector<64x8xf32>, vector<2x8xf32> -> vector<2x8xf32>
    %386 = vector.broadcast %20 : vector<1x8xf32> to vector<2x8xf32>
    %387 = arith.addf %385, %386 : vector<2x8xf32>
    %cst_160 = arith.constant dense<0.000000e+00> : vector<16x1xf32>
    %388 = tpu.matmul %381, %21, %cst_160 {dimension_numbers = #tpu.dot_dimension_numbers<[1], [0], [0], [1], [0, 0, 1, 1], [], []>} : vector<16x64xf32>, vector<64x1xf32>, vector<16x1xf32> -> vector<16x1xf32>
    %389 = vector.broadcast %22 : vector<1x1xf32> to vector<16x1xf32>
    %390 = arith.addf %388, %389 : vector<16x1xf32>
    %391 = arith.negf %390 : vector<16x1xf32>
    %392 = math.exp %391 : vector<16x1xf32>
    %cst_161 = arith.constant 1.000000e+00 : f32
    %393 = vector.broadcast %cst_161 : f32 to vector<16x1xf32>
    %394 = arith.addf %393, %392 : vector<16x1xf32>
    %395 = arith.divf %393, %394 : vector<16x1xf32>
    %cst_162 = arith.constant dense<0.000000e+00> : vector<16x32xf32>
    %396 = tpu.matmul %381, %24, %cst_162 {dimension_numbers = #tpu.dot_dimension_numbers<[1], [0], [0], [1], [0, 0, 1, 1], [], []>} : vector<16x64xf32>, vector<64x32xf32>, vector<16x32xf32> -> vector<16x32xf32>
    %397 = vector.broadcast %25 : vector<1x32xf32> to vector<16x32xf32>
    %398 = arith.addf %396, %397 : vector<16x32xf32>
    %399 = vector.extract_strided_slice %28 {offsets = [0, 0], sizes = [32, 32], strides = [1, 1]} : vector<64x32xf32> to vector<32x32xf32>
    %cst_163 = arith.constant dense<0.000000e+00> : vector<1x32xf32>
    %400 = tpu.matmul %23, %399, %cst_163 {dimension_numbers = #tpu.dot_dimension_numbers<[1], [0], [0], [1], [0, 0, 1, 1], [], []>} : vector<1x32xf32>, vector<32x32xf32>, vector<1x32xf32> -> vector<1x32xf32>
    %401 = vector.extract_strided_slice %28 {offsets = [32, 0], sizes = [32, 32], strides = [1, 1]} : vector<64x32xf32> to vector<32x32xf32>
    %cst_164 = arith.constant dense<0.000000e+00> : vector<16x32xf32>
    %402 = tpu.matmul %398, %401, %cst_164 {dimension_numbers = #tpu.dot_dimension_numbers<[1], [0], [0], [1], [0, 0, 1, 1], [], []>} : vector<16x32xf32>, vector<32x32xf32>, vector<16x32xf32> -> vector<16x32xf32>
    %403 = vector.broadcast %400 : vector<1x32xf32> to vector<16x32xf32>
    %404 = arith.addf %403, %402 : vector<16x32xf32>
    %405 = vector.broadcast %29 : vector<1x32xf32> to vector<16x32xf32>
    %406 = arith.addf %404, %405 : vector<16x32xf32>
    %cst_165 = arith.constant 0.000000e+00 : f32
    %407 = vector.broadcast %cst_165 : f32 to vector<16x32xf32>
    %408 = arith.maximumf %406, %407 : vector<16x32xf32>
    %cst_166 = arith.constant dense<0.000000e+00> : vector<16x8xf32>
    %409 = tpu.matmul %408, %30, %cst_166 {dimension_numbers = #tpu.dot_dimension_numbers<[1], [0], [0], [1], [0, 0, 1, 1], [], []>} : vector<16x32xf32>, vector<32x8xf32>, vector<16x8xf32> -> vector<16x8xf32>
    %410 = vector.broadcast %31 : vector<1x8xf32> to vector<16x8xf32>
    %411 = arith.addf %409, %410 : vector<16x8xf32>
    %412 = vector.extract_strided_slice %32 {offsets = [0, 0], sizes = [32, 32], strides = [1, 1]} : vector<96x32xf32> to vector<32x32xf32>
    %cst_167 = arith.constant dense<0.000000e+00> : vector<1x32xf32>
    %413 = tpu.matmul %23, %412, %cst_167 {dimension_numbers = #tpu.dot_dimension_numbers<[1], [0], [0], [1], [0, 0, 1, 1], [], []>} : vector<1x32xf32>, vector<32x32xf32>, vector<1x32xf32> -> vector<1x32xf32>
    %414 = vector.extract_strided_slice %32 {offsets = [32, 0], sizes = [64, 32], strides = [1, 1]} : vector<96x32xf32> to vector<64x32xf32>
    %cst_168 = arith.constant dense<0.000000e+00> : vector<16x32xf32>
    %415 = tpu.matmul %381, %414, %cst_168 {dimension_numbers = #tpu.dot_dimension_numbers<[1], [0], [0], [1], [0, 0, 1, 1], [], []>} : vector<16x64xf32>, vector<64x32xf32>, vector<16x32xf32> -> vector<16x32xf32>
    %416 = vector.broadcast %413 : vector<1x32xf32> to vector<16x32xf32>
    %417 = arith.addf %416, %415 : vector<16x32xf32>
    %418 = vector.broadcast %33 : vector<1x32xf32> to vector<16x32xf32>
    %419 = arith.addf %417, %418 : vector<16x32xf32>
    %cst_169 = arith.constant 0.000000e+00 : f32
    %420 = vector.broadcast %cst_169 : f32 to vector<16x32xf32>
    %421 = arith.maximumf %419, %420 : vector<16x32xf32>
    %cst_170 = arith.constant dense<0.000000e+00> : vector<16x16xf32>
    %422 = tpu.matmul %421, %34, %cst_170 {dimension_numbers = #tpu.dot_dimension_numbers<[1], [0], [0], [1], [0, 0, 1, 1], [], []>} : vector<16x32xf32>, vector<32x16xf32>, vector<16x16xf32> -> vector<16x16xf32>
    %423 = vector.broadcast %35 : vector<1x16xf32> to vector<16x16xf32>
    %424 = arith.addf %422, %423 : vector<16x16xf32>
    %cst_171 = arith.constant dense<0.000000e+00> : vector<16x64xf32>
    %425 = tpu.matmul %398, %26, %cst_171 {dimension_numbers = #tpu.dot_dimension_numbers<[1], [0], [0], [1], [0, 0, 1, 1], [], []>} : vector<16x32xf32>, vector<32x64xf32>, vector<16x64xf32> -> vector<16x64xf32>
    %426 = vector.broadcast %27 : vector<1x64xf32> to vector<16x64xf32>
    %427 = arith.addf %425, %426 : vector<16x64xf32>
    %c0_172 = arith.constant 0 : index
    %c0_173 = arith.constant 0 : index
    %428 = vector.load %arg36[%c0_172, %c0_173] : memref<16x64xf32, #tpu.memory_space<vmem>>, vector<16x64xf32>
    tpu.vector_store %arg36[%c0_172, %c0_173], %427 {strides = array<i32>} : memref<16x64xf32, #tpu.memory_space<vmem>>, vector<16x64xf32>,
    %c0_174 = arith.constant 0 : index
    %c0_175 = arith.constant 0 : index
    %429 = vector.load %arg37[%c0_174, %c0_175] : memref<2x8xf32, #tpu.memory_space<vmem>>, vector<2x8xf32>
    tpu.vector_store %arg37[%c0_174, %c0_175], %387 {strides = array<i32>} : memref<2x8xf32, #tpu.memory_space<vmem>>, vector<2x8xf32>,
    %c0_176 = arith.constant 0 : index
    %c0_177 = arith.constant 0 : index
    %430 = vector.load %arg38[%c0_176, %c0_177] : memref<16x1xf32, #tpu.memory_space<vmem>>, vector<16x1xf32>
    tpu.vector_store %arg38[%c0_176, %c0_177], %395 {strides = array<i32>} : memref<16x1xf32, #tpu.memory_space<vmem>>, vector<16x1xf32>,
    %c0_178 = arith.constant 0 : index
    %c0_179 = arith.constant 0 : index
    %431 = vector.load %arg39[%c0_178, %c0_179] : memref<16x8xf32, #tpu.memory_space<vmem>>, vector<16x8xf32>
    tpu.vector_store %arg39[%c0_178, %c0_179], %411 {strides = array<i32>} : memref<16x8xf32, #tpu.memory_space<vmem>>, vector<16x8xf32>,
    %c0_180 = arith.constant 0 : index
    %c0_181 = arith.constant 0 : index
    %432 = vector.load %arg40[%c0_180, %c0_181] : memref<16x16xf32, #tpu.memory_space<vmem>>, vector<16x16xf32>
    tpu.vector_store %arg40[%c0_180, %c0_181], %424 {strides = array<i32>} : memref<16x16xf32, #tpu.memory_space<vmem>>, vector<16x16xf32>,
    return
  }
}

</mosaic_0001>

<llo_original>
// kernel: _lambda_.1
$region0: #{_lambda_.1}
  #allocation0 [shape = 'u32[]', space=smem, size = 0x4, offset = 0x4, fixed_abs, tag = 'smem constant byte address 0x4 - core index']
  #allocation1 [shape = 'u32[144,128]{1,0:T(1,128)}', space=vmem, size = 0x12000, scoped, tag = 'internal scratch']
  #allocation2 [shape = 'f32[1,1]{1,0:T(1,128)S(1)}', space=vmem, size = 0x200, scoped, tag = 'scoped memory for _lambda_.1']
  %s0 = inlined_call_operand.smem [shape: u32[41], index: -1, kind: input, shape index: {}]
  %s1 = sld [smem:[%s0]]
  %s2 = scalar_lea.smem %s0, 1
  %s3 = sld [smem:[%s2]]
  %s4 = scalar_lea.smem %s0, 2
  %s5 = sld [smem:[%s4]]
  %s6 = scalar_lea.smem %s0, 3
  %s7 = sld [smem:[%s6]]
  %s8 = scalar_lea.smem %s0, 4
  %s9 = sld [smem:[%s8]]
  %s10 = scalar_lea.smem %s0, 5
  %s11 = sld [smem:[%s10]]
  %s12 = scalar_lea.smem %s0, 6
  %s13 = sld [smem:[%s12]]
  %s14 = scalar_lea.smem %s0, 7
  %s15 = sld [smem:[%s14]]
  %s16 = scalar_lea.smem %s0, 8
  %s17 = sld [smem:[%s16]]
  %s18 = scalar_lea.smem %s0, 9
  %s19 = sld [smem:[%s18]]
  %s20 = scalar_lea.smem %s0, 10
  %s21 = sld [smem:[%s20]]
  %s22 = scalar_lea.smem %s0, 11
  %s23 = sld [smem:[%s22]]
  %s24 = scalar_lea.smem %s0, 12
  %s25 = sld [smem:[%s24]]
  %s26 = scalar_lea.smem %s0, 13
  %s27 = sld [smem:[%s26]]
  %s28 = scalar_lea.smem %s0, 14
  %s29 = sld [smem:[%s28]]
  %s30 = scalar_lea.smem %s0, 15
  %s31 = sld [smem:[%s30]]
  %s32 = scalar_lea.smem %s0, 16
  %s33 = sld [smem:[%s32]]
  %s34 = scalar_lea.smem %s0, 17
  %s35 = sld [smem:[%s34]]
  %s36 = scalar_lea.smem %s0, 18
  %s37 = sld [smem:[%s36]]
  %s38 = scalar_lea.smem %s0, 19
  %s39 = sld [smem:[%s38]]
  %s40 = scalar_lea.smem %s0, 20
  %s41 = sld [smem:[%s40]]
  %s42 = scalar_lea.smem %s0, 21
  %s43 = sld [smem:[%s42]]
  %s44 = scalar_lea.smem %s0, 22
  %s45 = sld [smem:[%s44]]
  %s46 = scalar_lea.smem %s0, 23
  %s47 = sld [smem:[%s46]]
  %s48 = scalar_lea.smem %s0, 24
  %s49 = sld [smem:[%s48]]
  %s50 = scalar_lea.smem %s0, 25
  %s51 = sld [smem:[%s50]]
  %s52 = scalar_lea.smem %s0, 26
  %s53 = sld [smem:[%s52]]
  %s54 = scalar_lea.smem %s0, 27
  %s55 = sld [smem:[%s54]]
  %s56 = scalar_lea.smem %s0, 28
  %s57 = sld [smem:[%s56]]
  %s58 = scalar_lea.smem %s0, 29
  %s59 = sld [smem:[%s58]]
  %s60 = scalar_lea.smem %s0, 30
  %s61 = sld [smem:[%s60]]
  %s62 = scalar_lea.smem %s0, 31
  %s63 = sld [smem:[%s62]]
  %s64 = scalar_lea.smem %s0, 32
  %s65 = sld [smem:[%s64]]
  %s66 = scalar_lea.smem %s0, 33
  %s67 = sld [smem:[%s66]]
  %s68 = scalar_lea.smem %s0, 34
  %s69 = sld [smem:[%s68]]
  %s70 = scalar_lea.smem %s0, 35
  %s71 = sld [smem:[%s70]]
  %s72 = scalar_lea.smem %s0, 36
  %s73 = sld [smem:[%s72]]
  %s74 = scalar_lea.smem %s0, 37
  %s75 = sld [smem:[%s74]]
  %s76 = scalar_lea.smem %s0, 38
  %s77 = sld [smem:[%s76]]
  %s78 = scalar_lea.smem %s0, 39
  %s79 = sld [smem:[%s78]]
  %s80 = scalar_lea.smem %s0, 40
  %s81 = sld [smem:[%s80]]
  %82 = xla_tuple %s73, %s75, %s77, %s79, %s81
  %s83 = sld [smem:[#allocation0]]
  $region266: #{_lambda_.1} parent=0
    _
  %s85 = ssub.s32 1, %s83
  %s86 = scalar_select 0, %s85, %s83
  %v87 = vstv %s45
  %88 = vst [vmem:[#allocation2] sm:$0x1] %v87
  $region1: #{_lambda_.1} parent=0
    #allocation3 [shape = 'u8[8192]{0}', space=vmem, size = 0x2000, scoped, tag = 'input window, operand 0, single buffered']
    #allocation4 [shape = 's32[1]{0}', space=sflag, size = 0x4, scoped, tag = 'scoped memory for _lambda_.1']
    #allocation5 [shape = 's32[1]{0}', space=sflag, size = 0x4, scoped, tag = 'scoped memory for _lambda_.1']
    #allocation6 [shape = 'u8[32768]{0}', space=vmem, size = 0x8000, scoped, tag = 'input window, operand 2, single buffered']
    #allocation7 [shape = 's32[1]{0}', space=sflag, size = 0x4, scoped, tag = 'scoped memory for _lambda_.1']
    #allocation8 [shape = 'u8[32768]{0}', space=vmem, size = 0x8000, scoped, tag = 'input window, operand 3, single buffered']
    #allocation9 [shape = 'u8[16384]{0}', space=vmem, size = 0x4000, scoped, tag = 'input window, operand 6, single buffered']
    #allocation10 [shape = 's32[1]{0}', space=sflag, size = 0x4, scoped, tag = 'scoped memory for _lambda_.1']
    #allocation11 [shape = 'u8[32768]{0}', space=vmem, size = 0x8000, scoped, tag = 'input window, operand 7, single buffered']
    #allocation12 [shape = 'u8[32768]{0}', space=vmem, size = 0x8000, scoped, tag = 'input window, operand 8, single buffered']
    #allocation13 [shape = 's32[1]{0}', space=sflag, size = 0x4, scoped, tag = 'scoped memory for _lambda_.1']
    #allocation14 [shape = 'u8[32768]{0}', space=vmem, size = 0x8000, scoped, tag = 'input window, operand 9, single buffered']
    #allocation15 [shape = 'u8[32768]{0}', space=vmem, size = 0x8000, scoped, tag = 'input window, operand 10, single buffered']
    #allocation16 [shape = 's32[1]{0}', space=sflag, size = 0x4, scoped, tag = 'scoped memory for _lambda_.1']
    #allocation17 [shape = 'u8[65536]{0}', space=vmem, size = 0x10000, scoped, tag = 'input window, operand 12, single buffered']
    #allocation18 [shape = 'u8[65536]{0}', space=vmem, size = 0x10000, scoped, tag = 'input window, operand 15, single buffered']
    #allocation19 [shape = 's32[1]{0}', space=sflag, size = 0x4, scoped, tag = 'scoped memory for _lambda_.1']
    #allocation20 [shape = 'u8[32768]{0}', space=vmem, size = 0x8000, scoped, tag = 'input window, operand 16, single buffered']
    #allocation21 [shape = 'u8[32768]{0}', space=vmem, size = 0x8000, scoped, tag = 'input window, operand 17, single buffered']
    #allocation22 [shape = 's32[1]{0}', space=sflag, size = 0x4, scoped, tag = 'scoped memory for _lambda_.1']
    #allocation23 [shape = 'u8[32768]{0}', space=vmem, size = 0x8000, scoped, tag = 'input window, operand 19, single buffered']
    #allocation24 [shape = 'u8[32768]{0}', space=vmem, size = 0x8000, scoped, tag = 'input window, operand 21, single buffered']
    #allocation25 [shape = 's32[1]{0}', space=sflag, size = 0x4, scoped, tag = 'scoped memory for _lambda_.1']
    #allocation26 [shape = 'u8[32768]{0}', space=vmem, size = 0x8000, scoped, tag = 'input window, operand 24, single buffered']
    #allocation27 [shape = 'u8[16384]{0}', space=vmem, size = 0x4000, scoped, tag = 'input window, operand 26, single buffered']
    #allocation28 [shape = 's32[1]{0}', space=sflag, size = 0x4, scoped, tag = 'scoped memory for _lambda_.1']
    #allocation29 [shape = 'u8[32768]{0}', space=vmem, size = 0x8000, scoped, tag = 'input window, operand 28, single buffered']
    #allocation30 [shape = 'u8[16384]{0}', space=vmem, size = 0x4000, scoped, tag = 'input window, operand 30, single buffered']
    #allocation31 [shape = 's32[1]{0}', space=sflag, size = 0x4, scoped, tag = 'scoped memory for _lambda_.1']
    #allocation32 [shape = 'u8[49152]{0}', space=vmem, size = 0xc000, scoped, tag = 'input window, operand 32, single buffered']
    #allocation33 [shape = 'u8[16384]{0}', space=vmem, size = 0x4000, scoped, tag = 'input window, operand 34, single buffered']
    #allocation34 [shape = 's32[1]{0}', space=sflag, size = 0x4, scoped, tag = 'scoped memory for _lambda_.1']
    #allocation35 [shape = 'u8[8192]{0}', space=vmem, size = 0x2000, scoped, tag = 'output window, operand 0, single buffered']
    #allocation36 [shape = 'u8[1024]{0}', space=vmem, size = 0x400, scoped, tag = 'output window, operand 1, single buffered']
    #allocation37 [shape = 's32[1]{0}', space=sflag, size = 0x4, scoped, tag = 'scoped memory for _lambda_.1']
    #allocation38 [shape = 'u8[8192]{0}', space=vmem, size = 0x2000, scoped, tag = 'output window, operand 3, single buffered']
    #allocation39 [shape = 'u8[8192]{0}', space=vmem, size = 0x2000, scoped, tag = 'output window, operand 4, single buffered']
    #allocation40 [shape = 's32[1]{0}', space=sflag, size = 0x4, scoped, tag = 'scoped memory for _lambda_.1']
    %89 = vsyncpa [#allocation4], 0
    %90 = vsyncpa [#allocation7], 0
    %91 = vsyncpa [#allocation10], 0
    %92 = vsyncpa [#allocation13], 0
    %93 = vsyncpa [#allocation16], 0
    %94 = vsyncpa [#allocation19], 0
    %95 = vsyncpa [#allocation22], 0
    %96 = vsyncpa [#allocation25], 0
    %97 = vsyncpa [#allocation28], 0
    %98 = vsyncpa [#allocation31], 0
    %99 = vsyncpa [#allocation34], 0
    %100 = vsyncpa [#allocation5], 0
    %101 = vsyncpa [#allocation37], 0
    %102 = vsyncpa [#allocation40], 0
    // Predicated region
    $region2: #{_lambda_.1} parent=1 // pred_check
      _
    $region3: #{_lambda_.1} parent=1 // pred_check_branch
      %104 = sbr.rel (0) target = $region5
    $region4: #{_lambda_.1} parent=1 // pred_region
      %s106 = ssub.s32 256, 256
      %107 = vsyncadd [#allocation4], %s106
      %s108 = sshll.u32 [#allocation3], 4
      %s109 = int_to_ptr.vmem [resolvable:$true] %s108
      %114 = dma.hbm_to_vmem [thread:$0]  %s1, 256, %s109, [#allocation4], 128, 128, 8
    $region5: #{_lambda_.1} parent=1 // pred_fallthru
      _
    // Predicated region
    $region6: #{_lambda_.1} parent=1 // pred_check
      _
    $region7: #{_lambda_.1} parent=1 // pred_check_branch
      %116 = sbr.rel (0) target = $region9
    $region8: #{_lambda_.1} parent=1 // pred_region
      _
    $region9: #{_lambda_.1} parent=1 // pred_fallthru
      _
    // Predicated region
    $region10: #{_lambda_.1} parent=1 // pred_check
      _
    $region11: #{_lambda_.1} parent=1 // pred_check_branch
      %118 = sbr.rel (0) target = $region13
    $region12: #{_lambda_.1} parent=1 // pred_region
      %s120 = ssub.s32 1024, 1024
      %121 = vsyncadd [#allocation7], %s120
      %s122 = sshll.u32 [#allocation6], 4
      %s123 = int_to_ptr.vmem [resolvable:$true] %s122
      %128 = dma.hbm_to_vmem [thread:$0]  %s5, 1024, %s123, [#allocation7], 128, 128, 8
    $region13: #{_lambda_.1} parent=1 // pred_fallthru
      _
    // Predicated region
    $region14: #{_lambda_.1} parent=1 // pred_check
      _
    $region15: #{_lambda_.1} parent=1 // pred_check_branch
      %130 = sbr.rel (0) target = $region17
    $region16: #{_lambda_.1} parent=1 // pred_region
      %s132 = ssub.s32 1024, 1024
      %133 = vsyncadd [#allocation7], %s132
      %s134 = sshll.u32 [#allocation8], 4
      %s135 = int_to_ptr.vmem [resolvable:$true] %s134
      %140 = dma.hbm_to_vmem [thread:$0]  %s7, 1024, %s135, [#allocation7], 128, 128, 8
    $region17: #{_lambda_.1} parent=1 // pred_fallthru
      _
    // Predicated region
    $region18: #{_lambda_.1} parent=1 // pred_check
      _
    $region19: #{_lambda_.1} parent=1 // pred_check_branch
      %142 = sbr.rel (0) target = $region21
    $region20: #{_lambda_.1} parent=1 // pred_region
      _
    $region21: #{_lambda_.1} parent=1 // pred_fallthru
      _
    // Predicated region
    $region22: #{_lambda_.1} parent=1 // pred_check
      _
    $region23: #{_lambda_.1} parent=1 // pred_check_branch
      %144 = sbr.rel (0) target = $region25
    $region24: #{_lambda_.1} parent=1 // pred_region
      _
    $region25: #{_lambda_.1} parent=1 // pred_fallthru
      _
    // Predicated region
    $region26: #{_lambda_.1} parent=1 // pred_check
      _
    $region27: #{_lambda_.1} parent=1 // pred_check_branch
      %146 = sbr.rel (0) target = $region29
    $region28: #{_lambda_.1} parent=1 // pred_region
      %s148 = ssub.s32 512, 512
      %149 = vsyncadd [#allocation10], %s148
      %s150 = sshll.u32 [#allocation9], 4
      %s151 = int_to_ptr.vmem [resolvable:$true] %s150
      %156 = dma.hbm_to_vmem [thread:$0]  %s13, 512, %s151, [#allocation10], 128, 128, 8
    $region29: #{_lambda_.1} parent=1 // pred_fallthru
      _
    // Predicated region
    $region30: #{_lambda_.1} parent=1 // pred_check
      _
    $region31: #{_lambda_.1} parent=1 // pred_check_branch
      %158 = sbr.rel (0) target = $region33
    $region32: #{_lambda_.1} parent=1 // pred_region
      %s160 = ssub.s32 1024, 1024
      %161 = vsyncadd [#allocation10], %s160
      %s162 = sshll.u32 [#allocation11], 4
      %s163 = int_to_ptr.vmem [resolvable:$true] %s162
      %168 = dma.hbm_to_vmem [thread:$0]  %s15, 1024, %s163, [#allocation10], 128, 128, 8
    $region33: #{_lambda_.1} parent=1 // pred_fallthru
      _
    // Predicated region
    $region34: #{_lambda_.1} parent=1 // pred_check
      _
    $region35: #{_lambda_.1} parent=1 // pred_check_branch
      %170 = sbr.rel (0) target = $region37
    $region36: #{_lambda_.1} parent=1 // pred_region
      %s172 = ssub.s32 1024, 1024
      %173 = vsyncadd [#allocation13], %s172
      %s174 = sshll.u32 [#allocation12], 4
      %s175 = int_to_ptr.vmem [resolvable:$true] %s174
      %180 = dma.hbm_to_vmem [thread:$0]  %s17, 1024, %s175, [#allocation13], 128, 128, 8
    $region37: #{_lambda_.1} parent=1 // pred_fallthru
      _
    // Predicated region
    $region38: #{_lambda_.1} parent=1 // pred_check
      _
    $region39: #{_lambda_.1} parent=1 // pred_check_branch
      %182 = sbr.rel (0) target = $region41
    $region40: #{_lambda_.1} parent=1 // pred_region
      %s184 = ssub.s32 1024, 1024
      %185 = vsyncadd [#allocation13], %s184
      %s186 = sshll.u32 [#allocation14], 4
      %s187 = int_to_ptr.vmem [resolvable:$true] %s186
      %192 = dma.hbm_to_vmem [thread:$0]  %s19, 1024, %s187, [#allocation13], 128, 128, 8
    $region41: #{_lambda_.1} parent=1 // pred_fallthru
      _
    // Predicated region
    $region42: #{_lambda_.1} parent=1 // pred_check
      _
    $region43: #{_lambda_.1} parent=1 // pred_check_branch
      %194 = sbr.rel (0) target = $region45
    $region44: #{_lambda_.1} parent=1 // pred_region
      %s196 = ssub.s32 1024, 1024
      %197 = vsyncadd [#allocation16], %s196
      %s198 = sshll.u32 [#allocation15], 4
      %s199 = int_to_ptr.vmem [resolvable:$true] %s198
      %204 = dma.hbm_to_vmem [thread:$0]  %s21, 1024, %s199, [#allocation16], 128, 128, 8
    $region45: #{_lambda_.1} parent=1 // pred_fallthru
      _
    // Predicated region
    $region46: #{_lambda_.1} parent=1 // pred_check
      _
    $region47: #{_lambda_.1} parent=1 // pred_check_branch
      %206 = sbr.rel (0) target = $region49
    $region48: #{_lambda_.1} parent=1 // pred_region
      _
    $region49: #{_lambda_.1} parent=1 // pred_fallthru
      _
    // Predicated region
    $region50: #{_lambda_.1} parent=1 // pred_check
      _
    $region51: #{_lambda_.1} parent=1 // pred_check_branch
      %208 = sbr.rel (0) target = $region53
    $region52: #{_lambda_.1} parent=1 // pred_region
      %s210 = ssub.s32 2048, 2048
      %211 = vsyncadd [#allocation16], %s210
      %s212 = sshll.u32 [#allocation17], 4
      %s213 = int_to_ptr.vmem [resolvable:$true] %s212
      %218 = dma.hbm_to_vmem [thread:$0]  %s25, 2048, %s213, [#allocation16], 256, 256, 16
    $region53: #{_lambda_.1} parent=1 // pred_fallthru
      _
    // Predicated region
    $region54: #{_lambda_.1} parent=1 // pred_check
      _
    $region55: #{_lambda_.1} parent=1 // pred_check_branch
      %220 = sbr.rel (0) target = $region57
    $region56: #{_lambda_.1} parent=1 // pred_region
      _
    $region57: #{_lambda_.1} parent=1 // pred_fallthru
      _
    // Predicated region
    $region58: #{_lambda_.1} parent=1 // pred_check
      _
    $region59: #{_lambda_.1} parent=1 // pred_check_branch
      %222 = sbr.rel (0) target = $region61
    $region60: #{_lambda_.1} parent=1 // pred_region
      _
    $region61: #{_lambda_.1} parent=1 // pred_fallthru
      _
    // Predicated region
    $region62: #{_lambda_.1} parent=1 // pred_check
      _
    $region63: #{_lambda_.1} parent=1 // pred_check_branch
      %224 = sbr.rel (0) target = $region65
    $region64: #{_lambda_.1} parent=1 // pred_region
      %s226 = ssub.s32 2048, 2048
      %227 = vsyncadd [#allocation19], %s226
      %s228 = sshll.u32 [#allocation18], 4
      %s229 = int_to_ptr.vmem [resolvable:$true] %s228
      %234 = dma.hbm_to_vmem [thread:$0]  %s31, 2048, %s229, [#allocation19], 256, 256, 16
    $region65: #{_lambda_.1} parent=1 // pred_fallthru
      _
    // Predicated region
    $region66: #{_lambda_.1} parent=1 // pred_check
      _
    $region67: #{_lambda_.1} parent=1 // pred_check_branch
      %236 = sbr.rel (0) target = $region69
    $region68: #{_lambda_.1} parent=1 // pred_region
      %s238 = ssub.s32 1024, 1024
      %239 = vsyncadd [#allocation19], %s238
      %s240 = sshll.u32 [#allocation20], 4
      %s241 = int_to_ptr.vmem [resolvable:$true] %s240
      %246 = dma.hbm_to_vmem [thread:$0]  %s33, 1024, %s241, [#allocation19], 128, 128, 8
    $region69: #{_lambda_.1} parent=1 // pred_fallthru
      _
    // Predicated region
    $region70: #{_lambda_.1} parent=1 // pred_check
      _
    $region71: #{_lambda_.1} parent=1 // pred_check_branch
      %248 = sbr.rel (0) target = $region73
    $region72: #{_lambda_.1} parent=1 // pred_region
      %s250 = ssub.s32 1024, 1024
      %251 = vsyncadd [#allocation22], %s250
      %s252 = sshll.u32 [#allocation21], 4
      %s253 = int_to_ptr.vmem [resolvable:$true] %s252
      %258 = dma.hbm_to_vmem [thread:$0]  %s35, 1024, %s253, [#allocation22], 128, 128, 8
    $region73: #{_lambda_.1} parent=1 // pred_fallthru
      _
    // Predicated region
    $region74: #{_lambda_.1} parent=1 // pred_check
      _
    $region75: #{_lambda_.1} parent=1 // pred_check_branch
      %260 = sbr.rel (0) target = $region77
    $region76: #{_lambda_.1} parent=1 // pred_region
      _
    $region77: #{_lambda_.1} parent=1 // pred_fallthru
      _
    // Predicated region
    $region78: #{_lambda_.1} parent=1 // pred_check
      _
    $region79: #{_lambda_.1} parent=1 // pred_check_branch
      %262 = sbr.rel (0) target = $region81
    $region80: #{_lambda_.1} parent=1 // pred_region
      %s264 = ssub.s32 1024, 1024
      %265 = vsyncadd [#allocation22], %s264
      %s266 = sshll.u32 [#allocation23], 4
      %s267 = int_to_ptr.vmem [resolvable:$true] %s266
      %272 = dma.hbm_to_vmem [thread:$0]  %s39, 1024, %s267, [#allocation22], 128, 128, 8
    $region81: #{_lambda_.1} parent=1 // pred_fallthru
      _
    // Predicated region
    $region82: #{_lambda_.1} parent=1 // pred_check
      _
    $region83: #{_lambda_.1} parent=1 // pred_check_branch
      %274 = sbr.rel (0) target = $region85
    $region84: #{_lambda_.1} parent=1 // pred_region
      _
    $region85: #{_lambda_.1} parent=1 // pred_fallthru
      _
    // Predicated region
    $region86: #{_lambda_.1} parent=1 // pred_check
      _
    $region87: #{_lambda_.1} parent=1 // pred_check_branch
      %276 = sbr.rel (0) target = $region89
    $region88: #{_lambda_.1} parent=1 // pred_region
      %s278 = ssub.s32 1024, 1024
      %279 = vsyncadd [#allocation25], %s278
      %s280 = sshll.u32 [#allocation24], 4
      %s281 = int_to_ptr.vmem [resolvable:$true] %s280
      %286 = dma.hbm_to_vmem [thread:$0]  %s43, 1024, %s281, [#allocation25], 128, 128, 8
    $region89: #{_lambda_.1} parent=1 // pred_fallthru
      _
    // Predicated region
    $region90: #{_lambda_.1} parent=1 // pred_check
      _
    $region91: #{_lambda_.1} parent=1 // pred_check_branch
      %288 = sbr.rel (0) target = $region93
    $region92: #{_lambda_.1} parent=1 // pred_region
      _
    $region93: #{_lambda_.1} parent=1 // pred_fallthru
      _
    // Predicated region
    $region94: #{_lambda_.1} parent=1 // pred_check
      _
    $region95: #{_lambda_.1} parent=1 // pred_check_branch
      %290 = sbr.rel (0) target = $region97
    $region96: #{_lambda_.1} parent=1 // pred_region
      _
    $region97: #{_lambda_.1} parent=1 // pred_fallthru
      _
    // Predicated region
    $region98: #{_lambda_.1} parent=1 // pred_check
      _
    $region99: #{_lambda_.1} parent=1 // pred_check_branch
      %292 = sbr.rel (0) target = $region101
    $region100: #{_lambda_.1} parent=1 // pred_region
      %s294 = ssub.s32 1024, 1024
      %295 = vsyncadd [#allocation25], %s294
      %s296 = sshll.u32 [#allocation26], 4
      %s297 = int_to_ptr.vmem [resolvable:$true] %s296
      %302 = dma.hbm_to_vmem [thread:$0]  %s49, 1024, %s297, [#allocation25], 128, 128, 8
    $region101: #{_lambda_.1} parent=1 // pred_fallthru
      _
    // Predicated region
    $region102: #{_lambda_.1} parent=1 // pred_check
      _
    $region103: #{_lambda_.1} parent=1 // pred_check_branch
      %304 = sbr.rel (0) target = $region105
    $region104: #{_lambda_.1} parent=1 // pred_region
      _
    $region105: #{_lambda_.1} parent=1 // pred_fallthru
      _
    // Predicated region
    $region106: #{_lambda_.1} parent=1 // pred_check
      _
    $region107: #{_lambda_.1} parent=1 // pred_check_branch
      %306 = sbr.rel (0) target = $region109
    $region108: #{_lambda_.1} parent=1 // pred_region
      %s308 = ssub.s32 512, 512
      %309 = vsyncadd [#allocation28], %s308
      %s310 = sshll.u32 [#allocation27], 4
      %s311 = int_to_ptr.vmem [resolvable:$true] %s310
      %316 = dma.hbm_to_vmem [thread:$0]  %s53, 512, %s311, [#allocation28], 128, 128, 8
    $region109: #{_lambda_.1} parent=1 // pred_fallthru
      _
    // Predicated region
    $region110: #{_lambda_.1} parent=1 // pred_check
      _
    $region111: #{_lambda_.1} parent=1 // pred_check_branch
      %318 = sbr.rel (0) target = $region113
    $region112: #{_lambda_.1} parent=1 // pred_region
      _
    $region113: #{_lambda_.1} parent=1 // pred_fallthru
      _
    // Predicated region
    $region114: #{_lambda_.1} parent=1 // pred_check
      _
    $region115: #{_lambda_.1} parent=1 // pred_check_branch
      %320 = sbr.rel (0) target = $region117
    $region116: #{_lambda_.1} parent=1 // pred_region
      %s322 = ssub.s32 1024, 1024
      %323 = vsyncadd [#allocation28], %s322
      %s324 = sshll.u32 [#allocation29], 4
      %s325 = int_to_ptr.vmem [resolvable:$true] %s324
      %330 = dma.hbm_to_vmem [thread:$0]  %s57, 1024, %s325, [#allocation28], 128, 128, 8
    $region117: #{_lambda_.1} parent=1 // pred_fallthru
      _
    // Predicated region
    $region118: #{_lambda_.1} parent=1 // pred_check
      _
    $region119: #{_lambda_.1} parent=1 // pred_check_branch
      %332 = sbr.rel (0) target = $region121
    $region120: #{_lambda_.1} parent=1 // pred_region
      _
    $region121: #{_lambda_.1} parent=1 // pred_fallthru
      _
    // Predicated region
    $region122: #{_lambda_.1} parent=1 // pred_check
      _
    $region123: #{_lambda_.1} parent=1 // pred_check_branch
      %334 = sbr.rel (0) target = $region125
    $region124: #{_lambda_.1} parent=1 // pred_region
      %s336 = ssub.s32 512, 512
      %337 = vsyncadd [#allocation31], %s336
      %s338 = sshll.u32 [#allocation30], 4
      %s339 = int_to_ptr.vmem [resolvable:$true] %s338
      %344 = dma.hbm_to_vmem [thread:$0]  %s61, 512, %s339, [#allocation31], 128, 128, 8
    $region125: #{_lambda_.1} parent=1 // pred_fallthru
      _
    // Predicated region
    $region126: #{_lambda_.1} parent=1 // pred_check
      _
    $region127: #{_lambda_.1} parent=1 // pred_check_branch
      %346 = sbr.rel (0) target = $region129
    $region128: #{_lambda_.1} parent=1 // pred_region
      _
    $region129: #{_lambda_.1} parent=1 // pred_fallthru
      _
    // Predicated region
    $region130: #{_lambda_.1} parent=1 // pred_check
      _
    $region131: #{_lambda_.1} parent=1 // pred_check_branch
      %348 = sbr.rel (0) target = $region133
    $region132: #{_lambda_.1} parent=1 // pred_region
      %s350 = ssub.s32 1536, 1536
      %351 = vsyncadd [#allocation31], %s350
      %s352 = sshll.u32 [#allocation32], 4
      %s353 = int_to_ptr.vmem [resolvable:$true] %s352
      %358 = dma.hbm_to_vmem [thread:$0]  %s65, 1536, %s353, [#allocation31], 128, 128, 8
    $region133: #{_lambda_.1} parent=1 // pred_fallthru
      _
    // Predicated region
    $region134: #{_lambda_.1} parent=1 // pred_check
      _
    $region135: #{_lambda_.1} parent=1 // pred_check_branch
      %360 = sbr.rel (0) target = $region137
    $region136: #{_lambda_.1} parent=1 // pred_region
      _
    $region137: #{_lambda_.1} parent=1 // pred_fallthru
      _
    // Predicated region
    $region138: #{_lambda_.1} parent=1 // pred_check
      _
    $region139: #{_lambda_.1} parent=1 // pred_check_branch
      %362 = sbr.rel (0) target = $region141
    $region140: #{_lambda_.1} parent=1 // pred_region
      %s364 = ssub.s32 512, 512
      %365 = vsyncadd [#allocation34], %s364
      %s366 = sshll.u32 [#allocation33], 4
      %s367 = int_to_ptr.vmem [resolvable:$true] %s366
      %372 = dma.hbm_to_vmem [thread:$0]  %s69, 512, %s367, [#allocation34], 128, 128, 8
    $region141: #{_lambda_.1} parent=1 // pred_fallthru
      _
    // Predicated region
    $region142: #{_lambda_.1} parent=1 // pred_check
      _
    $region143: #{_lambda_.1} parent=1 // pred_check_branch
      %374 = sbr.rel (0) target = $region145
    $region144: #{_lambda_.1} parent=1 // pred_region
      _
    $region145: #{_lambda_.1} parent=1 // pred_fallthru
      _
    // Predicated region
    $region146: #{_lambda_.1} parent=1 // pred_check
      _
    $region147: #{_lambda_.1} parent=1 // pred_check_branch
      %376 = sbr.rel (0) target = $region149
    $region148: #{_lambda_.1} parent=1 // pred_region
      %377 = dma.done [#allocation4], 256
    $region149: #{_lambda_.1} parent=1 // pred_fallthru
      _
    // Predicated region
    $region150: #{_lambda_.1} parent=1 // pred_check
      _
    $region151: #{_lambda_.1} parent=1 // pred_check_branch
      %379 = sbr.rel (0) target = $region153
    $region152: #{_lambda_.1} parent=1 // pred_region
      %380 = dma.done [#allocation7], 1024
    $region153: #{_lambda_.1} parent=1 // pred_fallthru
      _
    // Predicated region
    $region154: #{_lambda_.1} parent=1 // pred_check
      _
    $region155: #{_lambda_.1} parent=1 // pred_check_branch
      %382 = sbr.rel (0) target = $region157
    $region156: #{_lambda_.1} parent=1 // pred_region
      %383 = dma.done [#allocation7], 1024
    $region157: #{_lambda_.1} parent=1 // pred_fallthru
      _
    // Predicated region
    $region158: #{_lambda_.1} parent=1 // pred_check
      _
    $region159: #{_lambda_.1} parent=1 // pred_check_branch
      %385 = sbr.rel (0) target = $region161
    $region160: #{_lambda_.1} parent=1 // pred_region
      %386 = dma.done [#allocation10], 512
    $region161: #{_lambda_.1} parent=1 // pred_fallthru
      _
    // Predicated region
    $region162: #{_lambda_.1} parent=1 // pred_check
      _
    $region163: #{_lambda_.1} parent=1 // pred_check_branch
      %388 = sbr.rel (0) target = $region165
    $region164: #{_lambda_.1} parent=1 // pred_region
      %389 = dma.done [#allocation10], 1024
    $region165: #{_lambda_.1} parent=1 // pred_fallthru
      _
    // Predicated region
    $region166: #{_lambda_.1} parent=1 // pred_check
      _
    $region167: #{_lambda_.1} parent=1 // pred_check_branch
      %391 = sbr.rel (0) target = $region169
    $region168: #{_lambda_.1} parent=1 // pred_region
      %392 = dma.done [#allocation13], 1024
    $region169: #{_lambda_.1} parent=1 // pred_fallthru
      _
    // Predicated region
    $region170: #{_lambda_.1} parent=1 // pred_check
      _
    $region171: #{_lambda_.1} parent=1 // pred_check_branch
      %394 = sbr.rel (0) target = $region173
    $region172: #{_lambda_.1} parent=1 // pred_region
      %395 = dma.done [#allocation13], 1024
    $region173: #{_lambda_.1} parent=1 // pred_fallthru
      _
    // Predicated region
    $region174: #{_lambda_.1} parent=1 // pred_check
      _
    $region175: #{_lambda_.1} parent=1 // pred_check_branch
      %397 = sbr.rel (0) target = $region177
    $region176: #{_lambda_.1} parent=1 // pred_region
      %398 = dma.done [#allocation16], 1024
    $region177: #{_lambda_.1} parent=1 // pred_fallthru
      _
    // Predicated region
    $region178: #{_lambda_.1} parent=1 // pred_check
      _
    $region179: #{_lambda_.1} parent=1 // pred_check_branch
      %400 = sbr.rel (0) target = $region181
    $region180: #{_lambda_.1} parent=1 // pred_region
      %401 = dma.done [#allocation16], 2048
    $region181: #{_lambda_.1} parent=1 // pred_fallthru
      _
    // Predicated region
    $region182: #{_lambda_.1} parent=1 // pred_check
      _
    $region183: #{_lambda_.1} parent=1 // pred_check_branch
      %403 = sbr.rel (0) target = $region185
    $region184: #{_lambda_.1} parent=1 // pred_region
      %404 = dma.done [#allocation19], 2048
    $region185: #{_lambda_.1} parent=1 // pred_fallthru
      _
    // Predicated region
    $region186: #{_lambda_.1} parent=1 // pred_check
      _
    $region187: #{_lambda_.1} parent=1 // pred_check_branch
      %406 = sbr.rel (0) target = $region189
    $region188: #{_lambda_.1} parent=1 // pred_region
      %407 = dma.done [#allocation19], 1024
    $region189: #{_lambda_.1} parent=1 // pred_fallthru
      _
    // Predicated region
    $region190: #{_lambda_.1} parent=1 // pred_check
      _
    $region191: #{_lambda_.1} parent=1 // pred_check_branch
      %409 = sbr.rel (0) target = $region193
    $region192: #{_lambda_.1} parent=1 // pred_region
      %410 = dma.done [#allocation22], 1024
    $region193: #{_lambda_.1} parent=1 // pred_fallthru
      _
    // Predicated region
    $region194: #{_lambda_.1} parent=1 // pred_check
      _
    $region195: #{_lambda_.1} parent=1 // pred_check_branch
      %412 = sbr.rel (0) target = $region197
    $region196: #{_lambda_.1} parent=1 // pred_region
      %413 = dma.done [#allocation22], 1024
    $region197: #{_lambda_.1} parent=1 // pred_fallthru
      _
    // Predicated region
    $region198: #{_lambda_.1} parent=1 // pred_check
      _
    $region199: #{_lambda_.1} parent=1 // pred_check_branch
      %415 = sbr.rel (0) target = $region201
    $region200: #{_lambda_.1} parent=1 // pred_region
      %416 = dma.done [#allocation25], 1024
    $region201: #{_lambda_.1} parent=1 // pred_fallthru
      _
    // Predicated region
    $region202: #{_lambda_.1} parent=1 // pred_check
      _
    $region203: #{_lambda_.1} parent=1 // pred_check_branch
      %418 = sbr.rel (0) target = $region205
    $region204: #{_lambda_.1} parent=1 // pred_region
      %419 = dma.done [#allocation25], 1024
    $region205: #{_lambda_.1} parent=1 // pred_fallthru
      _
    // Predicated region
    $region206: #{_lambda_.1} parent=1 // pred_check
      _
    $region207: #{_lambda_.1} parent=1 // pred_check_branch
      %421 = sbr.rel (0) target = $region209
    $region208: #{_lambda_.1} parent=1 // pred_region
      %422 = dma.done [#allocation28], 512
    $region209: #{_lambda_.1} parent=1 // pred_fallthru
      _
    // Predicated region
    $region210: #{_lambda_.1} parent=1 // pred_check
      _
    $region211: #{_lambda_.1} parent=1 // pred_check_branch
      %424 = sbr.rel (0) target = $region213
    $region212: #{_lambda_.1} parent=1 // pred_region
      %425 = dma.done [#allocation28], 1024
    $region213: #{_lambda_.1} parent=1 // pred_fallthru
      _
    // Predicated region
    $region214: #{_lambda_.1} parent=1 // pred_check
      _
    $region215: #{_lambda_.1} parent=1 // pred_check_branch
      %427 = sbr.rel (0) target = $region217
    $region216: #{_lambda_.1} parent=1 // pred_region
      %428 = dma.done [#allocation31], 512
    $region217: #{_lambda_.1} parent=1 // pred_fallthru
      _
    // Predicated region
    $region218: #{_lambda_.1} parent=1 // pred_check
      _
    $region219: #{_lambda_.1} parent=1 // pred_check_branch
      %430 = sbr.rel (0) target = $region221
    $region220: #{_lambda_.1} parent=1 // pred_region
      %431 = dma.done [#allocation31], 1536
    $region221: #{_lambda_.1} parent=1 // pred_fallthru
      _
    // Predicated region
    $region222: #{_lambda_.1} parent=1 // pred_check
      _
    $region223: #{_lambda_.1} parent=1 // pred_check_branch
      %433 = sbr.rel (0) target = $region225
    $region224: #{_lambda_.1} parent=1 // pred_region
      %434 = dma.done [#allocation34], 512
    $region225: #{_lambda_.1} parent=1 // pred_fallthru
      _
    %v435 = vld [vmem:[#allocation3] sm:$0xff]
    %v436 = vld [vmem:[#allocation3 + $0x8] sm:$0xff]
    %v437 = vld [vmem:[%s3] sm:$0x1]
    %v438 = vld [vmem:[#allocation6] sm:$0xff]
    %v439 = vld [vmem:[#allocation6 + $0x8] sm:$0xff]
    %v440 = vld [vmem:[#allocation6 + $0x10] sm:$0xff]
    %v441 = vld [vmem:[#allocation6 + $0x18] sm:$0xff]
    %v442 = vld [vmem:[#allocation6 + $0x20] sm:$0xff]
    %v443 = vld [vmem:[#allocation6 + $0x28] sm:$0xff]
    %v444 = vld [vmem:[#allocation6 + $0x30] sm:$0xff]
    %v445 = vld [vmem:[#allocation6 + $0x38] sm:$0xff]
    %v446 = vld [vmem:[#allocation8] sm:$0xff]
    %v447 = vld [vmem:[#allocation8 + $0x8] sm:$0xff]
    %v448 = vld [vmem:[#allocation8 + $0x10] sm:$0xff]
    %v449 = vld [vmem:[#allocation8 + $0x18] sm:$0xff]
    %v450 = vld [vmem:[#allocation8 + $0x20] sm:$0xff]
    %v451 = vld [vmem:[#allocation8 + $0x28] sm:$0xff]
    %v452 = vld [vmem:[#allocation8 + $0x30] sm:$0xff]
    %v453 = vld [vmem:[#allocation8 + $0x38] sm:$0xff]
    %v454 = vld [vmem:[%s9] sm:$0xff]
    %v455 = vld [vmem:[%s9 + $0x8] sm:$0xff]
    %v456 = vld [vmem:[%s11] sm:$0xff]
    %v457 = vld [vmem:[%s11 + $0x8] sm:$0xff]
    %v458 = vld [vmem:[#allocation9] sm:$0xff]
    %v459 = vld [vmem:[#allocation9 + $0x8] sm:$0xff]
    %v460 = vld [vmem:[#allocation9 + $0x10] sm:$0xff]
    %v461 = vld [vmem:[#allocation9 + $0x18] sm:$0xff]
    %v462 = vld [vmem:[#allocation11] sm:$0xff]
    %v463 = vld [vmem:[#allocation11 + $0x8] sm:$0xff]
    %v464 = vld [vmem:[#allocation11 + $0x10] sm:$0xff]
    %v465 = vld [vmem:[#allocation11 + $0x18] sm:$0xff]
    %v466 = vld [vmem:[#allocation11 + $0x20] sm:$0xff]
    %v467 = vld [vmem:[#allocation11 + $0x28] sm:$0xff]
    %v468 = vld [vmem:[#allocation11 + $0x30] sm:$0xff]
    %v469 = vld [vmem:[#allocation11 + $0x38] sm:$0xff]
    %v470 = vld [vmem:[#allocation12] sm:$0xff]
    %v471 = vld [vmem:[#allocation12 + $0x8] sm:$0xff]
    %v472 = vld [vmem:[#allocation12 + $0x10] sm:$0xff]
    %v473 = vld [vmem:[#allocation12 + $0x18] sm:$0xff]
    %v474 = vld [vmem:[#allocation12 + $0x20] sm:$0xff]
    %v475 = vld [vmem:[#allocation12 + $0x28] sm:$0xff]
    %v476 = vld [vmem:[#allocation12 + $0x30] sm:$0xff]
    %v477 = vld [vmem:[#allocation12 + $0x38] sm:$0xff]
    %v478 = vld [vmem:[#allocation14] sm:$0xff]
    %v479 = vld [vmem:[#allocation14 + $0x8] sm:$0xff]
    %v480 = vld [vmem:[#allocation14 + $0x10] sm:$0xff]
    %v481 = vld [vmem:[#allocation14 + $0x18] sm:$0xff]
    %v482 = vld [vmem:[#allocation14 + $0x20] sm:$0xff]
    %v483 = vld [vmem:[#allocation14 + $0x28] sm:$0xff]
    %v484 = vld [vmem:[#allocation14 + $0x30] sm:$0xff]
    %v485 = vld [vmem:[#allocation14 + $0x38] sm:$0xff]
    %v486 = vld [vmem:[#allocation15] sm:$0xff]
    %v487 = vld [vmem:[#allocation15 + $0x8] sm:$0xff]
    %v488 = vld [vmem:[#allocation15 + $0x10] sm:$0xff]
    %v489 = vld [vmem:[#allocation15 + $0x18] sm:$0xff]
    %v490 = vld [vmem:[#allocation15 + $0x20] sm:$0xff]
    %v491 = vld [vmem:[#allocation15 + $0x28] sm:$0xff]
    %v492 = vld [vmem:[#allocation15 + $0x30] sm:$0xff]
    %v493 = vld [vmem:[#allocation15 + $0x38] sm:$0xff]
    %v494 = vld [vmem:[%s23] sm:$0x1]
    %v495 = vld [vmem:[#allocation17] sm:$0xff]
    %v496 = vld [vmem:[#allocation17 + $0x8] sm:$0xff]
    %v497 = vld [vmem:[#allocation17 + $0x10] sm:$0xff]
    %v498 = vld [vmem:[#allocation17 + $0x18] sm:$0xff]
    %v499 = vld [vmem:[#allocation17 + $0x20] sm:$0xff]
    %v500 = vld [vmem:[#allocation17 + $0x28] sm:$0xff]
    %v501 = vld [vmem:[#allocation17 + $0x30] sm:$0xff]
    %v502 = vld [vmem:[#allocation17 + $0x38] sm:$0xff]
    %v503 = vld [vmem:[#allocation17 + $0x40] sm:$0xff]
    %v504 = vld [vmem:[#allocation17 + $0x48] sm:$0xff]
    %v505 = vld [vmem:[#allocation17 + $0x50] sm:$0xff]
    %v506 = vld [vmem:[#allocation17 + $0x58] sm:$0xff]
    %v507 = vld [vmem:[#allocation17 + $0x60] sm:$0xff]
    %v508 = vld [vmem:[#allocation17 + $0x68] sm:$0xff]
    %v509 = vld [vmem:[#allocation17 + $0x70] sm:$0xff]
    %v510 = vld [vmem:[#allocation17 + $0x78] sm:$0xff]
    %v511 = vld [vmem:[%s27] sm:$0xff]
    %v512 = vld [vmem:[%s27 + $0x8] sm:$0xff]
    %v513 = vld [vmem:[%s27 + $0x10] sm:$0xff]
    %v514 = vld [vmem:[%s27 + $0x18] sm:$0xff]
    %v515 = vld [vmem:[%s27 + $0x20] sm:$0xff]
    %v516 = vld [vmem:[%s27 + $0x28] sm:$0xff]
    %v517 = vld [vmem:[%s27 + $0x30] sm:$0xff]
    %v518 = vld [vmem:[%s27 + $0x38] sm:$0xff]
    %v519 = vld [vmem:[%s27 + $0x40] sm:$0xff]
    %v520 = vld [vmem:[%s27 + $0x48] sm:$0xff]
    %v521 = vld [vmem:[%s27 + $0x50] sm:$0xff]
    %v522 = vld [vmem:[%s27 + $0x58] sm:$0xff]
    %v523 = vld [vmem:[%s27 + $0x60] sm:$0xff]
    %v524 = vld [vmem:[%s27 + $0x68] sm:$0xff]
    %v525 = vld [vmem:[%s27 + $0x70] sm:$0xff]
    %v526 = vld [vmem:[%s27 + $0x78] sm:$0xff]
    %v527 = vld [vmem:[%s29] sm:$0x1]
    %v528 = vld [vmem:[#allocation18] sm:$0xff]
    %v529 = vld [vmem:[#allocation18 + $0x8] sm:$0xff]
    %v530 = vld [vmem:[#allocation18 + $0x10] sm:$0xff]
    %v531 = vld [vmem:[#allocation18 + $0x18] sm:$0xff]
    %v532 = vld [vmem:[#allocation18 + $0x20] sm:$0xff]
    %v533 = vld [vmem:[#allocation18 + $0x28] sm:$0xff]
    %v534 = vld [vmem:[#allocation18 + $0x30] sm:$0xff]
    %v535 = vld [vmem:[#allocation18 + $0x38] sm:$0xff]
    %v536 = vld [vmem:[#allocation18 + $0x40] sm:$0xff]
    %v537 = vld [vmem:[#allocation18 + $0x48] sm:$0xff]
    %v538 = vld [vmem:[#allocation18 + $0x50] sm:$0xff]
    %v539 = vld [vmem:[#allocation18 + $0x58] sm:$0xff]
    %v540 = vld [vmem:[#allocation18 + $0x60] sm:$0xff]
    %v541 = vld [vmem:[#allocation18 + $0x68] sm:$0xff]
    %v542 = vld [vmem:[#allocation18 + $0x70] sm:$0xff]
    %v543 = vld [vmem:[#allocation18 + $0x78] sm:$0xff]
    %v544 = vld [vmem:[#allocation20] sm:$0xff]
    %v545 = vld [vmem:[#allocation20 + $0x8] sm:$0xff]
    %v546 = vld [vmem:[#allocation20 + $0x10] sm:$0xff]
    %v547 = vld [vmem:[#allocation20 + $0x18] sm:$0xff]
    %v548 = vld [vmem:[#allocation20 + $0x20] sm:$0xff]
    %v549 = vld [vmem:[#allocation20 + $0x28] sm:$0xff]
    %v550 = vld [vmem:[#allocation20 + $0x30] sm:$0xff]
    %v551 = vld [vmem:[#allocation20 + $0x38] sm:$0xff]
    %v552 = vld [vmem:[#allocation21] sm:$0xff]
    %v553 = vld [vmem:[#allocation21 + $0x8] sm:$0xff]
    %v554 = vld [vmem:[#allocation21 + $0x10] sm:$0xff]
    %v555 = vld [vmem:[#allocation21 + $0x18] sm:$0xff]
    %v556 = vld [vmem:[#allocation21 + $0x20] sm:$0xff]
    %v557 = vld [vmem:[#allocation21 + $0x28] sm:$0xff]
    %v558 = vld [vmem:[#allocation21 + $0x30] sm:$0xff]
    %v559 = vld [vmem:[#allocation21 + $0x38] sm:$0xff]
    %v560 = vld [vmem:[%s37] sm:$0x1]
    %v561 = vld [vmem:[#allocation23] sm:$0xff]
    %v562 = vld [vmem:[#allocation23 + $0x8] sm:$0xff]
    %v563 = vld [vmem:[#allocation23 + $0x10] sm:$0xff]
    %v564 = vld [vmem:[#allocation23 + $0x18] sm:$0xff]
    %v565 = vld [vmem:[#allocation23 + $0x20] sm:$0xff]
    %v566 = vld [vmem:[#allocation23 + $0x28] sm:$0xff]
    %v567 = vld [vmem:[#allocation23 + $0x30] sm:$0xff]
    %v568 = vld [vmem:[#allocation23 + $0x38] sm:$0xff]
    %v569 = vld [vmem:[%s41] sm:$0x1]
    %v570 = vld [vmem:[#allocation24] sm:$0xff]
    %v571 = vld [vmem:[#allocation24 + $0x8] sm:$0xff]
    %v572 = vld [vmem:[#allocation24 + $0x10] sm:$0xff]
    %v573 = vld [vmem:[#allocation24 + $0x18] sm:$0xff]
    %v574 = vld [vmem:[#allocation24 + $0x20] sm:$0xff]
    %v575 = vld [vmem:[#allocation24 + $0x28] sm:$0xff]
    %v576 = vld [vmem:[#allocation24 + $0x30] sm:$0xff]
    %v577 = vld [vmem:[#allocation24 + $0x38] sm:$0xff]
    %v578 = vld [vmem:[#allocation2] sm:$0x1]
    %v579 = vld [vmem:[%s47] sm:$0x1]
    %v580 = vld [vmem:[#allocation26] sm:$0xff]
    %v581 = vld [vmem:[#allocation26 + $0x8] sm:$0xff]
    %v582 = vld [vmem:[#allocation26 + $0x10] sm:$0xff]
    %v583 = vld [vmem:[#allocation26 + $0x18] sm:$0xff]
    %v584 = vld [vmem:[#allocation26 + $0x20] sm:$0xff]
    %v585 = vld [vmem:[#allocation26 + $0x28] sm:$0xff]
    %v586 = vld [vmem:[#allocation26 + $0x30] sm:$0xff]
    %v587 = vld [vmem:[#allocation26 + $0x38] sm:$0xff]
    %v588 = vld [vmem:[%s51] sm:$0x1]
    %v589 = vld [vmem:[#allocation27] sm:$0xff]
    %v590 = vld [vmem:[#allocation27 + $0x8] sm:$0xff]
    %v591 = vld [vmem:[#allocation27 + $0x10] sm:$0xff]
    %v592 = vld [vmem:[#allocation27 + $0x18] sm:$0xff]
    %v593 = vld [vmem:[%s55] sm:$0x1]
    %v594 = vld [vmem:[#allocation29] sm:$0xff]
    %v595 = vld [vmem:[#allocation29 + $0x8] sm:$0xff]
    %v596 = vld [vmem:[#allocation29 + $0x10] sm:$0xff]
    %v597 = vld [vmem:[#allocation29 + $0x18] sm:$0xff]
    %v598 = vld [vmem:[#allocation29 + $0x20] sm:$0xff]
    %v599 = vld [vmem:[#allocation29 + $0x28] sm:$0xff]
    %v600 = vld [vmem:[#allocation29 + $0x30] sm:$0xff]
    %v601 = vld [vmem:[#allocation29 + $0x38] sm:$0xff]
    %v602 = vld [vmem:[%s59] sm:$0x1]
    %v603 = vld [vmem:[#allocation30] sm:$0xff]
    %v604 = vld [vmem:[#allocation30 + $0x8] sm:$0xff]
    %v605 = vld [vmem:[#allocation30 + $0x10] sm:$0xff]
    %v606 = vld [vmem:[#allocation30 + $0x18] sm:$0xff]
    %v607 = vld [vmem:[%s63] sm:$0x1]
    %v608 = vld [vmem:[#allocation32] sm:$0xff]
    %v609 = vld [vmem:[#allocation32 + $0x8] sm:$0xff]
    %v610 = vld [vmem:[#allocation32 + $0x10] sm:$0xff]
    %v611 = vld [vmem:[#allocation32 + $0x18] sm:$0xff]
    %v612 = vld [vmem:[#allocation32 + $0x20] sm:$0xff]
    %v613 = vld [vmem:[#allocation32 + $0x28] sm:$0xff]
    %v614 = vld [vmem:[#allocation32 + $0x30] sm:$0xff]
    %v615 = vld [vmem:[#allocation32 + $0x38] sm:$0xff]
    %v616 = vld [vmem:[#allocation32 + $0x40] sm:$0xff]
    %v617 = vld [vmem:[#allocation32 + $0x48] sm:$0xff]
    %v618 = vld [vmem:[#allocation32 + $0x50] sm:$0xff]
    %v619 = vld [vmem:[#allocation32 + $0x58] sm:$0xff]
    %v620 = vld [vmem:[%s67] sm:$0x1]
    %v621 = vld [vmem:[#allocation33] sm:$0xff]
    %v622 = vld [vmem:[#allocation33 + $0x8] sm:$0xff]
    %v623 = vld [vmem:[#allocation33 + $0x10] sm:$0xff]
    %v624 = vld [vmem:[#allocation33 + $0x18] sm:$0xff]
    %v625 = vld [vmem:[%s71] sm:$0x1]
    %v626 = vmul.f32 %v435, %v435
    %v627 = vmul.f32 %v436, %v436
    %vm628 = vcmask 523264
    %v629 = vsel %vm628, %v626, 0.0
    %630 = vadd.xlane.f32.xlu0 %v629
    %v631 = vpop.xlane.xlu0 %630
    %v632 = vsel %vm628, %v627, 0.0
    %633 = vadd.xlane.f32.xlu0 %v632
    %v634 = vpop.xlane.xlu0 %633
    %v635 = vrcp.pop 64.0
    %v636 = vmul.f32 %v631, %v635
    %v637 = vmul.f32 %v634, %v635
    %v638 = vadd.f32 %v636, 1e-06
    %v639 = vadd.f32 %v637, 1e-06
    %v640 = vrsqrt.pop %v638
    %v641 = vrsqrt.pop %v639
    %v642 = vmul.f32 %v435, %v640
    %v643 = vmul.f32 %v436, %v641
    %v645 = vlaneseq
    %v646 = vshrl.u32 %v645, 7
    %v647 = vsub.s32 0, %v646
    %v648 = vrot.slane %v437, %v647
    %v650 = vmul.f32 %v642, %v648
    %v651 = vmul.f32 %v643, %v648
    %v653 = vsel %vm628, %v650, 0
    %v656 = vsel %vm628, %v651, 0
    %658 = vmatprep.subr.mxu0 0.0
    %659 = vmatpush1.msra.mxu0 0.0
    %660 = vmatprep.subr.mxu0 0.0
    %661 = vmatpush1.msra.mxu0 0.0
    %662 = vmatprep.subr.mxu0 0.0
    %663 = vmatpush1.msra.mxu0 0.0
    %664 = vmatprep.subr.mxu0 0.0
    %665 = vmatpush1.msra.mxu0 0.0
    %666 = vmatprep.subr.mxu0 0.0
    %667 = vmatpush1.msra.mxu0 0.0
    %668 = vmatprep.subr.mxu0 0.0
    %669 = vmatpush1.msra.mxu0 0.0
    %670 = vmatprep.subr.mxu0 0.0
    %671 = vmatpush1.msra.mxu0 0.0
    %672 = vmatprep.subr.mxu0 0.0
    %673 = vmatpush1.msra.mxu0 0.0
    %674 = vmatprep.subr.mxu0 0.0
    %675 = vmatpush1.msra.mxu0 %v445
    %676 = vmatprep.subr.mxu0 0.0
    %677 = vmatpush1.msra.mxu0 %v444
    %678 = vmatprep.subr.mxu0 0.0
    %679 = vmatpush1.msra.mxu0 %v443
    %680 = vmatprep.subr.mxu0 0.0
    %681 = vmatpush1.msra.mxu0 %v442
    %682 = vmatprep.subr.mxu0 0.0
    %683 = vmatpush1.msra.mxu0 %v441
    %684 = vmatprep.subr.mxu0 0.0
    %685 = vmatpush1.msra.mxu0 %v440
    %686 = vmatprep.subr.mxu0 0.0
    %687 = vmatpush1.msra.mxu0 %v439
    %688 = vmatprep.subr.mxu0 0.0
    %689 = vmatpush1.msra.mxu0 %v438
    %690 = vmatprep.subr.mxu0 0.0
    %691 = vmatpush2.msra.mxu0 0.0
    %692 = vmatprep.subr.mxu0 0.0
    %693 = vmatpush2.msra.mxu0 0.0
    %694 = vmatprep.subr.mxu0 0.0
    %695 = vmatpush2.msra.mxu0 0.0
    %696 = vmatprep.subr.mxu0 0.0
    %697 = vmatpush2.msra.mxu0 0.0
    %698 = vmatprep.subr.mxu0 0.0
    %699 = vmatpush2.msra.mxu0 0.0
    %700 = vmatprep.subr.mxu0 0.0
    %701 = vmatpush2.msra.mxu0 0.0
    %702 = vmatprep.subr.mxu0 0.0
    %703 = vmatpush2.msra.mxu0 0.0
    %704 = vmatprep.subr.mxu0 0.0
    %705 = vmatpush2.msra.mxu0 0.0
    %706 = vmatprep.subr.mxu0 0.0
    %707 = vmatpush2.msra.mxu0 0.0
    %708 = vmatprep.subr.mxu0 0.0
    %709 = vmatpush2.msra.mxu0 0.0
    %710 = vmatprep.subr.mxu0 0.0
    %711 = vmatpush2.msra.mxu0 0.0
    %712 = vmatprep.subr.mxu0 0.0
    %713 = vmatpush2.msra.mxu0 0.0
    %714 = vmatprep.subr.mxu0 0.0
    %715 = vmatpush2.msra.mxu0 0.0
    %716 = vmatprep.subr.mxu0 0.0
    %717 = vmatpush2.msra.mxu0 0.0
    %718 = vmatprep.subr.mxu0 0.0
    %719 = vmatpush2.msra.mxu0 0.0
    %720 = vmatprep.subr.mxu0 0.0
    %721 = vmatpush2.msra.mxu0 0.0
    %722 = vmatprep.mubr.f32.mxu0 0.0
    %723 = vmatmul.mubr.f32.gmra.mxu0 %v653
    %v724 = vpop.f32.mrf.mxu0
    %v725 = vadd.f32 0.0, %v724
    %v726 = vpop.f32.mrf.mxu0
    %727 = vmatprep.mubr.f32.mxu0 0.0
    %728 = vmatmul.mubr.f32.gmra.mxu0 %v656
    %v729 = vpop.f32.mrf.mxu0
    %v730 = vadd.f32 0.0, %v729
    %v731 = vpop.f32.mrf.mxu0
    %732 = vdwg.mxu0
    %v733 = vmul.f32 %v725, %v454
    %v734 = vmul.f32 %v730, %v455
    %737 = vrot.lane.b32.xlu0 %v456, 8
    %v738 = vpop.permute.xlu0 %737
    %739 = vrot.lane.b32.xlu0 %v457, 8
    %v740 = vpop.permute.xlu0 %739
    %v743 = vmul.f32 %v725, %v738
    %v744 = vmul.f32 %v730, %v740
    %747 = vrot.lane.b32.xlu0 %v743, 120
    %v748 = vpop.permute.xlu0 %747
    %749 = vrot.lane.b32.xlu0 %v744, 120
    %v750 = vpop.permute.xlu0 %749
    %v753 = vsub.f32 %v733, %v748
    %v754 = vsub.f32 %v734, %v750
    %757 = vrot.lane.b32.xlu0 %v454, 8
    %v758 = vpop.permute.xlu0 %757
    %759 = vrot.lane.b32.xlu0 %v455, 8
    %v760 = vpop.permute.xlu0 %759
    %v763 = vmul.f32 %v725, %v758
    %v764 = vmul.f32 %v730, %v760
    %v765 = vmul.f32 %v725, %v456
    %v766 = vmul.f32 %v730, %v457
    %769 = vrot.lane.b32.xlu0 %v765, 8
    %v770 = vpop.permute.xlu0 %769
    %771 = vrot.lane.b32.xlu0 %v766, 8
    %v772 = vpop.permute.xlu0 %771
    %v775 = vadd.f32 %v763, %v770
    %v776 = vadd.f32 %v764, %v772
    %vm777 = vcmask 64512
    %v778 = vsel %vm777, %v753, %v775
    %v779 = vsel %vm777, %v754, %v776
    %780 = vrot.lane.b32.xlu0 %v454, 16
    %v781 = vpop.permute.xlu0 %780
    %782 = vrot.lane.b32.xlu0 %v455, 16
    %v783 = vpop.permute.xlu0 %782
    %v786 = vmul.f32 %v725, %v781
    %v787 = vmul.f32 %v730, %v783
    %788 = vrot.lane.b32.xlu0 %v456, 24
    %v789 = vpop.permute.xlu0 %788
    %790 = vrot.lane.b32.xlu0 %v457, 24
    %v791 = vpop.permute.xlu0 %790
    %v794 = vmul.f32 %v725, %v789
    %v795 = vmul.f32 %v730, %v791
    %798 = vrot.lane.b32.xlu0 %v794, 120
    %v799 = vpop.permute.xlu0 %798
    %800 = vrot.lane.b32.xlu0 %v795, 120
    %v801 = vpop.permute.xlu0 %800
    %v804 = vsub.f32 %v786, %v799
    %v805 = vsub.f32 %v787, %v801
    %806 = vrot.lane.b32.xlu0 %v454, 24
    %v807 = vpop.permute.xlu0 %806
    %808 = vrot.lane.b32.xlu0 %v455, 24
    %v809 = vpop.permute.xlu0 %808
    %v812 = vmul.f32 %v725, %v807
    %v813 = vmul.f32 %v730, %v809
    %814 = vrot.lane.b32.xlu0 %v456, 16
    %v815 = vpop.permute.xlu0 %814
    %816 = vrot.lane.b32.xlu0 %v457, 16
    %v817 = vpop.permute.xlu0 %816
    %v820 = vmul.f32 %v725, %v815
    %v821 = vmul.f32 %v730, %v817
    %824 = vrot.lane.b32.xlu0 %v820, 8
    %v825 = vpop.permute.xlu0 %824
    %826 = vrot.lane.b32.xlu0 %v821, 8
    %v827 = vpop.permute.xlu0 %826
    %v830 = vadd.f32 %v812, %v825
    %v831 = vadd.f32 %v813, %v827
    %834 = vrot.lane.b32.xlu0 %v804, 112
    %v835 = vpop.permute.xlu0 %834
    %836 = vrot.lane.b32.xlu0 %v805, 112
    %v837 = vpop.permute.xlu0 %836
    %842 = vrot.lane.b32.xlu0 %v830, 112
    %v843 = vpop.permute.xlu0 %842
    %844 = vrot.lane.b32.xlu0 %v831, 112
    %v845 = vpop.permute.xlu0 %844
    %v848 = vsel %vm777, %v835, %v843
    %v849 = vsel %vm777, %v837, %v845
    %850 = vrot.lane.b32.xlu0 %v454, 32
    %v851 = vpop.permute.xlu0 %850
    %852 = vrot.lane.b32.xlu0 %v455, 32
    %v853 = vpop.permute.xlu0 %852
    %v856 = vmul.f32 %v725, %v851
    %v857 = vmul.f32 %v730, %v853
    %858 = vrot.lane.b32.xlu0 %v456, 40
    %v859 = vpop.permute.xlu0 %858
    %860 = vrot.lane.b32.xlu0 %v457, 40
    %v861 = vpop.permute.xlu0 %860
    %v864 = vmul.f32 %v725, %v859
    %v865 = vmul.f32 %v730, %v861
    %868 = vrot.lane.b32.xlu0 %v864, 120
    %v869 = vpop.permute.xlu0 %868
    %870 = vrot.lane.b32.xlu0 %v865, 120
    %v871 = vpop.permute.xlu0 %870
    %v874 = vsub.f32 %v856, %v869
    %v875 = vsub.f32 %v857, %v871
    %876 = vrot.lane.b32.xlu0 %v454, 40
    %v877 = vpop.permute.xlu0 %876
    %878 = vrot.lane.b32.xlu0 %v455, 40
    %v879 = vpop.permute.xlu0 %878
    %v882 = vmul.f32 %v725, %v877
    %v883 = vmul.f32 %v730, %v879
    %884 = vrot.lane.b32.xlu0 %v456, 32
    %v885 = vpop.permute.xlu0 %884
    %886 = vrot.lane.b32.xlu0 %v457, 32
    %v887 = vpop.permute.xlu0 %886
    %v890 = vmul.f32 %v725, %v885
    %v891 = vmul.f32 %v730, %v887
    %894 = vrot.lane.b32.xlu0 %v890, 8
    %v895 = vpop.permute.xlu0 %894
    %896 = vrot.lane.b32.xlu0 %v891, 8
    %v897 = vpop.permute.xlu0 %896
    %v900 = vadd.f32 %v882, %v895
    %v901 = vadd.f32 %v883, %v897
    %904 = vrot.lane.b32.xlu0 %v874, 96
    %v905 = vpop.permute.xlu0 %904
    %906 = vrot.lane.b32.xlu0 %v875, 96
    %v907 = vpop.permute.xlu0 %906
    %912 = vrot.lane.b32.xlu0 %v900, 96
    %v913 = vpop.permute.xlu0 %912
    %914 = vrot.lane.b32.xlu0 %v901, 96
    %v915 = vpop.permute.xlu0 %914
    %v918 = vsel %vm777, %v905, %v913
    %v919 = vsel %vm777, %v907, %v915
    %920 = vrot.lane.b32.xlu0 %v454, 48
    %v921 = vpop.permute.xlu0 %920
    %922 = vrot.lane.b32.xlu0 %v455, 48
    %v923 = vpop.permute.xlu0 %922
    %v926 = vmul.f32 %v725, %v921
    %v927 = vmul.f32 %v730, %v923
    %928 = vrot.lane.b32.xlu0 %v456, 56
    %v929 = vpop.permute.xlu0 %928
    %930 = vrot.lane.b32.xlu0 %v457, 56
    %v931 = vpop.permute.xlu0 %930
    %v934 = vmul.f32 %v725, %v929
    %v935 = vmul.f32 %v730, %v931
    %938 = vrot.lane.b32.xlu0 %v934, 120
    %v939 = vpop.permute.xlu0 %938
    %940 = vrot.lane.b32.xlu0 %v935, 120
    %v941 = vpop.permute.xlu0 %940
    %v944 = vsub.f32 %v926, %v939
    %v945 = vsub.f32 %v927, %v941
    %946 = vrot.lane.b32.xlu0 %v454, 56
    %v947 = vpop.permute.xlu0 %946
    %948 = vrot.lane.b32.xlu0 %v455, 56
    %v949 = vpop.permute.xlu0 %948
    %v952 = vmul.f32 %v725, %v947
    %v953 = vmul.f32 %v730, %v949
    %954 = vrot.lane.b32.xlu0 %v456, 48
    %v955 = vpop.permute.xlu0 %954
    %956 = vrot.lane.b32.xlu0 %v457, 48
    %v957 = vpop.permute.xlu0 %956
    %v960 = vmul.f32 %v725, %v955
    %v961 = vmul.f32 %v730, %v957
    %964 = vrot.lane.b32.xlu0 %v960, 8
    %v965 = vpop.permute.xlu0 %964
    %966 = vrot.lane.b32.xlu0 %v961, 8
    %v967 = vpop.permute.xlu0 %966
    %v970 = vadd.f32 %v952, %v965
    %v971 = vadd.f32 %v953, %v967
    %974 = vrot.lane.b32.xlu0 %v944, 80
    %v975 = vpop.permute.xlu0 %974
    %976 = vrot.lane.b32.xlu0 %v945, 80
    %v977 = vpop.permute.xlu0 %976
    %982 = vrot.lane.b32.xlu0 %v970, 80
    %v983 = vpop.permute.xlu0 %982
    %984 = vrot.lane.b32.xlu0 %v971, 80
    %v985 = vpop.permute.xlu0 %984
    %v988 = vsel %vm777, %v975, %v983
    %v989 = vsel %vm777, %v977, %v985
    %990 = vrot.lane.b32.xlu0 %v454, 64
    %v991 = vpop.permute.xlu0 %990
    %992 = vrot.lane.b32.xlu0 %v455, 64
    %v993 = vpop.permute.xlu0 %992
    %v996 = vmul.f32 %v725, %v991
    %v997 = vmul.f32 %v730, %v993
    %998 = vrot.lane.b32.xlu0 %v456, 72
    %v999 = vpop.permute.xlu0 %998
    %1000 = vrot.lane.b32.xlu0 %v457, 72
    %v1001 = vpop.permute.xlu0 %1000
    %v1004 = vmul.f32 %v725, %v999
    %v1005 = vmul.f32 %v730, %v1001
    %1008 = vrot.lane.b32.xlu0 %v1004, 120
    %v1009 = vpop.permute.xlu0 %1008
    %1010 = vrot.lane.b32.xlu0 %v1005, 120
    %v1011 = vpop.permute.xlu0 %1010
    %v1014 = vsub.f32 %v996, %v1009
    %v1015 = vsub.f32 %v997, %v1011
    %1016 = vrot.lane.b32.xlu0 %v454, 72
    %v1017 = vpop.permute.xlu0 %1016
    %1018 = vrot.lane.b32.xlu0 %v455, 72
    %v1019 = vpop.permute.xlu0 %1018
    %v1022 = vmul.f32 %v725, %v1017
    %v1023 = vmul.f32 %v730, %v1019
    %1024 = vrot.lane.b32.xlu0 %v456, 64
    %v1025 = vpop.permute.xlu0 %1024
    %1026 = vrot.lane.b32.xlu0 %v457, 64
    %v1027 = vpop.permute.xlu0 %1026
    %v1030 = vmul.f32 %v725, %v1025
    %v1031 = vmul.f32 %v730, %v1027
    %1034 = vrot.lane.b32.xlu0 %v1030, 8
    %v1035 = vpop.permute.xlu0 %1034
    %1036 = vrot.lane.b32.xlu0 %v1031, 8
    %v1037 = vpop.permute.xlu0 %1036
    %v1040 = vadd.f32 %v1022, %v1035
    %v1041 = vadd.f32 %v1023, %v1037
    %1044 = vrot.lane.b32.xlu0 %v1014, 64
    %v1045 = vpop.permute.xlu0 %1044
    %1046 = vrot.lane.b32.xlu0 %v1015, 64
    %v1047 = vpop.permute.xlu0 %1046
    %1052 = vrot.lane.b32.xlu0 %v1040, 64
    %v1053 = vpop.permute.xlu0 %1052
    %1054 = vrot.lane.b32.xlu0 %v1041, 64
    %v1055 = vpop.permute.xlu0 %1054
    %v1058 = vsel %vm777, %v1045, %v1053
    %v1059 = vsel %vm777, %v1047, %v1055
    %1060 = vrot.lane.b32.xlu0 %v454, 80
    %v1061 = vpop.permute.xlu0 %1060
    %1062 = vrot.lane.b32.xlu0 %v455, 80
    %v1063 = vpop.permute.xlu0 %1062
    %v1066 = vmul.f32 %v725, %v1061
    %v1067 = vmul.f32 %v730, %v1063
    %1068 = vrot.lane.b32.xlu0 %v456, 88
    %v1069 = vpop.permute.xlu0 %1068
    %1070 = vrot.lane.b32.xlu0 %v457, 88
    %v1071 = vpop.permute.xlu0 %1070
    %v1074 = vmul.f32 %v725, %v1069
    %v1075 = vmul.f32 %v730, %v1071
    %1078 = vrot.lane.b32.xlu0 %v1074, 120
    %v1079 = vpop.permute.xlu0 %1078
    %1080 = vrot.lane.b32.xlu0 %v1075, 120
    %v1081 = vpop.permute.xlu0 %1080
    %v1084 = vsub.f32 %v1066, %v1079
    %v1085 = vsub.f32 %v1067, %v1081
    %1086 = vrot.lane.b32.xlu0 %v454, 88
    %v1087 = vpop.permute.xlu0 %1086
    %1088 = vrot.lane.b32.xlu0 %v455, 88
    %v1089 = vpop.permute.xlu0 %1088
    %v1092 = vmul.f32 %v725, %v1087
    %v1093 = vmul.f32 %v730, %v1089
    %1094 = vrot.lane.b32.xlu0 %v456, 80
    %v1095 = vpop.permute.xlu0 %1094
    %1096 = vrot.lane.b32.xlu0 %v457, 80
    %v1097 = vpop.permute.xlu0 %1096
    %v1100 = vmul.f32 %v725, %v1095
    %v1101 = vmul.f32 %v730, %v1097
    %1104 = vrot.lane.b32.xlu0 %v1100, 8
    %v1105 = vpop.permute.xlu0 %1104
    %1106 = vrot.lane.b32.xlu0 %v1101, 8
    %v1107 = vpop.permute.xlu0 %1106
    %v1110 = vadd.f32 %v1092, %v1105
    %v1111 = vadd.f32 %v1093, %v1107
    %1114 = vrot.lane.b32.xlu0 %v1084, 48
    %v1115 = vpop.permute.xlu0 %1114
    %1116 = vrot.lane.b32.xlu0 %v1085, 48
    %v1117 = vpop.permute.xlu0 %1116
    %1122 = vrot.lane.b32.xlu0 %v1110, 48
    %v1123 = vpop.permute.xlu0 %1122
    %1124 = vrot.lane.b32.xlu0 %v1111, 48
    %v1125 = vpop.permute.xlu0 %1124
    %v1128 = vsel %vm777, %v1115, %v1123
    %v1129 = vsel %vm777, %v1117, %v1125
    %vm1130 = vcmask 130048
    %v1132 = vsel %vm1130, %v778, 0
    %v1135 = vsel %vm1130, %v1058, 0
    %1137 = vmatprep.subr.mxu0 0.0
    %1138 = vmatpush1.xpose.msra.mxu0 0.0
    %1139 = vmatprep.subr.mxu0 0.0
    %1140 = vmatpush1.xpose.msra.mxu0 0.0
    %1141 = vmatprep.subr.mxu0 0.0
    %1142 = vmatpush1.xpose.msra.mxu0 0.0
    %1143 = vmatprep.subr.mxu0 0.0
    %1144 = vmatpush1.xpose.msra.mxu0 0.0
    %1145 = vmatprep.subr.mxu0 0.0
    %1146 = vmatpush1.xpose.msra.mxu0 0.0
    %1147 = vmatprep.subr.mxu0 0.0
    %1148 = vmatpush1.xpose.msra.mxu0 0.0
    %1149 = vmatprep.subr.mxu0 0.0
    %1150 = vmatpush1.xpose.msra.mxu0 0.0
    %1151 = vmatprep.subr.mxu0 0.0
    %1152 = vmatpush1.xpose.msra.mxu0 0.0
    %1153 = vmatprep.subr.mxu0 0.0
    %1154 = vmatpush1.xpose.msra.mxu0 0.0
    %1155 = vmatprep.subr.mxu0 0.0
    %1156 = vmatpush1.xpose.msra.mxu0 0.0
    %1157 = vmatprep.subr.mxu0 0.0
    %1158 = vmatpush1.xpose.msra.mxu0 0.0
    %1159 = vmatprep.subr.mxu0 0.0
    %1160 = vmatpush1.xpose.msra.mxu0 0.0
    %1161 = vmatprep.subr.mxu0 0.0
    %1162 = vmatpush1.xpose.msra.mxu0 0.0
    %1163 = vmatprep.subr.mxu0 0.0
    %1164 = vmatpush1.xpose.msra.mxu0 0.0
    %1165 = vmatprep.subr.mxu0 0.0
    %1166 = vmatpush1.xpose.msra.mxu0 0.0
    %1167 = vmatprep.subr.mxu0 0.0
    %1168 = vmatpush1.xpose.msra.mxu0 %v1135
    %1169 = vmatprep.subr.mxu0 0.0
    %1170 = vmatpush2.xpose.msra.mxu0 0.0
    %1171 = vmatprep.subr.mxu0 0.0
    %1172 = vmatpush2.xpose.msra.mxu0 0.0
    %1173 = vmatprep.subr.mxu0 0.0
    %1174 = vmatpush2.xpose.msra.mxu0 0.0
    %1175 = vmatprep.subr.mxu0 0.0
    %1176 = vmatpush2.xpose.msra.mxu0 0.0
    %1177 = vmatprep.subr.mxu0 0.0
    %1178 = vmatpush2.xpose.msra.mxu0 0.0
    %1179 = vmatprep.subr.mxu0 0.0
    %1180 = vmatpush2.xpose.msra.mxu0 0.0
    %1181 = vmatprep.subr.mxu0 0.0
    %1182 = vmatpush2.xpose.msra.mxu0 0.0
    %1183 = vmatprep.subr.mxu0 0.0
    %1184 = vmatpush2.xpose.msra.mxu0 0.0
    %1185 = vmatprep.subr.mxu0 0.0
    %1186 = vmatpush2.xpose.msra.mxu0 0.0
    %1187 = vmatprep.subr.mxu0 0.0
    %1188 = vmatpush2.xpose.msra.mxu0 0.0
    %1189 = vmatprep.subr.mxu0 0.0
    %1190 = vmatpush2.xpose.msra.mxu0 0.0
    %1191 = vmatprep.subr.mxu0 0.0
    %1192 = vmatpush2.xpose.msra.mxu0 0.0
    %1193 = vmatprep.subr.mxu0 0.0
    %1194 = vmatpush2.xpose.msra.mxu0 0.0
    %1195 = vmatprep.subr.mxu0 0.0
    %1196 = vmatpush2.xpose.msra.mxu0 0.0
    %1197 = vmatprep.subr.mxu0 0.0
    %1198 = vmatpush2.xpose.msra.mxu0 0.0
    %1199 = vmatprep.subr.mxu0 0.0
    %1200 = vmatpush2.xpose.msra.mxu0 0.0
    %1201 = vmatprep.mubr.f32.mxu0 0.0
    %1202 = vmatmul.mubr.f32.gmra.mxu0 %v1132
    %v1203 = vpop.f32.mrf.mxu0
    %v1204 = vadd.f32 0.0, %v1203
    %v1205 = vpop.f32.mrf.mxu0
    %1206 = vdwg.mxu0
    %v1207 = vmul.f32 %v1204, 0.25
    %v1208 = vsel %vm777, %v1207, -inf
    %1209 = vmax.xlane.f32.xlu0 %v1208
    %v1210 = vpop.xlane.xlu0 %1209
    %v1211 = vsub.f32 %v1207, %v1210
    %v1212 = vmul.f32 %v1211, 1.442695
    %v1213 = vpow.pop %v1212
    %v1214 = vsel %vm777, %v1213, 0.0
    %1215 = vadd.xlane.f32.xlu0 %v1214
    %v1216 = vpop.xlane.xlu0 %1215
    %v1217 = vrcp.pop %v1216
    %v1218 = vmul.f32 %v1213, %v1217
    %1220 = vrot.lane.b32.xlu0 %v725, 32
    %v1221 = vpop.permute.xlu0 %1220
    %v1224 = vsel %vm777, %v1218, 0
    %1226 = vmatprep.subr.mxu0 0.0
    %1227 = vmatpush1.msra.mxu0 0.0
    %1228 = vmatprep.subr.mxu0 0.0
    %1229 = vmatpush1.msra.mxu0 0.0
    %1230 = vmatprep.subr.mxu0 0.0
    %1231 = vmatpush1.msra.mxu0 0.0
    %1232 = vmatprep.subr.mxu0 0.0
    %1233 = vmatpush1.msra.mxu0 0.0
    %1234 = vmatprep.subr.mxu0 0.0
    %1235 = vmatpush1.msra.mxu0 0.0
    %1236 = vmatprep.subr.mxu0 0.0
    %1237 = vmatpush1.msra.mxu0 0.0
    %1238 = vmatprep.subr.mxu0 0.0
    %1239 = vmatpush1.msra.mxu0 0.0
    %1240 = vmatprep.subr.mxu0 0.0
    %1241 = vmatpush1.msra.mxu0 0.0
    %1242 = vmatprep.subr.mxu0 0.0
    %1243 = vmatpush1.msra.mxu0 0.0
    %1244 = vmatprep.subr.mxu0 0.0
    %1245 = vmatpush1.msra.mxu0 0.0
    %1246 = vmatprep.subr.mxu0 0.0
    %1247 = vmatpush1.msra.mxu0 0.0
    %1248 = vmatprep.subr.mxu0 0.0
    %1249 = vmatpush1.msra.mxu0 0.0
    %1250 = vmatprep.subr.mxu0 0.0
    %1251 = vmatpush1.msra.mxu0 0.0
    %1252 = vmatprep.subr.mxu0 0.0
    %1253 = vmatpush1.msra.mxu0 0.0
    %1254 = vmatprep.subr.mxu0 0.0
    %1255 = vmatpush1.msra.mxu0 0.0
    %1256 = vmatprep.subr.mxu0 0.0
    %1257 = vmatpush1.msra.mxu0 %v1221
    %1258 = vmatprep.subr.mxu0 0.0
    %1259 = vmatpush2.msra.mxu0 0.0
    %1260 = vmatprep.subr.mxu0 0.0
    %1261 = vmatpush2.msra.mxu0 0.0
    %1262 = vmatprep.subr.mxu0 0.0
    %1263 = vmatpush2.msra.mxu0 0.0
    %1264 = vmatprep.subr.mxu0 0.0
    %1265 = vmatpush2.msra.mxu0 0.0
    %1266 = vmatprep.subr.mxu0 0.0
    %1267 = vmatpush2.msra.mxu0 0.0
    %1268 = vmatprep.subr.mxu0 0.0
    %1269 = vmatpush2.msra.mxu0 0.0
    %1270 = vmatprep.subr.mxu0 0.0
    %1271 = vmatpush2.msra.mxu0 0.0
    %1272 = vmatprep.subr.mxu0 0.0
    %1273 = vmatpush2.msra.mxu0 0.0
    %1274 = vmatprep.subr.mxu0 0.0
    %1275 = vmatpush2.msra.mxu0 0.0
    %1276 = vmatprep.subr.mxu0 0.0
    %1277 = vmatpush2.msra.mxu0 0.0
    %1278 = vmatprep.subr.mxu0 0.0
    %1279 = vmatpush2.msra.mxu0 0.0
    %1280 = vmatprep.subr.mxu0 0.0
    %1281 = vmatpush2.msra.mxu0 0.0
    %1282 = vmatprep.subr.mxu0 0.0
    %1283 = vmatpush2.msra.mxu0 0.0
    %1284 = vmatprep.subr.mxu0 0.0
    %1285 = vmatpush2.msra.mxu0 0.0
    %1286 = vmatprep.subr.mxu0 0.0
    %1287 = vmatpush2.msra.mxu0 0.0
    %1288 = vmatprep.subr.mxu0 0.0
    %1289 = vmatpush2.msra.mxu0 0.0
    %1290 = vmatprep.mubr.f32.mxu0 0.0
    %1291 = vmatmul.mubr.f32.gmra.mxu0 %v1224
    %v1292 = vpop.f32.mrf.mxu0
    %v1293 = vadd.f32 0.0, %v1292
    %v1294 = vpop.f32.mrf.mxu0
    %1295 = vdwg.mxu0
    %v1297 = vsel %vm1130, %v848, 0
    %1299 = vmatprep.subr.mxu0 0.0
    %1300 = vmatpush1.xpose.msra.mxu0 0.0
    %1301 = vmatprep.subr.mxu0 0.0
    %1302 = vmatpush1.xpose.msra.mxu0 0.0
    %1303 = vmatprep.subr.mxu0 0.0
    %1304 = vmatpush1.xpose.msra.mxu0 0.0
    %1305 = vmatprep.subr.mxu0 0.0
    %1306 = vmatpush1.xpose.msra.mxu0 0.0
    %1307 = vmatprep.subr.mxu0 0.0
    %1308 = vmatpush1.xpose.msra.mxu0 0.0
    %1309 = vmatprep.subr.mxu0 0.0
    %1310 = vmatpush1.xpose.msra.mxu0 0.0
    %1311 = vmatprep.subr.mxu0 0.0
    %1312 = vmatpush1.xpose.msra.mxu0 0.0
    %1313 = vmatprep.subr.mxu0 0.0
    %1314 = vmatpush1.xpose.msra.mxu0 0.0
    %1315 = vmatprep.subr.mxu0 0.0
    %1316 = vmatpush1.xpose.msra.mxu0 0.0
    %1317 = vmatprep.subr.mxu0 0.0
    %1318 = vmatpush1.xpose.msra.mxu0 0.0
    %1319 = vmatprep.subr.mxu0 0.0
    %1320 = vmatpush1.xpose.msra.mxu0 0.0
    %1321 = vmatprep.subr.mxu0 0.0
    %1322 = vmatpush1.xpose.msra.mxu0 0.0
    %1323 = vmatprep.subr.mxu0 0.0
    %1324 = vmatpush1.xpose.msra.mxu0 0.0
    %1325 = vmatprep.subr.mxu0 0.0
    %1326 = vmatpush1.xpose.msra.mxu0 0.0
    %1327 = vmatprep.subr.mxu0 0.0
    %1328 = vmatpush1.xpose.msra.mxu0 0.0
    %1329 = vmatprep.subr.mxu0 0.0
    %1330 = vmatpush1.xpose.msra.mxu0 %v1135
    %1331 = vmatprep.subr.mxu0 0.0
    %1332 = vmatpush2.xpose.msra.mxu0 0.0
    %1333 = vmatprep.subr.mxu0 0.0
    %1334 = vmatpush2.xpose.msra.mxu0 0.0
    %1335 = vmatprep.subr.mxu0 0.0
    %1336 = vmatpush2.xpose.msra.mxu0 0.0
    %1337 = vmatprep.subr.mxu0 0.0
    %1338 = vmatpush2.xpose.msra.mxu0 0.0
    %1339 = vmatprep.subr.mxu0 0.0
    %1340 = vmatpush2.xpose.msra.mxu0 0.0
    %1341 = vmatprep.subr.mxu0 0.0
    %1342 = vmatpush2.xpose.msra.mxu0 0.0
    %1343 = vmatprep.subr.mxu0 0.0
    %1344 = vmatpush2.xpose.msra.mxu0 0.0
    %1345 = vmatprep.subr.mxu0 0.0
    %1346 = vmatpush2.xpose.msra.mxu0 0.0
    %1347 = vmatprep.subr.mxu0 0.0
    %1348 = vmatpush2.xpose.msra.mxu0 0.0
    %1349 = vmatprep.subr.mxu0 0.0
    %1350 = vmatpush2.xpose.msra.mxu0 0.0
    %1351 = vmatprep.subr.mxu0 0.0
    %1352 = vmatpush2.xpose.msra.mxu0 0.0
    %1353 = vmatprep.subr.mxu0 0.0
    %1354 = vmatpush2.xpose.msra.mxu0 0.0
    %1355 = vmatprep.subr.mxu0 0.0
    %1356 = vmatpush2.xpose.msra.mxu0 0.0
    %1357 = vmatprep.subr.mxu0 0.0
    %1358 = vmatpush2.xpose.msra.mxu0 0.0
    %1359 = vmatprep.subr.mxu0 0.0
    %1360 = vmatpush2.xpose.msra.mxu0 0.0
    %1361 = vmatprep.subr.mxu0 0.0
    %1362 = vmatpush2.xpose.msra.mxu0 0.0
    %1363 = vmatprep.mubr.f32.mxu0 0.0
    %1364 = vmatmul.mubr.f32.gmra.mxu0 %v1297
    %v1365 = vpop.f32.mrf.mxu0
    %v1366 = vadd.f32 0.0, %v1365
    %v1367 = vpop.f32.mrf.mxu0
    %1368 = vdwg.mxu0
    %v1369 = vmul.f32 %v1366, 0.25
    %v1370 = vsel %vm777, %v1369, -inf
    %1371 = vmax.xlane.f32.xlu0 %v1370
    %v1372 = vpop.xlane.xlu0 %1371
    %v1373 = vsub.f32 %v1369, %v1372
    %v1374 = vmul.f32 %v1373, 1.442695
    %v1375 = vpow.pop %v1374
    %v1376 = vsel %vm777, %v1375, 0.0
    %1377 = vadd.xlane.f32.xlu0 %v1376
    %v1378 = vpop.xlane.xlu0 %1377
    %v1379 = vrcp.pop %v1378
    %v1380 = vmul.f32 %v1375, %v1379
    %v1382 = vsel %vm777, %v1380, 0
    %1384 = vmatprep.subr.mxu0 0.0
    %1385 = vmatpush1.msra.mxu0 0.0
    %1386 = vmatprep.subr.mxu0 0.0
    %1387 = vmatpush1.msra.mxu0 0.0
    %1388 = vmatprep.subr.mxu0 0.0
    %1389 = vmatpush1.msra.mxu0 0.0
    %1390 = vmatprep.subr.mxu0 0.0
    %1391 = vmatpush1.msra.mxu0 0.0
    %1392 = vmatprep.subr.mxu0 0.0
    %1393 = vmatpush1.msra.mxu0 0.0
    %1394 = vmatprep.subr.mxu0 0.0
    %1395 = vmatpush1.msra.mxu0 0.0
    %1396 = vmatprep.subr.mxu0 0.0
    %1397 = vmatpush1.msra.mxu0 0.0
    %1398 = vmatprep.subr.mxu0 0.0
    %1399 = vmatpush1.msra.mxu0 0.0
    %1400 = vmatprep.subr.mxu0 0.0
    %1401 = vmatpush1.msra.mxu0 0.0
    %1402 = vmatprep.subr.mxu0 0.0
    %1403 = vmatpush1.msra.mxu0 0.0
    %1404 = vmatprep.subr.mxu0 0.0
    %1405 = vmatpush1.msra.mxu0 0.0
    %1406 = vmatprep.subr.mxu0 0.0
    %1407 = vmatpush1.msra.mxu0 0.0
    %1408 = vmatprep.subr.mxu0 0.0
    %1409 = vmatpush1.msra.mxu0 0.0
    %1410 = vmatprep.subr.mxu0 0.0
    %1411 = vmatpush1.msra.mxu0 0.0
    %1412 = vmatprep.subr.mxu0 0.0
    %1413 = vmatpush1.msra.mxu0 0.0
    %1414 = vmatprep.subr.mxu0 0.0
    %1415 = vmatpush1.msra.mxu0 %v1221
    %1416 = vmatprep.subr.mxu0 0.0
    %1417 = vmatpush2.msra.mxu0 0.0
    %1418 = vmatprep.subr.mxu0 0.0
    %1419 = vmatpush2.msra.mxu0 0.0
    %1420 = vmatprep.subr.mxu0 0.0
    %1421 = vmatpush2.msra.mxu0 0.0
    %1422 = vmatprep.subr.mxu0 0.0
    %1423 = vmatpush2.msra.mxu0 0.0
    %1424 = vmatprep.subr.mxu0 0.0
    %1425 = vmatpush2.msra.mxu0 0.0
    %1426 = vmatprep.subr.mxu0 0.0
    %1427 = vmatpush2.msra.mxu0 0.0
    %1428 = vmatprep.subr.mxu0 0.0
    %1429 = vmatpush2.msra.mxu0 0.0
    %1430 = vmatprep.subr.mxu0 0.0
    %1431 = vmatpush2.msra.mxu0 0.0
    %1432 = vmatprep.subr.mxu0 0.0
    %1433 = vmatpush2.msra.mxu0 0.0
    %1434 = vmatprep.subr.mxu0 0.0
    %1435 = vmatpush2.msra.mxu0 0.0
    %1436 = vmatprep.subr.mxu0 0.0
    %1437 = vmatpush2.msra.mxu0 0.0
    %1438 = vmatprep.subr.mxu0 0.0
    %1439 = vmatpush2.msra.mxu0 0.0
    %1440 = vmatprep.subr.mxu0 0.0
    %1441 = vmatpush2.msra.mxu0 0.0
    %1442 = vmatprep.subr.mxu0 0.0
    %1443 = vmatpush2.msra.mxu0 0.0
    %1444 = vmatprep.subr.mxu0 0.0
    %1445 = vmatpush2.msra.mxu0 0.0
    %1446 = vmatprep.subr.mxu0 0.0
    %1447 = vmatpush2.msra.mxu0 0.0
    %1448 = vmatprep.mubr.f32.mxu0 0.0
    %1449 = vmatmul.mubr.f32.gmra.mxu0 %v1382
    %v1450 = vpop.f32.mrf.mxu0
    %v1451 = vadd.f32 0.0, %v1450
    %v1452 = vpop.f32.mrf.mxu0
    %1453 = vdwg.mxu0
    %v1455 = vsel %vm1130, %v918, 0
    %v1458 = vsel %vm1130, %v1128, 0
    %1460 = vmatprep.subr.mxu0 0.0
    %1461 = vmatpush1.xpose.msra.mxu0 0.0
    %1462 = vmatprep.subr.mxu0 0.0
    %1463 = vmatpush1.xpose.msra.mxu0 0.0
    %1464 = vmatprep.subr.mxu0 0.0
    %1465 = vmatpush1.xpose.msra.mxu0 0.0
    %1466 = vmatprep.subr.mxu0 0.0
    %1467 = vmatpush1.xpose.msra.mxu0 0.0
    %1468 = vmatprep.subr.mxu0 0.0
    %1469 = vmatpush1.xpose.msra.mxu0 0.0
    %1470 = vmatprep.subr.mxu0 0.0
    %1471 = vmatpush1.xpose.msra.mxu0 0.0
    %1472 = vmatprep.subr.mxu0 0.0
    %1473 = vmatpush1.xpose.msra.mxu0 0.0
    %1474 = vmatprep.subr.mxu0 0.0
    %1475 = vmatpush1.xpose.msra.mxu0 0.0
    %1476 = vmatprep.subr.mxu0 0.0
    %1477 = vmatpush1.xpose.msra.mxu0 0.0
    %1478 = vmatprep.subr.mxu0 0.0
    %1479 = vmatpush1.xpose.msra.mxu0 0.0
    %1480 = vmatprep.subr.mxu0 0.0
    %1481 = vmatpush1.xpose.msra.mxu0 0.0
    %1482 = vmatprep.subr.mxu0 0.0
    %1483 = vmatpush1.xpose.msra.mxu0 0.0
    %1484 = vmatprep.subr.mxu0 0.0
    %1485 = vmatpush1.xpose.msra.mxu0 0.0
    %1486 = vmatprep.subr.mxu0 0.0
    %1487 = vmatpush1.xpose.msra.mxu0 0.0
    %1488 = vmatprep.subr.mxu0 0.0
    %1489 = vmatpush1.xpose.msra.mxu0 0.0
    %1490 = vmatprep.subr.mxu0 0.0
    %1491 = vmatpush1.xpose.msra.mxu0 %v1458
    %1492 = vmatprep.subr.mxu0 0.0
    %1493 = vmatpush2.xpose.msra.mxu0 0.0
    %1494 = vmatprep.subr.mxu0 0.0
    %1495 = vmatpush2.xpose.msra.mxu0 0.0
    %1496 = vmatprep.subr.mxu0 0.0
    %1497 = vmatpush2.xpose.msra.mxu0 0.0
    %1498 = vmatprep.subr.mxu0 0.0
    %1499 = vmatpush2.xpose.msra.mxu0 0.0
    %1500 = vmatprep.subr.mxu0 0.0
    %1501 = vmatpush2.xpose.msra.mxu0 0.0
    %1502 = vmatprep.subr.mxu0 0.0
    %1503 = vmatpush2.xpose.msra.mxu0 0.0
    %1504 = vmatprep.subr.mxu0 0.0
    %1505 = vmatpush2.xpose.msra.mxu0 0.0
    %1506 = vmatprep.subr.mxu0 0.0
    %1507 = vmatpush2.xpose.msra.mxu0 0.0
    %1508 = vmatprep.subr.mxu0 0.0
    %1509 = vmatpush2.xpose.msra.mxu0 0.0
    %1510 = vmatprep.subr.mxu0 0.0
    %1511 = vmatpush2.xpose.msra.mxu0 0.0
    %1512 = vmatprep.subr.mxu0 0.0
    %1513 = vmatpush2.xpose.msra.mxu0 0.0
    %1514 = vmatprep.subr.mxu0 0.0
    %1515 = vmatpush2.xpose.msra.mxu0 0.0
    %1516 = vmatprep.subr.mxu0 0.0
    %1517 = vmatpush2.xpose.msra.mxu0 0.0
    %1518 = vmatprep.subr.mxu0 0.0
    %1519 = vmatpush2.xpose.msra.mxu0 0.0
    %1520 = vmatprep.subr.mxu0 0.0
    %1521 = vmatpush2.xpose.msra.mxu0 0.0
    %1522 = vmatprep.subr.mxu0 0.0
    %1523 = vmatpush2.xpose.msra.mxu0 0.0
    %1524 = vmatprep.mubr.f32.mxu0 0.0
    %1525 = vmatmul.mubr.f32.gmra.mxu0 %v1455
    %v1526 = vpop.f32.mrf.mxu0
    %v1527 = vadd.f32 0.0, %v1526
    %v1528 = vpop.f32.mrf.mxu0
    %1529 = vdwg.mxu0
    %v1530 = vmul.f32 %v1527, 0.25
    %v1531 = vsel %vm777, %v1530, -inf
    %1532 = vmax.xlane.f32.xlu0 %v1531
    %v1533 = vpop.xlane.xlu0 %1532
    %v1534 = vsub.f32 %v1530, %v1533
    %v1535 = vmul.f32 %v1534, 1.442695
    %v1536 = vpow.pop %v1535
    %v1537 = vsel %vm777, %v1536, 0.0
    %1538 = vadd.xlane.f32.xlu0 %v1537
    %v1539 = vpop.xlane.xlu0 %1538
    %v1540 = vrcp.pop %v1539
    %v1541 = vmul.f32 %v1536, %v1540
    %1542 = vrot.lane.b32.xlu0 %v725, 16
    %v1543 = vpop.permute.xlu0 %1542
    %v1546 = vsel %vm777, %v1541, 0
    %1548 = vmatprep.subr.mxu0 0.0
    %1549 = vmatpush1.msra.mxu0 0.0
    %1550 = vmatprep.subr.mxu0 0.0
    %1551 = vmatpush1.msra.mxu0 0.0
    %1552 = vmatprep.subr.mxu0 0.0
    %1553 = vmatpush1.msra.mxu0 0.0
    %1554 = vmatprep.subr.mxu0 0.0
    %1555 = vmatpush1.msra.mxu0 0.0
    %1556 = vmatprep.subr.mxu0 0.0
    %1557 = vmatpush1.msra.mxu0 0.0
    %1558 = vmatprep.subr.mxu0 0.0
    %1559 = vmatpush1.msra.mxu0 0.0
    %1560 = vmatprep.subr.mxu0 0.0
    %1561 = vmatpush1.msra.mxu0 0.0
    %1562 = vmatprep.subr.mxu0 0.0
    %1563 = vmatpush1.msra.mxu0 0.0
    %1564 = vmatprep.subr.mxu0 0.0
    %1565 = vmatpush1.msra.mxu0 0.0
    %1566 = vmatprep.subr.mxu0 0.0
    %1567 = vmatpush1.msra.mxu0 0.0
    %1568 = vmatprep.subr.mxu0 0.0
    %1569 = vmatpush1.msra.mxu0 0.0
    %1570 = vmatprep.subr.mxu0 0.0
    %1571 = vmatpush1.msra.mxu0 0.0
    %1572 = vmatprep.subr.mxu0 0.0
    %1573 = vmatpush1.msra.mxu0 0.0
    %1574 = vmatprep.subr.mxu0 0.0
    %1575 = vmatpush1.msra.mxu0 0.0
    %1576 = vmatprep.subr.mxu0 0.0
    %1577 = vmatpush1.msra.mxu0 0.0
    %1578 = vmatprep.subr.mxu0 0.0
    %1579 = vmatpush1.msra.mxu0 %v1543
    %1580 = vmatprep.subr.mxu0 0.0
    %1581 = vmatpush2.msra.mxu0 0.0
    %1582 = vmatprep.subr.mxu0 0.0
    %1583 = vmatpush2.msra.mxu0 0.0
    %1584 = vmatprep.subr.mxu0 0.0
    %1585 = vmatpush2.msra.mxu0 0.0
    %1586 = vmatprep.subr.mxu0 0.0
    %1587 = vmatpush2.msra.mxu0 0.0
    %1588 = vmatprep.subr.mxu0 0.0
    %1589 = vmatpush2.msra.mxu0 0.0
    %1590 = vmatprep.subr.mxu0 0.0
    %1591 = vmatpush2.msra.mxu0 0.0
    %1592 = vmatprep.subr.mxu0 0.0
    %1593 = vmatpush2.msra.mxu0 0.0
    %1594 = vmatprep.subr.mxu0 0.0
    %1595 = vmatpush2.msra.mxu0 0.0
    %1596 = vmatprep.subr.mxu0 0.0
    %1597 = vmatpush2.msra.mxu0 0.0
    %1598 = vmatprep.subr.mxu0 0.0
    %1599 = vmatpush2.msra.mxu0 0.0
    %1600 = vmatprep.subr.mxu0 0.0
    %1601 = vmatpush2.msra.mxu0 0.0
    %1602 = vmatprep.subr.mxu0 0.0
    %1603 = vmatpush2.msra.mxu0 0.0
    %1604 = vmatprep.subr.mxu0 0.0
    %1605 = vmatpush2.msra.mxu0 0.0
    %1606 = vmatprep.subr.mxu0 0.0
    %1607 = vmatpush2.msra.mxu0 0.0
    %1608 = vmatprep.subr.mxu0 0.0
    %1609 = vmatpush2.msra.mxu0 0.0
    %1610 = vmatprep.subr.mxu0 0.0
    %1611 = vmatpush2.msra.mxu0 0.0
    %1612 = vmatprep.mubr.f32.mxu0 0.0
    %1613 = vmatmul.mubr.f32.gmra.mxu0 %v1546
    %v1614 = vpop.f32.mrf.mxu0
    %v1615 = vadd.f32 0.0, %v1614
    %v1616 = vpop.f32.mrf.mxu0
    %1617 = vdwg.mxu0
    %v1619 = vsel %vm1130, %v988, 0
    %1621 = vmatprep.subr.mxu0 0.0
    %1622 = vmatpush1.xpose.msra.mxu0 0.0
    %1623 = vmatprep.subr.mxu0 0.0
    %1624 = vmatpush1.xpose.msra.mxu0 0.0
    %1625 = vmatprep.subr.mxu0 0.0
    %1626 = vmatpush1.xpose.msra.mxu0 0.0
    %1627 = vmatprep.subr.mxu0 0.0
    %1628 = vmatpush1.xpose.msra.mxu0 0.0
    %1629 = vmatprep.subr.mxu0 0.0
    %1630 = vmatpush1.xpose.msra.mxu0 0.0
    %1631 = vmatprep.subr.mxu0 0.0
    %1632 = vmatpush1.xpose.msra.mxu0 0.0
    %1633 = vmatprep.subr.mxu0 0.0
    %1634 = vmatpush1.xpose.msra.mxu0 0.0
    %1635 = vmatprep.subr.mxu0 0.0
    %1636 = vmatpush1.xpose.msra.mxu0 0.0
    %1637 = vmatprep.subr.mxu0 0.0
    %1638 = vmatpush1.xpose.msra.mxu0 0.0
    %1639 = vmatprep.subr.mxu0 0.0
    %1640 = vmatpush1.xpose.msra.mxu0 0.0
    %1641 = vmatprep.subr.mxu0 0.0
    %1642 = vmatpush1.xpose.msra.mxu0 0.0
    %1643 = vmatprep.subr.mxu0 0.0
    %1644 = vmatpush1.xpose.msra.mxu0 0.0
    %1645 = vmatprep.subr.mxu0 0.0
    %1646 = vmatpush1.xpose.msra.mxu0 0.0
    %1647 = vmatprep.subr.mxu0 0.0
    %1648 = vmatpush1.xpose.msra.mxu0 0.0
    %1649 = vmatprep.subr.mxu0 0.0
    %1650 = vmatpush1.xpose.msra.mxu0 0.0
    %1651 = vmatprep.subr.mxu0 0.0
    %1652 = vmatpush1.xpose.msra.mxu0 %v1458
    %1653 = vmatprep.subr.mxu0 0.0
    %1654 = vmatpush2.xpose.msra.mxu0 0.0
    %1655 = vmatprep.subr.mxu0 0.0
    %1656 = vmatpush2.xpose.msra.mxu0 0.0
    %1657 = vmatprep.subr.mxu0 0.0
    %1658 = vmatpush2.xpose.msra.mxu0 0.0
    %1659 = vmatprep.subr.mxu0 0.0
    %1660 = vmatpush2.xpose.msra.mxu0 0.0
    %1661 = vmatprep.subr.mxu0 0.0
    %1662 = vmatpush2.xpose.msra.mxu0 0.0
    %1663 = vmatprep.subr.mxu0 0.0
    %1664 = vmatpush2.xpose.msra.mxu0 0.0
    %1665 = vmatprep.subr.mxu0 0.0
    %1666 = vmatpush2.xpose.msra.mxu0 0.0
    %1667 = vmatprep.subr.mxu0 0.0
    %1668 = vmatpush2.xpose.msra.mxu0 0.0
    %1669 = vmatprep.subr.mxu0 0.0
    %1670 = vmatpush2.xpose.msra.mxu0 0.0
    %1671 = vmatprep.subr.mxu0 0.0
    %1672 = vmatpush2.xpose.msra.mxu0 0.0
    %1673 = vmatprep.subr.mxu0 0.0
    %1674 = vmatpush2.xpose.msra.mxu0 0.0
    %1675 = vmatprep.subr.mxu0 0.0
    %1676 = vmatpush2.xpose.msra.mxu0 0.0
    %1677 = vmatprep.subr.mxu0 0.0
    %1678 = vmatpush2.xpose.msra.mxu0 0.0
    %1679 = vmatprep.subr.mxu0 0.0
    %1680 = vmatpush2.xpose.msra.mxu0 0.0
    %1681 = vmatprep.subr.mxu0 0.0
    %1682 = vmatpush2.xpose.msra.mxu0 0.0
    %1683 = vmatprep.subr.mxu0 0.0
    %1684 = vmatpush2.xpose.msra.mxu0 0.0
    %1685 = vmatprep.mubr.f32.mxu0 0.0
    %1686 = vmatmul.mubr.f32.gmra.mxu0 %v1619
    %v1687 = vpop.f32.mrf.mxu0
    %v1688 = vadd.f32 0.0, %v1687
    %v1689 = vpop.f32.mrf.mxu0
    %1690 = vdwg.mxu0
    %v1691 = vmul.f32 %v1688, 0.25
    %v1692 = vsel %vm777, %v1691, -inf
    %1693 = vmax.xlane.f32.xlu0 %v1692
    %v1694 = vpop.xlane.xlu0 %1693
    %v1695 = vsub.f32 %v1691, %v1694
    %v1696 = vmul.f32 %v1695, 1.442695
    %v1697 = vpow.pop %v1696
    %v1698 = vsel %vm777, %v1697, 0.0
    %1699 = vadd.xlane.f32.xlu0 %v1698
    %v1700 = vpop.xlane.xlu0 %1699
    %v1701 = vrcp.pop %v1700
    %v1702 = vmul.f32 %v1697, %v1701
    %v1704 = vsel %vm777, %v1702, 0
    %1706 = vmatprep.subr.mxu0 0.0
    %1707 = vmatpush1.msra.mxu0 0.0
    %1708 = vmatprep.subr.mxu0 0.0
    %1709 = vmatpush1.msra.mxu0 0.0
    %1710 = vmatprep.subr.mxu0 0.0
    %1711 = vmatpush1.msra.mxu0 0.0
    %1712 = vmatprep.subr.mxu0 0.0
    %1713 = vmatpush1.msra.mxu0 0.0
    %1714 = vmatprep.subr.mxu0 0.0
    %1715 = vmatpush1.msra.mxu0 0.0
    %1716 = vmatprep.subr.mxu0 0.0
    %1717 = vmatpush1.msra.mxu0 0.0
    %1718 = vmatprep.subr.mxu0 0.0
    %1719 = vmatpush1.msra.mxu0 0.0
    %1720 = vmatprep.subr.mxu0 0.0
    %1721 = vmatpush1.msra.mxu0 0.0
    %1722 = vmatprep.subr.mxu0 0.0
    %1723 = vmatpush1.msra.mxu0 0.0
    %1724 = vmatprep.subr.mxu0 0.0
    %1725 = vmatpush1.msra.mxu0 0.0
    %1726 = vmatprep.subr.mxu0 0.0
    %1727 = vmatpush1.msra.mxu0 0.0
    %1728 = vmatprep.subr.mxu0 0.0
    %1729 = vmatpush1.msra.mxu0 0.0
    %1730 = vmatprep.subr.mxu0 0.0
    %1731 = vmatpush1.msra.mxu0 0.0
    %1732 = vmatprep.subr.mxu0 0.0
    %1733 = vmatpush1.msra.mxu0 0.0
    %1734 = vmatprep.subr.mxu0 0.0
    %1735 = vmatpush1.msra.mxu0 0.0
    %1736 = vmatprep.subr.mxu0 0.0
    %1737 = vmatpush1.msra.mxu0 %v1543
    %1738 = vmatprep.subr.mxu0 0.0
    %1739 = vmatpush2.msra.mxu0 0.0
    %1740 = vmatprep.subr.mxu0 0.0
    %1741 = vmatpush2.msra.mxu0 0.0
    %1742 = vmatprep.subr.mxu0 0.0
    %1743 = vmatpush2.msra.mxu0 0.0
    %1744 = vmatprep.subr.mxu0 0.0
    %1745 = vmatpush2.msra.mxu0 0.0
    %1746 = vmatprep.subr.mxu0 0.0
    %1747 = vmatpush2.msra.mxu0 0.0
    %1748 = vmatprep.subr.mxu0 0.0
    %1749 = vmatpush2.msra.mxu0 0.0
    %1750 = vmatprep.subr.mxu0 0.0
    %1751 = vmatpush2.msra.mxu0 0.0
    %1752 = vmatprep.subr.mxu0 0.0
    %1753 = vmatpush2.msra.mxu0 0.0
    %1754 = vmatprep.subr.mxu0 0.0
    %1755 = vmatpush2.msra.mxu0 0.0
    %1756 = vmatprep.subr.mxu0 0.0
    %1757 = vmatpush2.msra.mxu0 0.0
    %1758 = vmatprep.subr.mxu0 0.0
    %1759 = vmatpush2.msra.mxu0 0.0
    %1760 = vmatprep.subr.mxu0 0.0
    %1761 = vmatpush2.msra.mxu0 0.0
    %1762 = vmatprep.subr.mxu0 0.0
    %1763 = vmatpush2.msra.mxu0 0.0
    %1764 = vmatprep.subr.mxu0 0.0
    %1765 = vmatpush2.msra.mxu0 0.0
    %1766 = vmatprep.subr.mxu0 0.0
    %1767 = vmatpush2.msra.mxu0 0.0
    %1768 = vmatprep.subr.mxu0 0.0
    %1769 = vmatpush2.msra.mxu0 0.0
    %1770 = vmatprep.mubr.f32.mxu0 0.0
    %1771 = vmatmul.mubr.f32.gmra.mxu0 %v1704
    %v1772 = vpop.f32.mrf.mxu0
    %v1773 = vadd.f32 0.0, %v1772
    %v1774 = vpop.f32.mrf.mxu0
    %1775 = vdwg.mxu0
    %1777 = vrot.lane.b32.xlu0 %v1451, 16
    %v1778 = vpop.permute.xlu0 %1777
    %1781 = vrot.lane.b32.xlu0 %v1615, 32
    %v1782 = vpop.permute.xlu0 %1781
    %1785 = vrot.lane.b32.xlu0 %v1773, 48
    %v1786 = vpop.permute.xlu0 %1785
    %v1788 = vsel %vm1130, %v1293, %v1778
    %vm1789 = vcmask 261120
    %v1790 = vsel %vm1789, %v1788, %v1782
    %vm1791 = vcmask 392192
    %v1792 = vsel %vm1791, %v1790, %v1786
    %v1794 = vsel %vm1130, %v779, 0
    %v1797 = vsel %vm1130, %v1059, 0
    %1799 = vmatprep.subr.mxu0 0.0
    %1800 = vmatpush1.xpose.msra.mxu0 0.0
    %1801 = vmatprep.subr.mxu0 0.0
    %1802 = vmatpush1.xpose.msra.mxu0 0.0
    %1803 = vmatprep.subr.mxu0 0.0
    %1804 = vmatpush1.xpose.msra.mxu0 0.0
    %1805 = vmatprep.subr.mxu0 0.0
    %1806 = vmatpush1.xpose.msra.mxu0 0.0
    %1807 = vmatprep.subr.mxu0 0.0
    %1808 = vmatpush1.xpose.msra.mxu0 0.0
    %1809 = vmatprep.subr.mxu0 0.0
    %1810 = vmatpush1.xpose.msra.mxu0 0.0
    %1811 = vmatprep.subr.mxu0 0.0
    %1812 = vmatpush1.xpose.msra.mxu0 0.0
    %1813 = vmatprep.subr.mxu0 0.0
    %1814 = vmatpush1.xpose.msra.mxu0 0.0
    %1815 = vmatprep.subr.mxu0 0.0
    %1816 = vmatpush1.xpose.msra.mxu0 0.0
    %1817 = vmatprep.subr.mxu0 0.0
    %1818 = vmatpush1.xpose.msra.mxu0 0.0
    %1819 = vmatprep.subr.mxu0 0.0
    %1820 = vmatpush1.xpose.msra.mxu0 0.0
    %1821 = vmatprep.subr.mxu0 0.0
    %1822 = vmatpush1.xpose.msra.mxu0 0.0
    %1823 = vmatprep.subr.mxu0 0.0
    %1824 = vmatpush1.xpose.msra.mxu0 0.0
    %1825 = vmatprep.subr.mxu0 0.0
    %1826 = vmatpush1.xpose.msra.mxu0 0.0
    %1827 = vmatprep.subr.mxu0 0.0
    %1828 = vmatpush1.xpose.msra.mxu0 0.0
    %1829 = vmatprep.subr.mxu0 0.0
    %1830 = vmatpush1.xpose.msra.mxu0 %v1797
    %1831 = vmatprep.subr.mxu0 0.0
    %1832 = vmatpush2.xpose.msra.mxu0 0.0
    %1833 = vmatprep.subr.mxu0 0.0
    %1834 = vmatpush2.xpose.msra.mxu0 0.0
    %1835 = vmatprep.subr.mxu0 0.0
    %1836 = vmatpush2.xpose.msra.mxu0 0.0
    %1837 = vmatprep.subr.mxu0 0.0
    %1838 = vmatpush2.xpose.msra.mxu0 0.0
    %1839 = vmatprep.subr.mxu0 0.0
    %1840 = vmatpush2.xpose.msra.mxu0 0.0
    %1841 = vmatprep.subr.mxu0 0.0
    %1842 = vmatpush2.xpose.msra.mxu0 0.0
    %1843 = vmatprep.subr.mxu0 0.0
    %1844 = vmatpush2.xpose.msra.mxu0 0.0
    %1845 = vmatprep.subr.mxu0 0.0
    %1846 = vmatpush2.xpose.msra.mxu0 0.0
    %1847 = vmatprep.subr.mxu0 0.0
    %1848 = vmatpush2.xpose.msra.mxu0 0.0
    %1849 = vmatprep.subr.mxu0 0.0
    %1850 = vmatpush2.xpose.msra.mxu0 0.0
    %1851 = vmatprep.subr.mxu0 0.0
    %1852 = vmatpush2.xpose.msra.mxu0 0.0
    %1853 = vmatprep.subr.mxu0 0.0
    %1854 = vmatpush2.xpose.msra.mxu0 0.0
    %1855 = vmatprep.subr.mxu0 0.0
    %1856 = vmatpush2.xpose.msra.mxu0 0.0
    %1857 = vmatprep.subr.mxu0 0.0
    %1858 = vmatpush2.xpose.msra.mxu0 0.0
    %1859 = vmatprep.subr.mxu0 0.0
    %1860 = vmatpush2.xpose.msra.mxu0 0.0
    %1861 = vmatprep.subr.mxu0 0.0
    %1862 = vmatpush2.xpose.msra.mxu0 0.0
    %1863 = vmatprep.mubr.f32.mxu0 0.0
    %1864 = vmatmul.mubr.f32.gmra.mxu0 %v1794
    %v1865 = vpop.f32.mrf.mxu0
    %v1866 = vadd.f32 0.0, %v1865
    %v1867 = vpop.f32.mrf.mxu0
    %1868 = vdwg.mxu0
    %v1869 = vmul.f32 %v1866, 0.25
    %v1870 = vsel %vm777, %v1869, -inf
    %1871 = vmax.xlane.f32.xlu0 %v1870
    %v1872 = vpop.xlane.xlu0 %1871
    %v1873 = vsub.f32 %v1869, %v1872
    %v1874 = vmul.f32 %v1873, 1.442695
    %v1875 = vpow.pop %v1874
    %v1876 = vsel %vm777, %v1875, 0.0
    %1877 = vadd.xlane.f32.xlu0 %v1876
    %v1878 = vpop.xlane.xlu0 %1877
    %v1879 = vrcp.pop %v1878
    %v1880 = vmul.f32 %v1875, %v1879
    %1882 = vrot.lane.b32.xlu0 %v730, 32
    %v1883 = vpop.permute.xlu0 %1882
    %v1886 = vsel %vm777, %v1880, 0
    %1888 = vmatprep.subr.mxu0 0.0
    %1889 = vmatpush1.msra.mxu0 0.0
    %1890 = vmatprep.subr.mxu0 0.0
    %1891 = vmatpush1.msra.mxu0 0.0
    %1892 = vmatprep.subr.mxu0 0.0
    %1893 = vmatpush1.msra.mxu0 0.0
    %1894 = vmatprep.subr.mxu0 0.0
    %1895 = vmatpush1.msra.mxu0 0.0
    %1896 = vmatprep.subr.mxu0 0.0
    %1897 = vmatpush1.msra.mxu0 0.0
    %1898 = vmatprep.subr.mxu0 0.0
    %1899 = vmatpush1.msra.mxu0 0.0
    %1900 = vmatprep.subr.mxu0 0.0
    %1901 = vmatpush1.msra.mxu0 0.0
    %1902 = vmatprep.subr.mxu0 0.0
    %1903 = vmatpush1.msra.mxu0 0.0
    %1904 = vmatprep.subr.mxu0 0.0
    %1905 = vmatpush1.msra.mxu0 0.0
    %1906 = vmatprep.subr.mxu0 0.0
    %1907 = vmatpush1.msra.mxu0 0.0
    %1908 = vmatprep.subr.mxu0 0.0
    %1909 = vmatpush1.msra.mxu0 0.0
    %1910 = vmatprep.subr.mxu0 0.0
    %1911 = vmatpush1.msra.mxu0 0.0
    %1912 = vmatprep.subr.mxu0 0.0
    %1913 = vmatpush1.msra.mxu0 0.0
    %1914 = vmatprep.subr.mxu0 0.0
    %1915 = vmatpush1.msra.mxu0 0.0
    %1916 = vmatprep.subr.mxu0 0.0
    %1917 = vmatpush1.msra.mxu0 0.0
    %1918 = vmatprep.subr.mxu0 0.0
    %1919 = vmatpush1.msra.mxu0 %v1883
    %1920 = vmatprep.subr.mxu0 0.0
    %1921 = vmatpush2.msra.mxu0 0.0
    %1922 = vmatprep.subr.mxu0 0.0
    %1923 = vmatpush2.msra.mxu0 0.0
    %1924 = vmatprep.subr.mxu0 0.0
    %1925 = vmatpush2.msra.mxu0 0.0
    %1926 = vmatprep.subr.mxu0 0.0
    %1927 = vmatpush2.msra.mxu0 0.0
    %1928 = vmatprep.subr.mxu0 0.0
    %1929 = vmatpush2.msra.mxu0 0.0
    %1930 = vmatprep.subr.mxu0 0.0
    %1931 = vmatpush2.msra.mxu0 0.0
    %1932 = vmatprep.subr.mxu0 0.0
    %1933 = vmatpush2.msra.mxu0 0.0
    %1934 = vmatprep.subr.mxu0 0.0
    %1935 = vmatpush2.msra.mxu0 0.0
    %1936 = vmatprep.subr.mxu0 0.0
    %1937 = vmatpush2.msra.mxu0 0.0
    %1938 = vmatprep.subr.mxu0 0.0
    %1939 = vmatpush2.msra.mxu0 0.0
    %1940 = vmatprep.subr.mxu0 0.0
    %1941 = vmatpush2.msra.mxu0 0.0
    %1942 = vmatprep.subr.mxu0 0.0
    %1943 = vmatpush2.msra.mxu0 0.0
    %1944 = vmatprep.subr.mxu0 0.0
    %1945 = vmatpush2.msra.mxu0 0.0
    %1946 = vmatprep.subr.mxu0 0.0
    %1947 = vmatpush2.msra.mxu0 0.0
    %1948 = vmatprep.subr.mxu0 0.0
    %1949 = vmatpush2.msra.mxu0 0.0
    %1950 = vmatprep.subr.mxu0 0.0
    %1951 = vmatpush2.msra.mxu0 0.0
    %1952 = vmatprep.mubr.f32.mxu0 0.0
    %1953 = vmatmul.mubr.f32.gmra.mxu0 %v1886
    %v1954 = vpop.f32.mrf.mxu0
    %v1955 = vadd.f32 0.0, %v1954
    %v1956 = vpop.f32.mrf.mxu0
    %1957 = vdwg.mxu0
    %v1959 = vsel %vm1130, %v849, 0
    %1961 = vmatprep.subr.mxu0 0.0
    %1962 = vmatpush1.xpose.msra.mxu0 0.0
    %1963 = vmatprep.subr.mxu0 0.0
    %1964 = vmatpush1.xpose.msra.mxu0 0.0
    %1965 = vmatprep.subr.mxu0 0.0
    %1966 = vmatpush1.xpose.msra.mxu0 0.0
    %1967 = vmatprep.subr.mxu0 0.0
    %1968 = vmatpush1.xpose.msra.mxu0 0.0
    %1969 = vmatprep.subr.mxu0 0.0
    %1970 = vmatpush1.xpose.msra.mxu0 0.0
    %1971 = vmatprep.subr.mxu0 0.0
    %1972 = vmatpush1.xpose.msra.mxu0 0.0
    %1973 = vmatprep.subr.mxu0 0.0
    %1974 = vmatpush1.xpose.msra.mxu0 0.0
    %1975 = vmatprep.subr.mxu0 0.0
    %1976 = vmatpush1.xpose.msra.mxu0 0.0
    %1977 = vmatprep.subr.mxu0 0.0
    %1978 = vmatpush1.xpose.msra.mxu0 0.0
    %1979 = vmatprep.subr.mxu0 0.0
    %1980 = vmatpush1.xpose.msra.mxu0 0.0
    %1981 = vmatprep.subr.mxu0 0.0
    %1982 = vmatpush1.xpose.msra.mxu0 0.0
    %1983 = vmatprep.subr.mxu0 0.0
    %1984 = vmatpush1.xpose.msra.mxu0 0.0
    %1985 = vmatprep.subr.mxu0 0.0
    %1986 = vmatpush1.xpose.msra.mxu0 0.0
    %1987 = vmatprep.subr.mxu0 0.0
    %1988 = vmatpush1.xpose.msra.mxu0 0.0
    %1989 = vmatprep.subr.mxu0 0.0
    %1990 = vmatpush1.xpose.msra.mxu0 0.0
    %1991 = vmatprep.subr.mxu0 0.0
    %1992 = vmatpush1.xpose.msra.mxu0 %v1797
    %1993 = vmatprep.subr.mxu0 0.0
    %1994 = vmatpush2.xpose.msra.mxu0 0.0
    %1995 = vmatprep.subr.mxu0 0.0
    %1996 = vmatpush2.xpose.msra.mxu0 0.0
    %1997 = vmatprep.subr.mxu0 0.0
    %1998 = vmatpush2.xpose.msra.mxu0 0.0
    %1999 = vmatprep.subr.mxu0 0.0
    %2000 = vmatpush2.xpose.msra.mxu0 0.0
    %2001 = vmatprep.subr.mxu0 0.0
    %2002 = vmatpush2.xpose.msra.mxu0 0.0
    %2003 = vmatprep.subr.mxu0 0.0
    %2004 = vmatpush2.xpose.msra.mxu0 0.0
    %2005 = vmatprep.subr.mxu0 0.0
    %2006 = vmatpush2.xpose.msra.mxu0 0.0
    %2007 = vmatprep.subr.mxu0 0.0
    %2008 = vmatpush2.xpose.msra.mxu0 0.0
    %2009 = vmatprep.subr.mxu0 0.0
    %2010 = vmatpush2.xpose.msra.mxu0 0.0
    %2011 = vmatprep.subr.mxu0 0.0
    %2012 = vmatpush2.xpose.msra.mxu0 0.0
    %2013 = vmatprep.subr.mxu0 0.0
    %2014 = vmatpush2.xpose.msra.mxu0 0.0
    %2015 = vmatprep.subr.mxu0 0.0
    %2016 = vmatpush2.xpose.msra.mxu0 0.0
    %2017 = vmatprep.subr.mxu0 0.0
    %2018 = vmatpush2.xpose.msra.mxu0 0.0
    %2019 = vmatprep.subr.mxu0 0.0
    %2020 = vmatpush2.xpose.msra.mxu0 0.0
    %2021 = vmatprep.subr.mxu0 0.0
    %2022 = vmatpush2.xpose.msra.mxu0 0.0
    %2023 = vmatprep.subr.mxu0 0.0
    %2024 = vmatpush2.xpose.msra.mxu0 0.0
    %2025 = vmatprep.mubr.f32.mxu0 0.0
    %2026 = vmatmul.mubr.f32.gmra.mxu0 %v1959
    %v2027 = vpop.f32.mrf.mxu0
    %v2028 = vadd.f32 0.0, %v2027
    %v2029 = vpop.f32.mrf.mxu0
    %2030 = vdwg.mxu0
    %v2031 = vmul.f32 %v2028, 0.25
    %v2032 = vsel %vm777, %v2031, -inf
    %2033 = vmax.xlane.f32.xlu0 %v2032
    %v2034 = vpop.xlane.xlu0 %2033
    %v2035 = vsub.f32 %v2031, %v2034
    %v2036 = vmul.f32 %v2035, 1.442695
    %v2037 = vpow.pop %v2036
    %v2038 = vsel %vm777, %v2037, 0.0
    %2039 = vadd.xlane.f32.xlu0 %v2038
    %v2040 = vpop.xlane.xlu0 %2039
    %v2041 = vrcp.pop %v2040
    %v2042 = vmul.f32 %v2037, %v2041
    %v2044 = vsel %vm777, %v2042, 0
    %2046 = vmatprep.subr.mxu0 0.0
    %2047 = vmatpush1.msra.mxu0 0.0
    %2048 = vmatprep.subr.mxu0 0.0
    %2049 = vmatpush1.msra.mxu0 0.0
    %2050 = vmatprep.subr.mxu0 0.0
    %2051 = vmatpush1.msra.mxu0 0.0
    %2052 = vmatprep.subr.mxu0 0.0
    %2053 = vmatpush1.msra.mxu0 0.0
    %2054 = vmatprep.subr.mxu0 0.0
    %2055 = vmatpush1.msra.mxu0 0.0
    %2056 = vmatprep.subr.mxu0 0.0
    %2057 = vmatpush1.msra.mxu0 0.0
    %2058 = vmatprep.subr.mxu0 0.0
    %2059 = vmatpush1.msra.mxu0 0.0
    %2060 = vmatprep.subr.mxu0 0.0
    %2061 = vmatpush1.msra.mxu0 0.0
    %2062 = vmatprep.subr.mxu0 0.0
    %2063 = vmatpush1.msra.mxu0 0.0
    %2064 = vmatprep.subr.mxu0 0.0
    %2065 = vmatpush1.msra.mxu0 0.0
    %2066 = vmatprep.subr.mxu0 0.0
    %2067 = vmatpush1.msra.mxu0 0.0
    %2068 = vmatprep.subr.mxu0 0.0
    %2069 = vmatpush1.msra.mxu0 0.0
    %2070 = vmatprep.subr.mxu0 0.0
    %2071 = vmatpush1.msra.mxu0 0.0
    %2072 = vmatprep.subr.mxu0 0.0
    %2073 = vmatpush1.msra.mxu0 0.0
    %2074 = vmatprep.subr.mxu0 0.0
    %2075 = vmatpush1.msra.mxu0 0.0
    %2076 = vmatprep.subr.mxu0 0.0
    %2077 = vmatpush1.msra.mxu0 %v1883
    %2078 = vmatprep.subr.mxu0 0.0
    %2079 = vmatpush2.msra.mxu0 0.0
    %2080 = vmatprep.subr.mxu0 0.0
    %2081 = vmatpush2.msra.mxu0 0.0
    %2082 = vmatprep.subr.mxu0 0.0
    %2083 = vmatpush2.msra.mxu0 0.0
    %2084 = vmatprep.subr.mxu0 0.0
    %2085 = vmatpush2.msra.mxu0 0.0
    %2086 = vmatprep.subr.mxu0 0.0
    %2087 = vmatpush2.msra.mxu0 0.0
    %2088 = vmatprep.subr.mxu0 0.0
    %2089 = vmatpush2.msra.mxu0 0.0
    %2090 = vmatprep.subr.mxu0 0.0
    %2091 = vmatpush2.msra.mxu0 0.0
    %2092 = vmatprep.subr.mxu0 0.0
    %2093 = vmatpush2.msra.mxu0 0.0
    %2094 = vmatprep.subr.mxu0 0.0
    %2095 = vmatpush2.msra.mxu0 0.0
    %2096 = vmatprep.subr.mxu0 0.0
    %2097 = vmatpush2.msra.mxu0 0.0
    %2098 = vmatprep.subr.mxu0 0.0
    %2099 = vmatpush2.msra.mxu0 0.0
    %2100 = vmatprep.subr.mxu0 0.0
    %2101 = vmatpush2.msra.mxu0 0.0
    %2102 = vmatprep.subr.mxu0 0.0
    %2103 = vmatpush2.msra.mxu0 0.0
    %2104 = vmatprep.subr.mxu0 0.0
    %2105 = vmatpush2.msra.mxu0 0.0
    %2106 = vmatprep.subr.mxu0 0.0
    %2107 = vmatpush2.msra.mxu0 0.0
    %2108 = vmatprep.subr.mxu0 0.0
    %2109 = vmatpush2.msra.mxu0 0.0
    %2110 = vmatprep.mubr.f32.mxu0 0.0
    %2111 = vmatmul.mubr.f32.gmra.mxu0 %v2044
    %v2112 = vpop.f32.mrf.mxu0
    %v2113 = vadd.f32 0.0, %v2112
    %v2114 = vpop.f32.mrf.mxu0
    %2115 = vdwg.mxu0
    %v2117 = vsel %vm1130, %v919, 0
    %v2120 = vsel %vm1130, %v1129, 0
    %2122 = vmatprep.subr.mxu0 0.0
    %2123 = vmatpush1.xpose.msra.mxu0 0.0
    %2124 = vmatprep.subr.mxu0 0.0
    %2125 = vmatpush1.xpose.msra.mxu0 0.0
    %2126 = vmatprep.subr.mxu0 0.0
    %2127 = vmatpush1.xpose.msra.mxu0 0.0
    %2128 = vmatprep.subr.mxu0 0.0
    %2129 = vmatpush1.xpose.msra.mxu0 0.0
    %2130 = vmatprep.subr.mxu0 0.0
    %2131 = vmatpush1.xpose.msra.mxu0 0.0
    %2132 = vmatprep.subr.mxu0 0.0
    %2133 = vmatpush1.xpose.msra.mxu0 0.0
    %2134 = vmatprep.subr.mxu0 0.0
    %2135 = vmatpush1.xpose.msra.mxu0 0.0
    %2136 = vmatprep.subr.mxu0 0.0
    %2137 = vmatpush1.xpose.msra.mxu0 0.0
    %2138 = vmatprep.subr.mxu0 0.0
    %2139 = vmatpush1.xpose.msra.mxu0 0.0
    %2140 = vmatprep.subr.mxu0 0.0
    %2141 = vmatpush1.xpose.msra.mxu0 0.0
    %2142 = vmatprep.subr.mxu0 0.0
    %2143 = vmatpush1.xpose.msra.mxu0 0.0
    %2144 = vmatprep.subr.mxu0 0.0
    %2145 = vmatpush1.xpose.msra.mxu0 0.0
    %2146 = vmatprep.subr.mxu0 0.0
    %2147 = vmatpush1.xpose.msra.mxu0 0.0
    %2148 = vmatprep.subr.mxu0 0.0
    %2149 = vmatpush1.xpose.msra.mxu0 0.0
    %2150 = vmatprep.subr.mxu0 0.0
    %2151 = vmatpush1.xpose.msra.mxu0 0.0
    %2152 = vmatprep.subr.mxu0 0.0
    %2153 = vmatpush1.xpose.msra.mxu0 %v2120
    %2154 = vmatprep.subr.mxu0 0.0
    %2155 = vmatpush2.xpose.msra.mxu0 0.0
    %2156 = vmatprep.subr.mxu0 0.0
    %2157 = vmatpush2.xpose.msra.mxu0 0.0
    %2158 = vmatprep.subr.mxu0 0.0
    %2159 = vmatpush2.xpose.msra.mxu0 0.0
    %2160 = vmatprep.subr.mxu0 0.0
    %2161 = vmatpush2.xpose.msra.mxu0 0.0
    %2162 = vmatprep.subr.mxu0 0.0
    %2163 = vmatpush2.xpose.msra.mxu0 0.0
    %2164 = vmatprep.subr.mxu0 0.0
    %2165 = vmatpush2.xpose.msra.mxu0 0.0
    %2166 = vmatprep.subr.mxu0 0.0
    %2167 = vmatpush2.xpose.msra.mxu0 0.0
    %2168 = vmatprep.subr.mxu0 0.0
    %2169 = vmatpush2.xpose.msra.mxu0 0.0
    %2170 = vmatprep.subr.mxu0 0.0
    %2171 = vmatpush2.xpose.msra.mxu0 0.0
    %2172 = vmatprep.subr.mxu0 0.0
    %2173 = vmatpush2.xpose.msra.mxu0 0.0
    %2174 = vmatprep.subr.mxu0 0.0
    %2175 = vmatpush2.xpose.msra.mxu0 0.0
    %2176 = vmatprep.subr.mxu0 0.0
    %2177 = vmatpush2.xpose.msra.mxu0 0.0
    %2178 = vmatprep.subr.mxu0 0.0
    %2179 = vmatpush2.xpose.msra.mxu0 0.0
    %2180 = vmatprep.subr.mxu0 0.0
    %2181 = vmatpush2.xpose.msra.mxu0 0.0
    %2182 = vmatprep.subr.mxu0 0.0
    %2183 = vmatpush2.xpose.msra.mxu0 0.0
    %2184 = vmatprep.subr.mxu0 0.0
    %2185 = vmatpush2.xpose.msra.mxu0 0.0
    %2186 = vmatprep.mubr.f32.mxu0 0.0
    %2187 = vmatmul.mubr.f32.gmra.mxu0 %v2117
    %v2188 = vpop.f32.mrf.mxu0
    %v2189 = vadd.f32 0.0, %v2188
    %v2190 = vpop.f32.mrf.mxu0
    %2191 = vdwg.mxu0
    %v2192 = vmul.f32 %v2189, 0.25
    %v2193 = vsel %vm777, %v2192, -inf
    %2194 = vmax.xlane.f32.xlu0 %v2193
    %v2195 = vpop.xlane.xlu0 %2194
    %v2196 = vsub.f32 %v2192, %v2195
    %v2197 = vmul.f32 %v2196, 1.442695
    %v2198 = vpow.pop %v2197
    %v2199 = vsel %vm777, %v2198, 0.0
    %2200 = vadd.xlane.f32.xlu0 %v2199
    %v2201 = vpop.xlane.xlu0 %2200
    %v2202 = vrcp.pop %v2201
    %v2203 = vmul.f32 %v2198, %v2202
    %2204 = vrot.lane.b32.xlu0 %v730, 16
    %v2205 = vpop.permute.xlu0 %2204
    %v2208 = vsel %vm777, %v2203, 0
    %2210 = vmatprep.subr.mxu0 0.0
    %2211 = vmatpush1.msra.mxu0 0.0
    %2212 = vmatprep.subr.mxu0 0.0
    %2213 = vmatpush1.msra.mxu0 0.0
    %2214 = vmatprep.subr.mxu0 0.0
    %2215 = vmatpush1.msra.mxu0 0.0
    %2216 = vmatprep.subr.mxu0 0.0
    %2217 = vmatpush1.msra.mxu0 0.0
    %2218 = vmatprep.subr.mxu0 0.0
    %2219 = vmatpush1.msra.mxu0 0.0
    %2220 = vmatprep.subr.mxu0 0.0
    %2221 = vmatpush1.msra.mxu0 0.0
    %2222 = vmatprep.subr.mxu0 0.0
    %2223 = vmatpush1.msra.mxu0 0.0
    %2224 = vmatprep.subr.mxu0 0.0
    %2225 = vmatpush1.msra.mxu0 0.0
    %2226 = vmatprep.subr.mxu0 0.0
    %2227 = vmatpush1.msra.mxu0 0.0
    %2228 = vmatprep.subr.mxu0 0.0
    %2229 = vmatpush1.msra.mxu0 0.0
    %2230 = vmatprep.subr.mxu0 0.0
    %2231 = vmatpush1.msra.mxu0 0.0
    %2232 = vmatprep.subr.mxu0 0.0
    %2233 = vmatpush1.msra.mxu0 0.0
    %2234 = vmatprep.subr.mxu0 0.0
    %2235 = vmatpush1.msra.mxu0 0.0
    %2236 = vmatprep.subr.mxu0 0.0
    %2237 = vmatpush1.msra.mxu0 0.0
    %2238 = vmatprep.subr.mxu0 0.0
    %2239 = vmatpush1.msra.mxu0 0.0
    %2240 = vmatprep.subr.mxu0 0.0
    %2241 = vmatpush1.msra.mxu0 %v2205
    %2242 = vmatprep.subr.mxu0 0.0
    %2243 = vmatpush2.msra.mxu0 0.0
    %2244 = vmatprep.subr.mxu0 0.0
    %2245 = vmatpush2.msra.mxu0 0.0
    %2246 = vmatprep.subr.mxu0 0.0
    %2247 = vmatpush2.msra.mxu0 0.0
    %2248 = vmatprep.subr.mxu0 0.0
    %2249 = vmatpush2.msra.mxu0 0.0
    %2250 = vmatprep.subr.mxu0 0.0
    %2251 = vmatpush2.msra.mxu0 0.0
    %2252 = vmatprep.subr.mxu0 0.0
    %2253 = vmatpush2.msra.mxu0 0.0
    %2254 = vmatprep.subr.mxu0 0.0
    %2255 = vmatpush2.msra.mxu0 0.0
    %2256 = vmatprep.subr.mxu0 0.0
    %2257 = vmatpush2.msra.mxu0 0.0
    %2258 = vmatprep.subr.mxu0 0.0
    %2259 = vmatpush2.msra.mxu0 0.0
    %2260 = vmatprep.subr.mxu0 0.0
    %2261 = vmatpush2.msra.mxu0 0.0
    %2262 = vmatprep.subr.mxu0 0.0
    %2263 = vmatpush2.msra.mxu0 0.0
    %2264 = vmatprep.subr.mxu0 0.0
    %2265 = vmatpush2.msra.mxu0 0.0
    %2266 = vmatprep.subr.mxu0 0.0
    %2267 = vmatpush2.msra.mxu0 0.0
    %2268 = vmatprep.subr.mxu0 0.0
    %2269 = vmatpush2.msra.mxu0 0.0
    %2270 = vmatprep.subr.mxu0 0.0
    %2271 = vmatpush2.msra.mxu0 0.0
    %2272 = vmatprep.subr.mxu0 0.0
    %2273 = vmatpush2.msra.mxu0 0.0
    %2274 = vmatprep.mubr.f32.mxu0 0.0
    %2275 = vmatmul.mubr.f32.gmra.mxu0 %v2208
    %v2276 = vpop.f32.mrf.mxu0
    %v2277 = vadd.f32 0.0, %v2276
    %v2278 = vpop.f32.mrf.mxu0
    %2279 = vdwg.mxu0
    %v2281 = vsel %vm1130, %v989, 0
    %2283 = vmatprep.subr.mxu0 0.0
    %2284 = vmatpush1.xpose.msra.mxu0 0.0
    %2285 = vmatprep.subr.mxu0 0.0
    %2286 = vmatpush1.xpose.msra.mxu0 0.0
    %2287 = vmatprep.subr.mxu0 0.0
    %2288 = vmatpush1.xpose.msra.mxu0 0.0
    %2289 = vmatprep.subr.mxu0 0.0
    %2290 = vmatpush1.xpose.msra.mxu0 0.0
    %2291 = vmatprep.subr.mxu0 0.0
    %2292 = vmatpush1.xpose.msra.mxu0 0.0
    %2293 = vmatprep.subr.mxu0 0.0
    %2294 = vmatpush1.xpose.msra.mxu0 0.0
    %2295 = vmatprep.subr.mxu0 0.0
    %2296 = vmatpush1.xpose.msra.mxu0 0.0
    %2297 = vmatprep.subr.mxu0 0.0
    %2298 = vmatpush1.xpose.msra.mxu0 0.0
    %2299 = vmatprep.subr.mxu0 0.0
    %2300 = vmatpush1.xpose.msra.mxu0 0.0
    %2301 = vmatprep.subr.mxu0 0.0
    %2302 = vmatpush1.xpose.msra.mxu0 0.0
    %2303 = vmatprep.subr.mxu0 0.0
    %2304 = vmatpush1.xpose.msra.mxu0 0.0
    %2305 = vmatprep.subr.mxu0 0.0
    %2306 = vmatpush1.xpose.msra.mxu0 0.0
    %2307 = vmatprep.subr.mxu0 0.0
    %2308 = vmatpush1.xpose.msra.mxu0 0.0
    %2309 = vmatprep.subr.mxu0 0.0
    %2310 = vmatpush1.xpose.msra.mxu0 0.0
    %2311 = vmatprep.subr.mxu0 0.0
    %2312 = vmatpush1.xpose.msra.mxu0 0.0
    %2313 = vmatprep.subr.mxu0 0.0
    %2314 = vmatpush1.xpose.msra.mxu0 %v2120
    %2315 = vmatprep.subr.mxu0 0.0
    %2316 = vmatpush2.xpose.msra.mxu0 0.0
    %2317 = vmatprep.subr.mxu0 0.0
    %2318 = vmatpush2.xpose.msra.mxu0 0.0
    %2319 = vmatprep.subr.mxu0 0.0
    %2320 = vmatpush2.xpose.msra.mxu0 0.0
    %2321 = vmatprep.subr.mxu0 0.0
    %2322 = vmatpush2.xpose.msra.mxu0 0.0
    %2323 = vmatprep.subr.mxu0 0.0
    %2324 = vmatpush2.xpose.msra.mxu0 0.0
    %2325 = vmatprep.subr.mxu0 0.0
    %2326 = vmatpush2.xpose.msra.mxu0 0.0
    %2327 = vmatprep.subr.mxu0 0.0
    %2328 = vmatpush2.xpose.msra.mxu0 0.0
    %2329 = vmatprep.subr.mxu0 0.0
    %2330 = vmatpush2.xpose.msra.mxu0 0.0
    %2331 = vmatprep.subr.mxu0 0.0
    %2332 = vmatpush2.xpose.msra.mxu0 0.0
    %2333 = vmatprep.subr.mxu0 0.0
    %2334 = vmatpush2.xpose.msra.mxu0 0.0
    %2335 = vmatprep.subr.mxu0 0.0
    %2336 = vmatpush2.xpose.msra.mxu0 0.0
    %2337 = vmatprep.subr.mxu0 0.0
    %2338 = vmatpush2.xpose.msra.mxu0 0.0
    %2339 = vmatprep.subr.mxu0 0.0
    %2340 = vmatpush2.xpose.msra.mxu0 0.0
    %2341 = vmatprep.subr.mxu0 0.0
    %2342 = vmatpush2.xpose.msra.mxu0 0.0
    %2343 = vmatprep.subr.mxu0 0.0
    %2344 = vmatpush2.xpose.msra.mxu0 0.0
    %2345 = vmatprep.subr.mxu0 0.0
    %2346 = vmatpush2.xpose.msra.mxu0 0.0
    %2347 = vmatprep.mubr.f32.mxu0 0.0
    %2348 = vmatmul.mubr.f32.gmra.mxu0 %v2281
    %v2349 = vpop.f32.mrf.mxu0
    %v2350 = vadd.f32 0.0, %v2349
    %v2351 = vpop.f32.mrf.mxu0
    %2352 = vdwg.mxu0
    %v2353 = vmul.f32 %v2350, 0.25
    %v2354 = vsel %vm777, %v2353, -inf
    %2355 = vmax.xlane.f32.xlu0 %v2354
    %v2356 = vpop.xlane.xlu0 %2355
    %v2357 = vsub.f32 %v2353, %v2356
    %v2358 = vmul.f32 %v2357, 1.442695
    %v2359 = vpow.pop %v2358
    %v2360 = vsel %vm777, %v2359, 0.0
    %2361 = vadd.xlane.f32.xlu0 %v2360
    %v2362 = vpop.xlane.xlu0 %2361
    %v2363 = vrcp.pop %v2362
    %v2364 = vmul.f32 %v2359, %v2363
    %v2366 = vsel %vm777, %v2364, 0
    %2368 = vmatprep.subr.mxu0 0.0
    %2369 = vmatpush1.msra.mxu0 0.0
    %2370 = vmatprep.subr.mxu0 0.0
    %2371 = vmatpush1.msra.mxu0 0.0
    %2372 = vmatprep.subr.mxu0 0.0
    %2373 = vmatpush1.msra.mxu0 0.0
    %2374 = vmatprep.subr.mxu0 0.0
    %2375 = vmatpush1.msra.mxu0 0.0
    %2376 = vmatprep.subr.mxu0 0.0
    %2377 = vmatpush1.msra.mxu0 0.0
    %2378 = vmatprep.subr.mxu0 0.0
    %2379 = vmatpush1.msra.mxu0 0.0
    %2380 = vmatprep.subr.mxu0 0.0
    %2381 = vmatpush1.msra.mxu0 0.0
    %2382 = vmatprep.subr.mxu0 0.0
    %2383 = vmatpush1.msra.mxu0 0.0
    %2384 = vmatprep.subr.mxu0 0.0
    %2385 = vmatpush1.msra.mxu0 0.0
    %2386 = vmatprep.subr.mxu0 0.0
    %2387 = vmatpush1.msra.mxu0 0.0
    %2388 = vmatprep.subr.mxu0 0.0
    %2389 = vmatpush1.msra.mxu0 0.0
    %2390 = vmatprep.subr.mxu0 0.0
    %2391 = vmatpush1.msra.mxu0 0.0
    %2392 = vmatprep.subr.mxu0 0.0
    %2393 = vmatpush1.msra.mxu0 0.0
    %2394 = vmatprep.subr.mxu0 0.0
    %2395 = vmatpush1.msra.mxu0 0.0
    %2396 = vmatprep.subr.mxu0 0.0
    %2397 = vmatpush1.msra.mxu0 0.0
    %2398 = vmatprep.subr.mxu0 0.0
    %2399 = vmatpush1.msra.mxu0 %v2205
    %2400 = vmatprep.subr.mxu0 0.0
    %2401 = vmatpush2.msra.mxu0 0.0
    %2402 = vmatprep.subr.mxu0 0.0
    %2403 = vmatpush2.msra.mxu0 0.0
    %2404 = vmatprep.subr.mxu0 0.0
    %2405 = vmatpush2.msra.mxu0 0.0
    %2406 = vmatprep.subr.mxu0 0.0
    %2407 = vmatpush2.msra.mxu0 0.0
    %2408 = vmatprep.subr.mxu0 0.0
    %2409 = vmatpush2.msra.mxu0 0.0
    %2410 = vmatprep.subr.mxu0 0.0
    %2411 = vmatpush2.msra.mxu0 0.0
    %2412 = vmatprep.subr.mxu0 0.0
    %2413 = vmatpush2.msra.mxu0 0.0
    %2414 = vmatprep.subr.mxu0 0.0
    %2415 = vmatpush2.msra.mxu0 0.0
    %2416 = vmatprep.subr.mxu0 0.0
    %2417 = vmatpush2.msra.mxu0 0.0
    %2418 = vmatprep.subr.mxu0 0.0
    %2419 = vmatpush2.msra.mxu0 0.0
    %2420 = vmatprep.subr.mxu0 0.0
    %2421 = vmatpush2.msra.mxu0 0.0
    %2422 = vmatprep.subr.mxu0 0.0
    %2423 = vmatpush2.msra.mxu0 0.0
    %2424 = vmatprep.subr.mxu0 0.0
    %2425 = vmatpush2.msra.mxu0 0.0
    %2426 = vmatprep.subr.mxu0 0.0
    %2427 = vmatpush2.msra.mxu0 0.0
    %2428 = vmatprep.subr.mxu0 0.0
    %2429 = vmatpush2.msra.mxu0 0.0
    %2430 = vmatprep.subr.mxu0 0.0
    %2431 = vmatpush2.msra.mxu0 0.0
    %2432 = vmatprep.mubr.f32.mxu0 0.0
    %2433 = vmatmul.mubr.f32.gmra.mxu0 %v2366
    %v2434 = vpop.f32.mrf.mxu0
    %v2435 = vadd.f32 0.0, %v2434
    %v2436 = vpop.f32.mrf.mxu0
    %2437 = vdwg.mxu0
    %2439 = vrot.lane.b32.xlu0 %v2113, 16
    %v2440 = vpop.permute.xlu0 %2439
    %2443 = vrot.lane.b32.xlu0 %v2277, 32
    %v2444 = vpop.permute.xlu0 %2443
    %2447 = vrot.lane.b32.xlu0 %v2435, 48
    %v2448 = vpop.permute.xlu0 %2447
    %v2450 = vsel %vm1130, %v1955, %v2440
    %v2451 = vsel %vm1789, %v2450, %v2444
    %v2452 = vsel %vm1791, %v2451, %v2448
    %v2454 = vsel %vm628, %v1792, 0
    %v2457 = vsel %vm628, %v2452, 0
    %2459 = vmatprep.subr.mxu0 0.0
    %2460 = vmatpush1.msra.mxu0 0.0
    %2461 = vmatprep.subr.mxu0 0.0
    %2462 = vmatpush1.msra.mxu0 0.0
    %2463 = vmatprep.subr.mxu0 0.0
    %2464 = vmatpush1.msra.mxu0 0.0
    %2465 = vmatprep.subr.mxu0 0.0
    %2466 = vmatpush1.msra.mxu0 0.0
    %2467 = vmatprep.subr.mxu0 0.0
    %2468 = vmatpush1.msra.mxu0 0.0
    %2469 = vmatprep.subr.mxu0 0.0
    %2470 = vmatpush1.msra.mxu0 0.0
    %2471 = vmatprep.subr.mxu0 0.0
    %2472 = vmatpush1.msra.mxu0 0.0
    %2473 = vmatprep.subr.mxu0 0.0
    %2474 = vmatpush1.msra.mxu0 0.0
    %2475 = vmatprep.subr.mxu0 0.0
    %2476 = vmatpush1.msra.mxu0 %v453
    %2477 = vmatprep.subr.mxu0 0.0
    %2478 = vmatpush1.msra.mxu0 %v452
    %2479 = vmatprep.subr.mxu0 0.0
    %2480 = vmatpush1.msra.mxu0 %v451
    %2481 = vmatprep.subr.mxu0 0.0
    %2482 = vmatpush1.msra.mxu0 %v450
    %2483 = vmatprep.subr.mxu0 0.0
    %2484 = vmatpush1.msra.mxu0 %v449
    %2485 = vmatprep.subr.mxu0 0.0
    %2486 = vmatpush1.msra.mxu0 %v448
    %2487 = vmatprep.subr.mxu0 0.0
    %2488 = vmatpush1.msra.mxu0 %v447
    %2489 = vmatprep.subr.mxu0 0.0
    %2490 = vmatpush1.msra.mxu0 %v446
    %2491 = vmatprep.subr.mxu0 0.0
    %2492 = vmatpush2.msra.mxu0 0.0
    %2493 = vmatprep.subr.mxu0 0.0
    %2494 = vmatpush2.msra.mxu0 0.0
    %2495 = vmatprep.subr.mxu0 0.0
    %2496 = vmatpush2.msra.mxu0 0.0
    %2497 = vmatprep.subr.mxu0 0.0
    %2498 = vmatpush2.msra.mxu0 0.0
    %2499 = vmatprep.subr.mxu0 0.0
    %2500 = vmatpush2.msra.mxu0 0.0
    %2501 = vmatprep.subr.mxu0 0.0
    %2502 = vmatpush2.msra.mxu0 0.0
    %2503 = vmatprep.subr.mxu0 0.0
    %2504 = vmatpush2.msra.mxu0 0.0
    %2505 = vmatprep.subr.mxu0 0.0
    %2506 = vmatpush2.msra.mxu0 0.0
    %2507 = vmatprep.subr.mxu0 0.0
    %2508 = vmatpush2.msra.mxu0 0.0
    %2509 = vmatprep.subr.mxu0 0.0
    %2510 = vmatpush2.msra.mxu0 0.0
    %2511 = vmatprep.subr.mxu0 0.0
    %2512 = vmatpush2.msra.mxu0 0.0
    %2513 = vmatprep.subr.mxu0 0.0
    %2514 = vmatpush2.msra.mxu0 0.0
    %2515 = vmatprep.subr.mxu0 0.0
    %2516 = vmatpush2.msra.mxu0 0.0
    %2517 = vmatprep.subr.mxu0 0.0
    %2518 = vmatpush2.msra.mxu0 0.0
    %2519 = vmatprep.subr.mxu0 0.0
    %2520 = vmatpush2.msra.mxu0 0.0
    %2521 = vmatprep.subr.mxu0 0.0
    %2522 = vmatpush2.msra.mxu0 0.0
    %2523 = vmatprep.mubr.f32.mxu0 0.0
    %2524 = vmatmul.mubr.f32.gmra.mxu0 %v2454
    %v2525 = vpop.f32.mrf.mxu0
    %v2526 = vadd.f32 0.0, %v2525
    %v2527 = vpop.f32.mrf.mxu0
    %2528 = vmatprep.mubr.f32.mxu0 0.0
    %2529 = vmatmul.mubr.f32.gmra.mxu0 %v2457
    %v2530 = vpop.f32.mrf.mxu0
    %v2531 = vadd.f32 0.0, %v2530
    %v2532 = vpop.f32.mrf.mxu0
    %2533 = vdwg.mxu0
    %v2534 = vadd.f32 %v435, %v2526
    %v2535 = vadd.f32 %v436, %v2531
    %v2537 = vsel %vm628, %v2534, 0
    %v2540 = vsel %vm628, %v2535, 0
    %2542 = vmatprep.subr.mxu0 0.0
    %2543 = vmatpush1.msra.mxu0 0.0
    %2544 = vmatprep.subr.mxu0 0.0
    %2545 = vmatpush1.msra.mxu0 0.0
    %2546 = vmatprep.subr.mxu0 0.0
    %2547 = vmatpush1.msra.mxu0 0.0
    %2548 = vmatprep.subr.mxu0 0.0
    %2549 = vmatpush1.msra.mxu0 0.0
    %2550 = vmatprep.subr.mxu0 0.0
    %2551 = vmatpush1.msra.mxu0 0.0
    %2552 = vmatprep.subr.mxu0 0.0
    %2553 = vmatpush1.msra.mxu0 0.0
    %2554 = vmatprep.subr.mxu0 0.0
    %2555 = vmatpush1.msra.mxu0 0.0
    %2556 = vmatprep.subr.mxu0 0.0
    %2557 = vmatpush1.msra.mxu0 0.0
    %2558 = vmatprep.subr.mxu0 0.0
    %2559 = vmatpush1.msra.mxu0 %v469
    %2560 = vmatprep.subr.mxu0 0.0
    %2561 = vmatpush1.msra.mxu0 %v468
    %2562 = vmatprep.subr.mxu0 0.0
    %2563 = vmatpush1.msra.mxu0 %v467
    %2564 = vmatprep.subr.mxu0 0.0
    %2565 = vmatpush1.msra.mxu0 %v466
    %2566 = vmatprep.subr.mxu0 0.0
    %2567 = vmatpush1.msra.mxu0 %v465
    %2568 = vmatprep.subr.mxu0 0.0
    %2569 = vmatpush1.msra.mxu0 %v464
    %2570 = vmatprep.subr.mxu0 0.0
    %2571 = vmatpush1.msra.mxu0 %v463
    %2572 = vmatprep.subr.mxu0 0.0
    %2573 = vmatpush1.msra.mxu0 %v462
    %2574 = vmatprep.subr.mxu0 0.0
    %2575 = vmatpush2.msra.mxu0 0.0
    %2576 = vmatprep.subr.mxu0 0.0
    %2577 = vmatpush2.msra.mxu0 0.0
    %2578 = vmatprep.subr.mxu0 0.0
    %2579 = vmatpush2.msra.mxu0 0.0
    %2580 = vmatprep.subr.mxu0 0.0
    %2581 = vmatpush2.msra.mxu0 0.0
    %2582 = vmatprep.subr.mxu0 0.0
    %2583 = vmatpush2.msra.mxu0 0.0
    %2584 = vmatprep.subr.mxu0 0.0
    %2585 = vmatpush2.msra.mxu0 0.0
    %2586 = vmatprep.subr.mxu0 0.0
    %2587 = vmatpush2.msra.mxu0 0.0
    %2588 = vmatprep.subr.mxu0 0.0
    %2589 = vmatpush2.msra.mxu0 0.0
    %2590 = vmatprep.subr.mxu0 0.0
    %2591 = vmatpush2.msra.mxu0 0.0
    %2592 = vmatprep.subr.mxu0 0.0
    %2593 = vmatpush2.msra.mxu0 0.0
    %2594 = vmatprep.subr.mxu0 0.0
    %2595 = vmatpush2.msra.mxu0 0.0
    %2596 = vmatprep.subr.mxu0 0.0
    %2597 = vmatpush2.msra.mxu0 0.0
    %2598 = vmatprep.subr.mxu0 0.0
    %2599 = vmatpush2.msra.mxu0 0.0
    %2600 = vmatprep.subr.mxu0 0.0
    %2601 = vmatpush2.msra.mxu0 0.0
    %2602 = vmatprep.subr.mxu0 0.0
    %2603 = vmatpush2.msra.mxu0 0.0
    %2604 = vmatprep.subr.mxu0 0.0
    %2605 = vmatpush2.msra.mxu0 0.0
    %2606 = vmatprep.mubr.f32.mxu0 0.0
    %2607 = vmatmul.mubr.f32.gmra.mxu0 %v2537
    %v2608 = vpop.f32.mrf.mxu0
    %v2609 = vadd.f32 0.0, %v2608
    %v2610 = vpop.f32.mrf.mxu0
    %2611 = vmatprep.mubr.f32.mxu0 0.0
    %2612 = vmatmul.mubr.f32.gmra.mxu0 %v2540
    %v2613 = vpop.f32.mrf.mxu0
    %v2614 = vadd.f32 0.0, %v2613
    %v2615 = vpop.f32.mrf.mxu0
    %2616 = vdwg.mxu0
    %v2618 = vsel %vm628, %v458, 0
    %v2621 = vsel %vm628, %v459, 0
    %v2624 = vsel %vm628, %v460, 0
    %v2627 = vsel %vm628, %v461, 0
    %2629 = vmatprep.subr.mxu0 0.0
    %2630 = vmatpush1.msra.mxu0 0.0
    %2631 = vmatprep.subr.mxu0 0.0
    %2632 = vmatpush1.msra.mxu0 0.0
    %2633 = vmatprep.subr.mxu0 0.0
    %2634 = vmatpush1.msra.mxu0 0.0
    %2635 = vmatprep.subr.mxu0 0.0
    %2636 = vmatpush1.msra.mxu0 0.0
    %2637 = vmatprep.subr.mxu0 0.0
    %2638 = vmatpush1.msra.mxu0 0.0
    %2639 = vmatprep.subr.mxu0 0.0
    %2640 = vmatpush1.msra.mxu0 0.0
    %2641 = vmatprep.subr.mxu0 0.0
    %2642 = vmatpush1.msra.mxu0 0.0
    %2643 = vmatprep.subr.mxu0 0.0
    %2644 = vmatpush1.msra.mxu0 0.0
    %2645 = vmatprep.subr.mxu0 0.0
    %2646 = vmatpush1.msra.mxu0 %v477
    %2647 = vmatprep.subr.mxu0 0.0
    %2648 = vmatpush1.msra.mxu0 %v476
    %2649 = vmatprep.subr.mxu0 0.0
    %2650 = vmatpush1.msra.mxu0 %v475
    %2651 = vmatprep.subr.mxu0 0.0
    %2652 = vmatpush1.msra.mxu0 %v474
    %2653 = vmatprep.subr.mxu0 0.0
    %2654 = vmatpush1.msra.mxu0 %v473
    %2655 = vmatprep.subr.mxu0 0.0
    %2656 = vmatpush1.msra.mxu0 %v472
    %2657 = vmatprep.subr.mxu0 0.0
    %2658 = vmatpush1.msra.mxu0 %v471
    %2659 = vmatprep.subr.mxu0 0.0
    %2660 = vmatpush1.msra.mxu0 %v470
    %2661 = vmatprep.subr.mxu0 0.0
    %2662 = vmatpush2.msra.mxu0 0.0
    %2663 = vmatprep.subr.mxu0 0.0
    %2664 = vmatpush2.msra.mxu0 0.0
    %2665 = vmatprep.subr.mxu0 0.0
    %2666 = vmatpush2.msra.mxu0 0.0
    %2667 = vmatprep.subr.mxu0 0.0
    %2668 = vmatpush2.msra.mxu0 0.0
    %2669 = vmatprep.subr.mxu0 0.0
    %2670 = vmatpush2.msra.mxu0 0.0
    %2671 = vmatprep.subr.mxu0 0.0
    %2672 = vmatpush2.msra.mxu0 0.0
    %2673 = vmatprep.subr.mxu0 0.0
    %2674 = vmatpush2.msra.mxu0 0.0
    %2675 = vmatprep.subr.mxu0 0.0
    %2676 = vmatpush2.msra.mxu0 0.0
    %2677 = vmatprep.subr.mxu0 0.0
    %2678 = vmatpush2.msra.mxu0 0.0
    %2679 = vmatprep.subr.mxu0 0.0
    %2680 = vmatpush2.msra.mxu0 0.0
    %2681 = vmatprep.subr.mxu0 0.0
    %2682 = vmatpush2.msra.mxu0 0.0
    %2683 = vmatprep.subr.mxu0 0.0
    %2684 = vmatpush2.msra.mxu0 0.0
    %2685 = vmatprep.subr.mxu0 0.0
    %2686 = vmatpush2.msra.mxu0 0.0
    %2687 = vmatprep.subr.mxu0 0.0
    %2688 = vmatpush2.msra.mxu0 0.0
    %2689 = vmatprep.subr.mxu0 0.0
    %2690 = vmatpush2.msra.mxu0 0.0
    %2691 = vmatprep.subr.mxu0 0.0
    %2692 = vmatpush2.msra.mxu0 0.0
    %2693 = vmatprep.mubr.f32.mxu0 0.0
    %2694 = vmatmul.mubr.f32.gmra.mxu0 %v2618
    %v2695 = vpop.f32.mrf.mxu0
    %v2696 = vadd.f32 0.0, %v2695
    %v2697 = vpop.f32.mrf.mxu0
    %2698 = vmatprep.mubr.f32.mxu0 0.0
    %2699 = vmatmul.mubr.f32.gmra.mxu0 %v2621
    %v2700 = vpop.f32.mrf.mxu0
    %v2701 = vadd.f32 0.0, %v2700
    %v2702 = vpop.f32.mrf.mxu0
    %2703 = vmatprep.mubr.f32.mxu0 0.0
    %2704 = vmatmul.mubr.f32.gmra.mxu0 %v2624
    %v2705 = vpop.f32.mrf.mxu0
    %v2706 = vadd.f32 0.0, %v2705
    %v2707 = vpop.f32.mrf.mxu0
    %2708 = vmatprep.mubr.f32.mxu0 0.0
    %2709 = vmatmul.mubr.f32.gmra.mxu0 %v2627
    %v2710 = vpop.f32.mrf.mxu0
    %v2711 = vadd.f32 0.0, %v2710
    %v2712 = vpop.f32.mrf.mxu0
    %2713 = vdwg.mxu0
    %2714 = vmatprep.subr.mxu0 0.0
    %2715 = vmatpush1.msra.mxu0 0.0
    %2716 = vmatprep.subr.mxu0 0.0
    %2717 = vmatpush1.msra.mxu0 0.0
    %2718 = vmatprep.subr.mxu0 0.0
    %2719 = vmatpush1.msra.mxu0 0.0
    %2720 = vmatprep.subr.mxu0 0.0
    %2721 = vmatpush1.msra.mxu0 0.0
    %2722 = vmatprep.subr.mxu0 0.0
    %2723 = vmatpush1.msra.mxu0 0.0
    %2724 = vmatprep.subr.mxu0 0.0
    %2725 = vmatpush1.msra.mxu0 0.0
    %2726 = vmatprep.subr.mxu0 0.0
    %2727 = vmatpush1.msra.mxu0 0.0
    %2728 = vmatprep.subr.mxu0 0.0
    %2729 = vmatpush1.msra.mxu0 0.0
    %2730 = vmatprep.subr.mxu0 0.0
    %2731 = vmatpush1.msra.mxu0 %v485
    %2732 = vmatprep.subr.mxu0 0.0
    %2733 = vmatpush1.msra.mxu0 %v484
    %2734 = vmatprep.subr.mxu0 0.0
    %2735 = vmatpush1.msra.mxu0 %v483
    %2736 = vmatprep.subr.mxu0 0.0
    %2737 = vmatpush1.msra.mxu0 %v482
    %2738 = vmatprep.subr.mxu0 0.0
    %2739 = vmatpush1.msra.mxu0 %v481
    %2740 = vmatprep.subr.mxu0 0.0
    %2741 = vmatpush1.msra.mxu0 %v480
    %2742 = vmatprep.subr.mxu0 0.0
    %2743 = vmatpush1.msra.mxu0 %v479
    %2744 = vmatprep.subr.mxu0 0.0
    %2745 = vmatpush1.msra.mxu0 %v478
    %2746 = vmatprep.subr.mxu0 0.0
    %2747 = vmatpush2.msra.mxu0 0.0
    %2748 = vmatprep.subr.mxu0 0.0
    %2749 = vmatpush2.msra.mxu0 0.0
    %2750 = vmatprep.subr.mxu0 0.0
    %2751 = vmatpush2.msra.mxu0 0.0
    %2752 = vmatprep.subr.mxu0 0.0
    %2753 = vmatpush2.msra.mxu0 0.0
    %2754 = vmatprep.subr.mxu0 0.0
    %2755 = vmatpush2.msra.mxu0 0.0
    %2756 = vmatprep.subr.mxu0 0.0
    %2757 = vmatpush2.msra.mxu0 0.0
    %2758 = vmatprep.subr.mxu0 0.0
    %2759 = vmatpush2.msra.mxu0 0.0
    %2760 = vmatprep.subr.mxu0 0.0
    %2761 = vmatpush2.msra.mxu0 0.0
    %2762 = vmatprep.subr.mxu0 0.0
    %2763 = vmatpush2.msra.mxu0 0.0
    %2764 = vmatprep.subr.mxu0 0.0
    %2765 = vmatpush2.msra.mxu0 0.0
    %2766 = vmatprep.subr.mxu0 0.0
    %2767 = vmatpush2.msra.mxu0 0.0
    %2768 = vmatprep.subr.mxu0 0.0
    %2769 = vmatpush2.msra.mxu0 0.0
    %2770 = vmatprep.subr.mxu0 0.0
    %2771 = vmatpush2.msra.mxu0 0.0
    %2772 = vmatprep.subr.mxu0 0.0
    %2773 = vmatpush2.msra.mxu0 0.0
    %2774 = vmatprep.subr.mxu0 0.0
    %2775 = vmatpush2.msra.mxu0 0.0
    %2776 = vmatprep.subr.mxu0 0.0
    %2777 = vmatpush2.msra.mxu0 0.0
    %2778 = vmatprep.mubr.f32.mxu0 0.0
    %2779 = vmatmul.mubr.f32.gmra.mxu0 %v2618
    %v2780 = vpop.f32.mrf.mxu0
    %v2781 = vadd.f32 0.0, %v2780
    %v2782 = vpop.f32.mrf.mxu0
    %2783 = vmatprep.mubr.f32.mxu0 0.0
    %2784 = vmatmul.mubr.f32.gmra.mxu0 %v2621
    %v2785 = vpop.f32.mrf.mxu0
    %v2786 = vadd.f32 0.0, %v2785
    %v2787 = vpop.f32.mrf.mxu0
    %2788 = vmatprep.mubr.f32.mxu0 0.0
    %2789 = vmatmul.mubr.f32.gmra.mxu0 %v2624
    %v2790 = vpop.f32.mrf.mxu0
    %v2791 = vadd.f32 0.0, %v2790
    %v2792 = vpop.f32.mrf.mxu0
    %2793 = vmatprep.mubr.f32.mxu0 0.0
    %2794 = vmatmul.mubr.f32.gmra.mxu0 %v2627
    %v2795 = vpop.f32.mrf.mxu0
    %v2796 = vadd.f32 0.0, %v2795
    %v2797 = vpop.f32.mrf.mxu0
    %2798 = vdwg.mxu0
    %v2800 = vsel %vm628, %v2609, 0
    %v2803 = vsel %vm628, %v2614, 0
    %v2806 = vsel %vm628, %v2696, 0
    %v2809 = vsel %vm628, %v2701, 0
    %v2812 = vsel %vm628, %v2706, 0
    %v2815 = vsel %vm628, %v2711, 0
    %2817 = vmatprep.subr.mxu0 0.0
    %2818 = vmatpush1.xpose.msra.mxu0 0.0
    %2819 = vmatprep.subr.mxu0 0.0
    %2820 = vmatpush1.xpose.msra.mxu0 0.0
    %2821 = vmatprep.subr.mxu0 0.0
    %2822 = vmatpush1.xpose.msra.mxu0 0.0
    %2823 = vmatprep.subr.mxu0 0.0
    %2824 = vmatpush1.xpose.msra.mxu0 0.0
    %2825 = vmatprep.subr.mxu0 0.0
    %2826 = vmatpush1.xpose.msra.mxu0 0.0
    %2827 = vmatprep.subr.mxu0 0.0
    %2828 = vmatpush1.xpose.msra.mxu0 0.0
    %2829 = vmatprep.subr.mxu0 0.0
    %2830 = vmatpush1.xpose.msra.mxu0 0.0
    %2831 = vmatprep.subr.mxu0 0.0
    %2832 = vmatpush1.xpose.msra.mxu0 0.0
    %2833 = vmatprep.subr.mxu0 0.0
    %2834 = vmatpush1.xpose.msra.mxu0 0.0
    %2835 = vmatprep.subr.mxu0 0.0
    %2836 = vmatpush1.xpose.msra.mxu0 0.0
    %2837 = vmatprep.subr.mxu0 0.0
    %2838 = vmatpush1.xpose.msra.mxu0 0.0
    %2839 = vmatprep.subr.mxu0 0.0
    %2840 = vmatpush1.xpose.msra.mxu0 0.0
    %2841 = vmatprep.subr.mxu0 0.0
    %2842 = vmatpush1.xpose.msra.mxu0 %v2815
    %2843 = vmatprep.subr.mxu0 0.0
    %2844 = vmatpush1.xpose.msra.mxu0 %v2812
    %2845 = vmatprep.subr.mxu0 0.0
    %2846 = vmatpush1.xpose.msra.mxu0 %v2809
    %2847 = vmatprep.subr.mxu0 0.0
    %2848 = vmatpush1.xpose.msra.mxu0 %v2806
    %2849 = vmatprep.subr.mxu0 0.0
    %2850 = vmatpush2.xpose.msra.mxu0 0.0
    %2851 = vmatprep.subr.mxu0 0.0
    %2852 = vmatpush2.xpose.msra.mxu0 0.0
    %2853 = vmatprep.subr.mxu0 0.0
    %2854 = vmatpush2.xpose.msra.mxu0 0.0
    %2855 = vmatprep.subr.mxu0 0.0
    %2856 = vmatpush2.xpose.msra.mxu0 0.0
    %2857 = vmatprep.subr.mxu0 0.0
    %2858 = vmatpush2.xpose.msra.mxu0 0.0
    %2859 = vmatprep.subr.mxu0 0.0
    %2860 = vmatpush2.xpose.msra.mxu0 0.0
    %2861 = vmatprep.subr.mxu0 0.0
    %2862 = vmatpush2.xpose.msra.mxu0 0.0
    %2863 = vmatprep.subr.mxu0 0.0
    %2864 = vmatpush2.xpose.msra.mxu0 0.0
    %2865 = vmatprep.subr.mxu0 0.0
    %2866 = vmatpush2.xpose.msra.mxu0 0.0
    %2867 = vmatprep.subr.mxu0 0.0
    %2868 = vmatpush2.xpose.msra.mxu0 0.0
    %2869 = vmatprep.subr.mxu0 0.0
    %2870 = vmatpush2.xpose.msra.mxu0 0.0
    %2871 = vmatprep.subr.mxu0 0.0
    %2872 = vmatpush2.xpose.msra.mxu0 0.0
    %2873 = vmatprep.subr.mxu0 0.0
    %2874 = vmatpush2.xpose.msra.mxu0 0.0
    %2875 = vmatprep.subr.mxu0 0.0
    %2876 = vmatpush2.xpose.msra.mxu0 0.0
    %2877 = vmatprep.subr.mxu0 0.0
    %2878 = vmatpush2.xpose.msra.mxu0 0.0
    %2879 = vmatprep.subr.mxu0 0.0
    %2880 = vmatpush2.xpose.msra.mxu0 0.0
    %2881 = vmatprep.mubr.f32.mxu0 0.0
    %2882 = vmatmul.mubr.f32.gmra.mxu0 %v2800
    %v2883 = vpop.f32.mrf.mxu0
    %v2884 = vadd.f32 0.0, %v2883
    %v2885 = vpop.f32.mrf.mxu0
    %2886 = vmatprep.mubr.f32.mxu0 0.0
    %2887 = vmatmul.mubr.f32.gmra.mxu0 %v2803
    %v2888 = vpop.f32.mrf.mxu0
    %v2889 = vadd.f32 0.0, %v2888
    %v2890 = vpop.f32.mrf.mxu0
    %2891 = vdwg.mxu0
    %v2892 = vmul.f32 %v2884, 0.125
    %v2893 = vmul.f32 %v2889, 0.125
    %v2894 = vsel %vm1789, %v2892, -inf
    %2895 = vmax.xlane.f32.xlu0 %v2894
    %v2896 = vpop.xlane.xlu0 %2895
    %v2897 = vsel %vm1789, %v2893, -inf
    %2898 = vmax.xlane.f32.xlu0 %v2897
    %v2899 = vpop.xlane.xlu0 %2898
    %v2900 = vsub.f32 %v2892, %v2896
    %v2901 = vsub.f32 %v2893, %v2899
    %v2902 = vmul.f32 %v2900, 1.442695
    %v2903 = vpow.pop %v2902
    %v2904 = vmul.f32 %v2901, 1.442695
    %v2905 = vpow.pop %v2904
    %v2906 = vsel %vm1789, %v2903, 0.0
    %2907 = vadd.xlane.f32.xlu0 %v2906
    %v2908 = vpop.xlane.xlu0 %2907
    %v2909 = vsel %vm1789, %v2905, 0.0
    %2910 = vadd.xlane.f32.xlu0 %v2909
    %v2911 = vpop.xlane.xlu0 %2910
    %v2912 = vrcp.pop %v2908
    %v2913 = vmul.f32 %v2903, %v2912
    %v2914 = vrcp.pop %v2911
    %v2915 = vmul.f32 %v2905, %v2914
    %v2917 = vsel %vm1789, %v2913, 0
    %v2920 = vsel %vm1789, %v2915, 0
    %2922 = vmatprep.subr.mxu0 0.0
    %2923 = vmatpush1.msra.mxu0 0.0
    %2924 = vmatprep.subr.mxu0 0.0
    %2925 = vmatpush1.msra.mxu0 0.0
    %2926 = vmatprep.subr.mxu0 0.0
    %2927 = vmatpush1.msra.mxu0 0.0
    %2928 = vmatprep.subr.mxu0 0.0
    %2929 = vmatpush1.msra.mxu0 0.0
    %2930 = vmatprep.subr.mxu0 0.0
    %2931 = vmatpush1.msra.mxu0 0.0
    %2932 = vmatprep.subr.mxu0 0.0
    %2933 = vmatpush1.msra.mxu0 0.0
    %2934 = vmatprep.subr.mxu0 0.0
    %2935 = vmatpush1.msra.mxu0 0.0
    %2936 = vmatprep.subr.mxu0 0.0
    %2937 = vmatpush1.msra.mxu0 0.0
    %2938 = vmatprep.subr.mxu0 0.0
    %2939 = vmatpush1.msra.mxu0 0.0
    %2940 = vmatprep.subr.mxu0 0.0
    %2941 = vmatpush1.msra.mxu0 0.0
    %2942 = vmatprep.subr.mxu0 0.0
    %2943 = vmatpush1.msra.mxu0 0.0
    %2944 = vmatprep.subr.mxu0 0.0
    %2945 = vmatpush1.msra.mxu0 0.0
    %2946 = vmatprep.subr.mxu0 0.0
    %2947 = vmatpush1.msra.mxu0 %v2796
    %2948 = vmatprep.subr.mxu0 0.0
    %2949 = vmatpush1.msra.mxu0 %v2791
    %2950 = vmatprep.subr.mxu0 0.0
    %2951 = vmatpush1.msra.mxu0 %v2786
    %2952 = vmatprep.subr.mxu0 0.0
    %2953 = vmatpush1.msra.mxu0 %v2781
    %2954 = vmatprep.subr.mxu0 0.0
    %2955 = vmatpush2.msra.mxu0 0.0
    %2956 = vmatprep.subr.mxu0 0.0
    %2957 = vmatpush2.msra.mxu0 0.0
    %2958 = vmatprep.subr.mxu0 0.0
    %2959 = vmatpush2.msra.mxu0 0.0
    %2960 = vmatprep.subr.mxu0 0.0
    %2961 = vmatpush2.msra.mxu0 0.0
    %2962 = vmatprep.subr.mxu0 0.0
    %2963 = vmatpush2.msra.mxu0 0.0
    %2964 = vmatprep.subr.mxu0 0.0
    %2965 = vmatpush2.msra.mxu0 0.0
    %2966 = vmatprep.subr.mxu0 0.0
    %2967 = vmatpush2.msra.mxu0 0.0
    %2968 = vmatprep.subr.mxu0 0.0
    %2969 = vmatpush2.msra.mxu0 0.0
    %2970 = vmatprep.subr.mxu0 0.0
    %2971 = vmatpush2.msra.mxu0 0.0
    %2972 = vmatprep.subr.mxu0 0.0
    %2973 = vmatpush2.msra.mxu0 0.0
    %2974 = vmatprep.subr.mxu0 0.0
    %2975 = vmatpush2.msra.mxu0 0.0
    %2976 = vmatprep.subr.mxu0 0.0
    %2977 = vmatpush2.msra.mxu0 0.0
    %2978 = vmatprep.subr.mxu0 0.0
    %2979 = vmatpush2.msra.mxu0 0.0
    %2980 = vmatprep.subr.mxu0 0.0
    %2981 = vmatpush2.msra.mxu0 0.0
    %2982 = vmatprep.subr.mxu0 0.0
    %2983 = vmatpush2.msra.mxu0 0.0
    %2984 = vmatprep.subr.mxu0 0.0
    %2985 = vmatpush2.msra.mxu0 0.0
    %2986 = vmatprep.mubr.f32.mxu0 0.0
    %2987 = vmatmul.mubr.f32.gmra.mxu0 %v2917
    %v2988 = vpop.f32.mrf.mxu0
    %v2989 = vadd.f32 0.0, %v2988
    %v2990 = vpop.f32.mrf.mxu0
    %2991 = vmatprep.mubr.f32.mxu0 0.0
    %2992 = vmatmul.mubr.f32.gmra.mxu0 %v2920
    %v2993 = vpop.f32.mrf.mxu0
    %v2994 = vadd.f32 0.0, %v2993
    %v2995 = vpop.f32.mrf.mxu0
    %2996 = vdwg.mxu0
    %v2998 = vsel %vm628, %v2989, 0
    %v3001 = vsel %vm628, %v2994, 0
    %3003 = vmatprep.subr.mxu0 0.0
    %3004 = vmatpush1.msra.mxu0 0.0
    %3005 = vmatprep.subr.mxu0 0.0
    %3006 = vmatpush1.msra.mxu0 0.0
    %3007 = vmatprep.subr.mxu0 0.0
    %3008 = vmatpush1.msra.mxu0 0.0
    %3009 = vmatprep.subr.mxu0 0.0
    %3010 = vmatpush1.msra.mxu0 0.0
    %3011 = vmatprep.subr.mxu0 0.0
    %3012 = vmatpush1.msra.mxu0 0.0
    %3013 = vmatprep.subr.mxu0 0.0
    %3014 = vmatpush1.msra.mxu0 0.0
    %3015 = vmatprep.subr.mxu0 0.0
    %3016 = vmatpush1.msra.mxu0 0.0
    %3017 = vmatprep.subr.mxu0 0.0
    %3018 = vmatpush1.msra.mxu0 0.0
    %3019 = vmatprep.subr.mxu0 0.0
    %3020 = vmatpush1.msra.mxu0 %v493
    %3021 = vmatprep.subr.mxu0 0.0
    %3022 = vmatpush1.msra.mxu0 %v492
    %3023 = vmatprep.subr.mxu0 0.0
    %3024 = vmatpush1.msra.mxu0 %v491
    %3025 = vmatprep.subr.mxu0 0.0
    %3026 = vmatpush1.msra.mxu0 %v490
    %3027 = vmatprep.subr.mxu0 0.0
    %3028 = vmatpush1.msra.mxu0 %v489
    %3029 = vmatprep.subr.mxu0 0.0
    %3030 = vmatpush1.msra.mxu0 %v488
    %3031 = vmatprep.subr.mxu0 0.0
    %3032 = vmatpush1.msra.mxu0 %v487
    %3033 = vmatprep.subr.mxu0 0.0
    %3034 = vmatpush1.msra.mxu0 %v486
    %3035 = vmatprep.subr.mxu0 0.0
    %3036 = vmatpush2.msra.mxu0 0.0
    %3037 = vmatprep.subr.mxu0 0.0
    %3038 = vmatpush2.msra.mxu0 0.0
    %3039 = vmatprep.subr.mxu0 0.0
    %3040 = vmatpush2.msra.mxu0 0.0
    %3041 = vmatprep.subr.mxu0 0.0
    %3042 = vmatpush2.msra.mxu0 0.0
    %3043 = vmatprep.subr.mxu0 0.0
    %3044 = vmatpush2.msra.mxu0 0.0
    %3045 = vmatprep.subr.mxu0 0.0
    %3046 = vmatpush2.msra.mxu0 0.0
    %3047 = vmatprep.subr.mxu0 0.0
    %3048 = vmatpush2.msra.mxu0 0.0
    %3049 = vmatprep.subr.mxu0 0.0
    %3050 = vmatpush2.msra.mxu0 0.0
    %3051 = vmatprep.subr.mxu0 0.0
    %3052 = vmatpush2.msra.mxu0 0.0
    %3053 = vmatprep.subr.mxu0 0.0
    %3054 = vmatpush2.msra.mxu0 0.0
    %3055 = vmatprep.subr.mxu0 0.0
    %3056 = vmatpush2.msra.mxu0 0.0
    %3057 = vmatprep.subr.mxu0 0.0
    %3058 = vmatpush2.msra.mxu0 0.0
    %3059 = vmatprep.subr.mxu0 0.0
    %3060 = vmatpush2.msra.mxu0 0.0
    %3061 = vmatprep.subr.mxu0 0.0
    %3062 = vmatpush2.msra.mxu0 0.0
    %3063 = vmatprep.subr.mxu0 0.0
    %3064 = vmatpush2.msra.mxu0 0.0
    %3065 = vmatprep.subr.mxu0 0.0
    %3066 = vmatpush2.msra.mxu0 0.0
    %3067 = vmatprep.mubr.f32.mxu0 0.0
    %3068 = vmatmul.mubr.f32.gmra.mxu0 %v2998
    %v3069 = vpop.f32.mrf.mxu0
    %v3070 = vadd.f32 0.0, %v3069
    %v3071 = vpop.f32.mrf.mxu0
    %3072 = vmatprep.mubr.f32.mxu0 0.0
    %3073 = vmatmul.mubr.f32.gmra.mxu0 %v3001
    %v3074 = vpop.f32.mrf.mxu0
    %v3075 = vadd.f32 0.0, %v3074
    %v3076 = vpop.f32.mrf.mxu0
    %3077 = vdwg.mxu0
    %v3078 = vmul.f32 %v3070, 0.1
    %v3079 = vmul.f32 %v3075, 0.1
    %v3080 = vadd.f32 %v2534, %v3078
    %v3081 = vadd.f32 %v2535, %v3079
    %v3082 = vmul.f32 %v3080, %v3080
    %v3083 = vmul.f32 %v3081, %v3081
    %v3084 = vsel %vm628, %v3082, 0.0
    %3085 = vadd.xlane.f32.xlu0 %v3084
    %v3086 = vpop.xlane.xlu0 %3085
    %v3087 = vsel %vm628, %v3083, 0.0
    %3088 = vadd.xlane.f32.xlu0 %v3087
    %v3089 = vpop.xlane.xlu0 %3088
    %v3090 = vmul.f32 %v3086, %v635
    %v3091 = vmul.f32 %v3089, %v635
    %v3092 = vadd.f32 %v3090, 1e-06
    %v3093 = vadd.f32 %v3091, 1e-06
    %v3094 = vrsqrt.pop %v3092
    %v3095 = vrsqrt.pop %v3093
    %v3096 = vmul.f32 %v3080, %v3094
    %v3097 = vmul.f32 %v3081, %v3095
    %v3099 = vlaneseq
    %v3100 = vshrl.u32 %v3099, 7
    %v3101 = vsub.s32 0, %v3100
    %v3102 = vrot.slane %v494, %v3101
    %v3104 = vmul.f32 %v3096, %v3102
    %v3105 = vmul.f32 %v3097, %v3102
    %v3107 = vsel %vm628, %v3104, 0
    %v3110 = vsel %vm628, %v3105, 0
    %3112 = vmatprep.subr.mxu0 0.0
    %3113 = vmatpush1.msra.mxu0 0.0
    %3114 = vmatprep.subr.mxu0 0.0
    %3115 = vmatpush1.msra.mxu0 0.0
    %3116 = vmatprep.subr.mxu0 0.0
    %3117 = vmatpush1.msra.mxu0 0.0
    %3118 = vmatprep.subr.mxu0 0.0
    %3119 = vmatpush1.msra.mxu0 0.0
    %3120 = vmatprep.subr.mxu0 0.0
    %3121 = vmatpush1.msra.mxu0 0.0
    %3122 = vmatprep.subr.mxu0 0.0
    %3123 = vmatpush1.msra.mxu0 0.0
    %3124 = vmatprep.subr.mxu0 0.0
    %3125 = vmatpush1.msra.mxu0 0.0
    %3126 = vmatprep.subr.mxu0 0.0
    %3127 = vmatpush1.msra.mxu0 0.0
    %3128 = vmatprep.subr.mxu0 %v510
    %3129 = vmatpush1.msra.mxu0 %v509
    %3130 = vmatprep.subr.mxu0 %v508
    %3131 = vmatpush1.msra.mxu0 %v507
    %3132 = vmatprep.subr.mxu0 %v506
    %3133 = vmatpush1.msra.mxu0 %v505
    %3134 = vmatprep.subr.mxu0 %v504
    %3135 = vmatpush1.msra.mxu0 %v503
    %3136 = vmatprep.subr.mxu0 %v502
    %3137 = vmatpush1.msra.mxu0 %v501
    %3138 = vmatprep.subr.mxu0 %v500
    %3139 = vmatpush1.msra.mxu0 %v499
    %3140 = vmatprep.subr.mxu0 %v498
    %3141 = vmatpush1.msra.mxu0 %v497
    %3142 = vmatprep.subr.mxu0 %v496
    %3143 = vmatpush1.msra.mxu0 %v495
    %3144 = vmatprep.subr.mxu0 0.0
    %3145 = vmatpush2.msra.mxu0 0.0
    %3146 = vmatprep.subr.mxu0 0.0
    %3147 = vmatpush2.msra.mxu0 0.0
    %3148 = vmatprep.subr.mxu0 0.0
    %3149 = vmatpush2.msra.mxu0 0.0
    %3150 = vmatprep.subr.mxu0 0.0
    %3151 = vmatpush2.msra.mxu0 0.0
    %3152 = vmatprep.subr.mxu0 0.0
    %3153 = vmatpush2.msra.mxu0 0.0
    %3154 = vmatprep.subr.mxu0 0.0
    %3155 = vmatpush2.msra.mxu0 0.0
    %3156 = vmatprep.subr.mxu0 0.0
    %3157 = vmatpush2.msra.mxu0 0.0
    %3158 = vmatprep.subr.mxu0 0.0
    %3159 = vmatpush2.msra.mxu0 0.0
    %3160 = vmatprep.subr.mxu0 0.0
    %3161 = vmatpush2.msra.mxu0 0.0
    %3162 = vmatprep.subr.mxu0 0.0
    %3163 = vmatpush2.msra.mxu0 0.0
    %3164 = vmatprep.subr.mxu0 0.0
    %3165 = vmatpush2.msra.mxu0 0.0
    %3166 = vmatprep.subr.mxu0 0.0
    %3167 = vmatpush2.msra.mxu0 0.0
    %3168 = vmatprep.subr.mxu0 0.0
    %3169 = vmatpush2.msra.mxu0 0.0
    %3170 = vmatprep.subr.mxu0 0.0
    %3171 = vmatpush2.msra.mxu0 0.0
    %3172 = vmatprep.subr.mxu0 0.0
    %3173 = vmatpush2.msra.mxu0 0.0
    %3174 = vmatprep.subr.mxu0 0.0
    %3175 = vmatpush2.msra.mxu0 0.0
    %3176 = vmatprep.mubr.f32.mxu0 0.0
    %3177 = vmatmul.mubr.f32.gmra.mxu0 %v3107
    %v3178 = vpop.f32.mrf.mxu0
    %v3179 = vadd.f32 0.0, %v3178
    %v3180 = vpop.f32.mrf.mxu0
    %v3181 = vadd.f32 0.0, %v3180
    %3182 = vmatprep.mubr.f32.mxu0 0.0
    %3183 = vmatmul.mubr.f32.gmra.mxu0 %v3110
    %v3184 = vpop.f32.mrf.mxu0
    %v3185 = vadd.f32 0.0, %v3184
    %v3186 = vpop.f32.mrf.mxu0
    %v3187 = vadd.f32 0.0, %v3186
    %3188 = vdwg.mxu0
    %v3189 = vxor.u32 %v3179, 2147483648
    %v3190 = vxor.u32 %v3185, 2147483648
    %v3191 = vmul.f32 %v3189, 1.442695
    %v3192 = vpow.pop %v3191
    %v3193 = vmul.f32 %v3190, 1.442695
    %v3194 = vpow.pop %v3193
    %v3195 = vadd.f32 %v3192, 1.0
    %v3196 = vadd.f32 %v3194, 1.0
    %v3197 = vrcp.pop %v3195
    %v3198 = vmul.f32 1.0, %v3197
    %v3199 = vrcp.pop %v3196
    %v3200 = vmul.f32 1.0, %v3199
    %v3201 = vmul.f32 %v3179, %v3198
    %v3202 = vmul.f32 %v3185, %v3200
    %v3203 = vmul.f32 %v3201, %v3181
    %v3204 = vmul.f32 %v3202, %v3187
    %3205 = vmatprep.subr.mxu0 0.0
    %3206 = vmatpush1.msra.mxu0 %v526
    %3207 = vmatprep.subr.mxu0 0.0
    %3208 = vmatpush1.msra.mxu0 %v525
    %3209 = vmatprep.subr.mxu0 0.0
    %3210 = vmatpush1.msra.mxu0 %v524
    %3211 = vmatprep.subr.mxu0 0.0
    %3212 = vmatpush1.msra.mxu0 %v523
    %3213 = vmatprep.subr.mxu0 0.0
    %3214 = vmatpush1.msra.mxu0 %v522
    %3215 = vmatprep.subr.mxu0 0.0
    %3216 = vmatpush1.msra.mxu0 %v521
    %3217 = vmatprep.subr.mxu0 0.0
    %3218 = vmatpush1.msra.mxu0 %v520
    %3219 = vmatprep.subr.mxu0 0.0
    %3220 = vmatpush1.msra.mxu0 %v519
    %3221 = vmatprep.subr.mxu0 0.0
    %3222 = vmatpush1.msra.mxu0 %v518
    %3223 = vmatprep.subr.mxu0 0.0
    %3224 = vmatpush1.msra.mxu0 %v517
    %3225 = vmatprep.subr.mxu0 0.0
    %3226 = vmatpush1.msra.mxu0 %v516
    %3227 = vmatprep.subr.mxu0 0.0
    %3228 = vmatpush1.msra.mxu0 %v515
    %3229 = vmatprep.subr.mxu0 0.0
    %3230 = vmatpush1.msra.mxu0 %v514
    %3231 = vmatprep.subr.mxu0 0.0
    %3232 = vmatpush1.msra.mxu0 %v513
    %3233 = vmatprep.subr.mxu0 0.0
    %3234 = vmatpush1.msra.mxu0 %v512
    %3235 = vmatprep.subr.mxu0 0.0
    %3236 = vmatpush1.msra.mxu0 %v511
    %3237 = vmatprep.subr.mxu0 0.0
    %3238 = vmatpush2.msra.mxu0 0.0
    %3239 = vmatprep.subr.mxu0 0.0
    %3240 = vmatpush2.msra.mxu0 0.0
    %3241 = vmatprep.subr.mxu0 0.0
    %3242 = vmatpush2.msra.mxu0 0.0
    %3243 = vmatprep.subr.mxu0 0.0
    %3244 = vmatpush2.msra.mxu0 0.0
    %3245 = vmatprep.subr.mxu0 0.0
    %3246 = vmatpush2.msra.mxu0 0.0
    %3247 = vmatprep.subr.mxu0 0.0
    %3248 = vmatpush2.msra.mxu0 0.0
    %3249 = vmatprep.subr.mxu0 0.0
    %3250 = vmatpush2.msra.mxu0 0.0
    %3251 = vmatprep.subr.mxu0 0.0
    %3252 = vmatpush2.msra.mxu0 0.0
    %3253 = vmatprep.subr.mxu0 0.0
    %3254 = vmatpush2.msra.mxu0 0.0
    %3255 = vmatprep.subr.mxu0 0.0
    %3256 = vmatpush2.msra.mxu0 0.0
    %3257 = vmatprep.subr.mxu0 0.0
    %3258 = vmatpush2.msra.mxu0 0.0
    %3259 = vmatprep.subr.mxu0 0.0
    %3260 = vmatpush2.msra.mxu0 0.0
    %3261 = vmatprep.subr.mxu0 0.0
    %3262 = vmatpush2.msra.mxu0 0.0
    %3263 = vmatprep.subr.mxu0 0.0
    %3264 = vmatpush2.msra.mxu0 0.0
    %3265 = vmatprep.subr.mxu0 0.0
    %3266 = vmatpush2.msra.mxu0 0.0
    %3267 = vmatprep.subr.mxu0 0.0
    %3268 = vmatpush2.msra.mxu0 0.0
    %3269 = vmatprep.mubr.f32.mxu0 0.0
    %3270 = vmatmul.mubr.f32.gmra.mxu0 %v3203
    %v3271 = vpop.f32.mrf.mxu0
    %v3272 = vadd.f32 0.0, %v3271
    %v3273 = vpop.f32.mrf.mxu0
    %3274 = vmatprep.mubr.f32.mxu0 0.0
    %3275 = vmatmul.mubr.f32.gmra.mxu0 %v3204
    %v3276 = vpop.f32.mrf.mxu0
    %v3277 = vadd.f32 0.0, %v3276
    %v3278 = vpop.f32.mrf.mxu0
    %3279 = vdwg.mxu0
    %v3280 = vadd.f32 %v3080, %v3272
    %v3281 = vadd.f32 %v3081, %v3277
    %v3282 = vmul.f32 %v3280, %v3280
    %v3283 = vmul.f32 %v3281, %v3281
    %v3284 = vsel %vm628, %v3282, 0.0
    %3285 = vadd.xlane.f32.xlu0 %v3284
    %v3286 = vpop.xlane.xlu0 %3285
    %v3287 = vsel %vm628, %v3283, 0.0
    %3288 = vadd.xlane.f32.xlu0 %v3287
    %v3289 = vpop.xlane.xlu0 %3288
    %v3290 = vmul.f32 %v3286, %v635
    %v3291 = vmul.f32 %v3289, %v635
    %v3292 = vadd.f32 %v3290, 1e-06
    %v3293 = vadd.f32 %v3291, 1e-06
    %v3294 = vrsqrt.pop %v3292
    %v3295 = vrsqrt.pop %v3293
    %v3296 = vmul.f32 %v3280, %v3294
    %v3297 = vmul.f32 %v3281, %v3295
    %v3299 = vlaneseq
    %v3300 = vshrl.u32 %v3299, 7
    %v3301 = vsub.s32 0, %v3300
    %v3302 = vrot.slane %v527, %v3301
    %v3304 = vmul.f32 %v3296, %v3302
    %v3305 = vmul.f32 %v3297, %v3302
    %v3307 = vsel %vm628, %v3304, 0
    %v3310 = vsel %vm628, %v3305, 0
    %3312 = vmatprep.subr.mxu0 0.0
    %3313 = vmatpush1.msra.mxu0 0.0
    %3314 = vmatprep.subr.mxu0 0.0
    %3315 = vmatpush1.msra.mxu0 0.0
    %3316 = vmatprep.subr.mxu0 0.0
    %3317 = vmatpush1.msra.mxu0 0.0
    %3318 = vmatprep.subr.mxu0 0.0
    %3319 = vmatpush1.msra.mxu0 0.0
    %3320 = vmatprep.subr.mxu0 0.0
    %3321 = vmatpush1.msra.mxu0 0.0
    %3322 = vmatprep.subr.mxu0 0.0
    %3323 = vmatpush1.msra.mxu0 0.0
    %3324 = vmatprep.subr.mxu0 0.0
    %3325 = vmatpush1.msra.mxu0 0.0
    %3326 = vmatprep.subr.mxu0 0.0
    %3327 = vmatpush1.msra.mxu0 0.0
    %3328 = vmatprep.subr.mxu0 %v543
    %3329 = vmatpush1.msra.mxu0 %v542
    %3330 = vmatprep.subr.mxu0 %v541
    %3331 = vmatpush1.msra.mxu0 %v540
    %3332 = vmatprep.subr.mxu0 %v539
    %3333 = vmatpush1.msra.mxu0 %v538
    %3334 = vmatprep.subr.mxu0 %v537
    %3335 = vmatpush1.msra.mxu0 %v536
    %3336 = vmatprep.subr.mxu0 %v535
    %3337 = vmatpush1.msra.mxu0 %v534
    %3338 = vmatprep.subr.mxu0 %v533
    %3339 = vmatpush1.msra.mxu0 %v532
    %3340 = vmatprep.subr.mxu0 %v531
    %3341 = vmatpush1.msra.mxu0 %v530
    %3342 = vmatprep.subr.mxu0 %v529
    %3343 = vmatpush1.msra.mxu0 %v528
    %3344 = vmatprep.subr.mxu0 0.0
    %3345 = vmatpush2.msra.mxu0 0.0
    %3346 = vmatprep.subr.mxu0 0.0
    %3347 = vmatpush2.msra.mxu0 0.0
    %3348 = vmatprep.subr.mxu0 0.0
    %3349 = vmatpush2.msra.mxu0 0.0
    %3350 = vmatprep.subr.mxu0 0.0
    %3351 = vmatpush2.msra.mxu0 0.0
    %3352 = vmatprep.subr.mxu0 0.0
    %3353 = vmatpush2.msra.mxu0 0.0
    %3354 = vmatprep.subr.mxu0 0.0
    %3355 = vmatpush2.msra.mxu0 0.0
    %3356 = vmatprep.subr.mxu0 0.0
    %3357 = vmatpush2.msra.mxu0 0.0
    %3358 = vmatprep.subr.mxu0 0.0
    %3359 = vmatpush2.msra.mxu0 0.0
    %3360 = vmatprep.subr.mxu0 0.0
    %3361 = vmatpush2.msra.mxu0 0.0
    %3362 = vmatprep.subr.mxu0 0.0
    %3363 = vmatpush2.msra.mxu0 0.0
    %3364 = vmatprep.subr.mxu0 0.0
    %3365 = vmatpush2.msra.mxu0 0.0
    %3366 = vmatprep.subr.mxu0 0.0
    %3367 = vmatpush2.msra.mxu0 0.0
    %3368 = vmatprep.subr.mxu0 0.0
    %3369 = vmatpush2.msra.mxu0 0.0
    %3370 = vmatprep.subr.mxu0 0.0
    %3371 = vmatpush2.msra.mxu0 0.0
    %3372 = vmatprep.subr.mxu0 0.0
    %3373 = vmatpush2.msra.mxu0 0.0
    %3374 = vmatprep.subr.mxu0 0.0
    %3375 = vmatpush2.msra.mxu0 0.0
    %3376 = vmatprep.mubr.f32.mxu0 0.0
    %3377 = vmatmul.mubr.f32.gmra.mxu0 %v3307
    %v3378 = vpop.f32.mrf.mxu0
    %v3379 = vadd.f32 0.0, %v3378
    %v3380 = vpop.f32.mrf.mxu0
    %v3381 = vadd.f32 0.0, %v3380
    %3382 = vmatprep.mubr.f32.mxu0 0.0
    %3383 = vmatmul.mubr.f32.gmra.mxu0 %v3310
    %v3384 = vpop.f32.mrf.mxu0
    %v3385 = vadd.f32 0.0, %v3384
    %v3386 = vpop.f32.mrf.mxu0
    %v3387 = vadd.f32 0.0, %v3386
    %3388 = vdwg.mxu0
    %3390 = vrot.lane.b32.xlu0 %v3379, 64
    %v3391 = vpop.permute.xlu0 %3390
    %v3392 = vsel %vm1789, %v3379, 0
    %v3394 = vsel %vm1789, %v3391, 0
    %3396 = vmatprep.subr.mxu0 0.0
    %3397 = vmatpush1.xpose.msra.mxu0 0.0
    %3398 = vmatprep.subr.mxu0 0.0
    %3399 = vmatpush1.xpose.msra.mxu0 0.0
    %3400 = vmatprep.subr.mxu0 0.0
    %3401 = vmatpush1.xpose.msra.mxu0 0.0
    %3402 = vmatprep.subr.mxu0 0.0
    %3403 = vmatpush1.xpose.msra.mxu0 0.0
    %3404 = vmatprep.subr.mxu0 0.0
    %3405 = vmatpush1.xpose.msra.mxu0 0.0
    %3406 = vmatprep.subr.mxu0 0.0
    %3407 = vmatpush1.xpose.msra.mxu0 0.0
    %3408 = vmatprep.subr.mxu0 0.0
    %3409 = vmatpush1.xpose.msra.mxu0 0.0
    %3410 = vmatprep.subr.mxu0 0.0
    %3411 = vmatpush1.xpose.msra.mxu0 0.0
    %3412 = vmatprep.subr.mxu0 0.0
    %3413 = vmatpush1.xpose.msra.mxu0 0.0
    %3414 = vmatprep.subr.mxu0 0.0
    %3415 = vmatpush1.xpose.msra.mxu0 0.0
    %3416 = vmatprep.subr.mxu0 0.0
    %3417 = vmatpush1.xpose.msra.mxu0 0.0
    %3418 = vmatprep.subr.mxu0 0.0
    %3419 = vmatpush1.xpose.msra.mxu0 0.0
    %3420 = vmatprep.subr.mxu0 0.0
    %3421 = vmatpush1.xpose.msra.mxu0 0.0
    %3422 = vmatprep.subr.mxu0 0.0
    %3423 = vmatpush1.xpose.msra.mxu0 0.0
    %3424 = vmatprep.subr.mxu0 0.0
    %3425 = vmatpush1.xpose.msra.mxu0 0.0
    %3426 = vmatprep.subr.mxu0 0.0
    %3427 = vmatpush1.xpose.msra.mxu0 %v3394
    %3428 = vmatprep.subr.mxu0 0.0
    %3429 = vmatpush2.xpose.msra.mxu0 0.0
    %3430 = vmatprep.subr.mxu0 0.0
    %3431 = vmatpush2.xpose.msra.mxu0 0.0
    %3432 = vmatprep.subr.mxu0 0.0
    %3433 = vmatpush2.xpose.msra.mxu0 0.0
    %3434 = vmatprep.subr.mxu0 0.0
    %3435 = vmatpush2.xpose.msra.mxu0 0.0
    %3436 = vmatprep.subr.mxu0 0.0
    %3437 = vmatpush2.xpose.msra.mxu0 0.0
    %3438 = vmatprep.subr.mxu0 0.0
    %3439 = vmatpush2.xpose.msra.mxu0 0.0
    %3440 = vmatprep.subr.mxu0 0.0
    %3441 = vmatpush2.xpose.msra.mxu0 0.0
    %3442 = vmatprep.subr.mxu0 0.0
    %3443 = vmatpush2.xpose.msra.mxu0 0.0
    %3444 = vmatprep.subr.mxu0 0.0
    %3445 = vmatpush2.xpose.msra.mxu0 0.0
    %3446 = vmatprep.subr.mxu0 0.0
    %3447 = vmatpush2.xpose.msra.mxu0 0.0
    %3448 = vmatprep.subr.mxu0 0.0
    %3449 = vmatpush2.xpose.msra.mxu0 0.0
    %3450 = vmatprep.subr.mxu0 0.0
    %3451 = vmatpush2.xpose.msra.mxu0 0.0
    %3452 = vmatprep.subr.mxu0 0.0
    %3453 = vmatpush2.xpose.msra.mxu0 0.0
    %3454 = vmatprep.subr.mxu0 0.0
    %3455 = vmatpush2.xpose.msra.mxu0 0.0
    %3456 = vmatprep.subr.mxu0 0.0
    %3457 = vmatpush2.xpose.msra.mxu0 0.0
    %3458 = vmatprep.subr.mxu0 0.0
    %3459 = vmatpush2.xpose.msra.mxu0 0.0
    %3460 = vmatprep.mubr.f32.mxu0 0.0
    %3461 = vmatmul.mubr.f32.gmra.mxu0 %v3392
    %v3462 = vpop.f32.mrf.mxu0
    %v3463 = vadd.f32 0.0, %v3462
    %v3464 = vpop.f32.mrf.mxu0
    %3465 = vdwg.mxu0
    %v3466 = vmul.f32 %v3463, 0.17677669
    %v3467 = vsel %vm777, %v3466, -inf
    %3468 = vmax.xlane.f32.xlu0 %v3467
    %v3469 = vpop.xlane.xlu0 %3468
    %v3470 = vsub.f32 %v3466, %v3469
    %v3471 = vmul.f32 %v3470, 1.442695
    %v3472 = vpow.pop %v3471
    %v3473 = vsel %vm777, %v3472, 0.0
    %3474 = vadd.xlane.f32.xlu0 %v3473
    %v3475 = vpop.xlane.xlu0 %3474
    %v3476 = vrcp.pop %v3475
    %v3477 = vmul.f32 %v3472, %v3476
    %v3479 = vsel %vm777, %v3477, 0
    %3481 = vmatprep.subr.mxu0 0.0
    %3482 = vmatpush1.msra.mxu0 0.0
    %3483 = vmatprep.subr.mxu0 0.0
    %3484 = vmatpush1.msra.mxu0 0.0
    %3485 = vmatprep.subr.mxu0 0.0
    %3486 = vmatpush1.msra.mxu0 0.0
    %3487 = vmatprep.subr.mxu0 0.0
    %3488 = vmatpush1.msra.mxu0 0.0
    %3489 = vmatprep.subr.mxu0 0.0
    %3490 = vmatpush1.msra.mxu0 0.0
    %3491 = vmatprep.subr.mxu0 0.0
    %3492 = vmatpush1.msra.mxu0 0.0
    %3493 = vmatprep.subr.mxu0 0.0
    %3494 = vmatpush1.msra.mxu0 0.0
    %3495 = vmatprep.subr.mxu0 0.0
    %3496 = vmatpush1.msra.mxu0 0.0
    %3497 = vmatprep.subr.mxu0 0.0
    %3498 = vmatpush1.msra.mxu0 0.0
    %3499 = vmatprep.subr.mxu0 0.0
    %3500 = vmatpush1.msra.mxu0 0.0
    %3501 = vmatprep.subr.mxu0 0.0
    %3502 = vmatpush1.msra.mxu0 0.0
    %3503 = vmatprep.subr.mxu0 0.0
    %3504 = vmatpush1.msra.mxu0 0.0
    %3505 = vmatprep.subr.mxu0 0.0
    %3506 = vmatpush1.msra.mxu0 0.0
    %3507 = vmatprep.subr.mxu0 0.0
    %3508 = vmatpush1.msra.mxu0 0.0
    %3509 = vmatprep.subr.mxu0 0.0
    %3510 = vmatpush1.msra.mxu0 0.0
    %3511 = vmatprep.subr.mxu0 0.0
    %3512 = vmatpush1.msra.mxu0 %v3381
    %3513 = vmatprep.subr.mxu0 0.0
    %3514 = vmatpush2.msra.mxu0 0.0
    %3515 = vmatprep.subr.mxu0 0.0
    %3516 = vmatpush2.msra.mxu0 0.0
    %3517 = vmatprep.subr.mxu0 0.0
    %3518 = vmatpush2.msra.mxu0 0.0
    %3519 = vmatprep.subr.mxu0 0.0
    %3520 = vmatpush2.msra.mxu0 0.0
    %3521 = vmatprep.subr.mxu0 0.0
    %3522 = vmatpush2.msra.mxu0 0.0
    %3523 = vmatprep.subr.mxu0 0.0
    %3524 = vmatpush2.msra.mxu0 0.0
    %3525 = vmatprep.subr.mxu0 0.0
    %3526 = vmatpush2.msra.mxu0 0.0
    %3527 = vmatprep.subr.mxu0 0.0
    %3528 = vmatpush2.msra.mxu0 0.0
    %3529 = vmatprep.subr.mxu0 0.0
    %3530 = vmatpush2.msra.mxu0 0.0
    %3531 = vmatprep.subr.mxu0 0.0
    %3532 = vmatpush2.msra.mxu0 0.0
    %3533 = vmatprep.subr.mxu0 0.0
    %3534 = vmatpush2.msra.mxu0 0.0
    %3535 = vmatprep.subr.mxu0 0.0
    %3536 = vmatpush2.msra.mxu0 0.0
    %3537 = vmatprep.subr.mxu0 0.0
    %3538 = vmatpush2.msra.mxu0 0.0
    %3539 = vmatprep.subr.mxu0 0.0
    %3540 = vmatpush2.msra.mxu0 0.0
    %3541 = vmatprep.subr.mxu0 0.0
    %3542 = vmatpush2.msra.mxu0 0.0
    %3543 = vmatprep.subr.mxu0 0.0
    %3544 = vmatpush2.msra.mxu0 0.0
    %3545 = vmatprep.mubr.f32.mxu0 0.0
    %3546 = vmatmul.mubr.f32.gmra.mxu0 %v3479
    %v3547 = vpop.f32.mrf.mxu0
    %v3548 = vadd.f32 0.0, %v3547
    %v3549 = vpop.f32.mrf.mxu0
    %3550 = vdwg.mxu0
    %3551 = vrot.lane.b32.xlu0 %v3379, 96
    %v3552 = vpop.permute.xlu0 %3551
    %3553 = vrot.lane.b32.xlu0 %v3379, 32
    %v3554 = vpop.permute.xlu0 %3553
    %v3555 = vsel %vm1789, %v3552, 0
    %v3557 = vsel %vm1789, %v3554, 0
    %3559 = vmatprep.subr.mxu0 0.0
    %3560 = vmatpush1.xpose.msra.mxu0 0.0
    %3561 = vmatprep.subr.mxu0 0.0
    %3562 = vmatpush1.xpose.msra.mxu0 0.0
    %3563 = vmatprep.subr.mxu0 0.0
    %3564 = vmatpush1.xpose.msra.mxu0 0.0
    %3565 = vmatprep.subr.mxu0 0.0
    %3566 = vmatpush1.xpose.msra.mxu0 0.0
    %3567 = vmatprep.subr.mxu0 0.0
    %3568 = vmatpush1.xpose.msra.mxu0 0.0
    %3569 = vmatprep.subr.mxu0 0.0
    %3570 = vmatpush1.xpose.msra.mxu0 0.0
    %3571 = vmatprep.subr.mxu0 0.0
    %3572 = vmatpush1.xpose.msra.mxu0 0.0
    %3573 = vmatprep.subr.mxu0 0.0
    %3574 = vmatpush1.xpose.msra.mxu0 0.0
    %3575 = vmatprep.subr.mxu0 0.0
    %3576 = vmatpush1.xpose.msra.mxu0 0.0
    %3577 = vmatprep.subr.mxu0 0.0
    %3578 = vmatpush1.xpose.msra.mxu0 0.0
    %3579 = vmatprep.subr.mxu0 0.0
    %3580 = vmatpush1.xpose.msra.mxu0 0.0
    %3581 = vmatprep.subr.mxu0 0.0
    %3582 = vmatpush1.xpose.msra.mxu0 0.0
    %3583 = vmatprep.subr.mxu0 0.0
    %3584 = vmatpush1.xpose.msra.mxu0 0.0
    %3585 = vmatprep.subr.mxu0 0.0
    %3586 = vmatpush1.xpose.msra.mxu0 0.0
    %3587 = vmatprep.subr.mxu0 0.0
    %3588 = vmatpush1.xpose.msra.mxu0 0.0
    %3589 = vmatprep.subr.mxu0 0.0
    %3590 = vmatpush1.xpose.msra.mxu0 %v3557
    %3591 = vmatprep.subr.mxu0 0.0
    %3592 = vmatpush2.xpose.msra.mxu0 0.0
    %3593 = vmatprep.subr.mxu0 0.0
    %3594 = vmatpush2.xpose.msra.mxu0 0.0
    %3595 = vmatprep.subr.mxu0 0.0
    %3596 = vmatpush2.xpose.msra.mxu0 0.0
    %3597 = vmatprep.subr.mxu0 0.0
    %3598 = vmatpush2.xpose.msra.mxu0 0.0
    %3599 = vmatprep.subr.mxu0 0.0
    %3600 = vmatpush2.xpose.msra.mxu0 0.0
    %3601 = vmatprep.subr.mxu0 0.0
    %3602 = vmatpush2.xpose.msra.mxu0 0.0
    %3603 = vmatprep.subr.mxu0 0.0
    %3604 = vmatpush2.xpose.msra.mxu0 0.0
    %3605 = vmatprep.subr.mxu0 0.0
    %3606 = vmatpush2.xpose.msra.mxu0 0.0
    %3607 = vmatprep.subr.mxu0 0.0
    %3608 = vmatpush2.xpose.msra.mxu0 0.0
    %3609 = vmatprep.subr.mxu0 0.0
    %3610 = vmatpush2.xpose.msra.mxu0 0.0
    %3611 = vmatprep.subr.mxu0 0.0
    %3612 = vmatpush2.xpose.msra.mxu0 0.0
    %3613 = vmatprep.subr.mxu0 0.0
    %3614 = vmatpush2.xpose.msra.mxu0 0.0
    %3615 = vmatprep.subr.mxu0 0.0
    %3616 = vmatpush2.xpose.msra.mxu0 0.0
    %3617 = vmatprep.subr.mxu0 0.0
    %3618 = vmatpush2.xpose.msra.mxu0 0.0
    %3619 = vmatprep.subr.mxu0 0.0
    %3620 = vmatpush2.xpose.msra.mxu0 0.0
    %3621 = vmatprep.subr.mxu0 0.0
    %3622 = vmatpush2.xpose.msra.mxu0 0.0
    %3623 = vmatprep.mubr.f32.mxu0 0.0
    %3624 = vmatmul.mubr.f32.gmra.mxu0 %v3555
    %v3625 = vpop.f32.mrf.mxu0
    %v3626 = vadd.f32 0.0, %v3625
    %v3627 = vpop.f32.mrf.mxu0
    %3628 = vdwg.mxu0
    %v3629 = vmul.f32 %v3626, 0.17677669
    %v3630 = vsel %vm777, %v3629, -inf
    %3631 = vmax.xlane.f32.xlu0 %v3630
    %v3632 = vpop.xlane.xlu0 %3631
    %v3633 = vsub.f32 %v3629, %v3632
    %v3634 = vmul.f32 %v3633, 1.442695
    %v3635 = vpow.pop %v3634
    %v3636 = vsel %vm777, %v3635, 0.0
    %3637 = vadd.xlane.f32.xlu0 %v3636
    %v3638 = vpop.xlane.xlu0 %3637
    %v3639 = vrcp.pop %v3638
    %v3640 = vmul.f32 %v3635, %v3639
    %3642 = vrot.lane.b32.xlu0 %v3381, 96
    %v3643 = vpop.permute.xlu0 %3642
    %v3646 = vsel %vm777, %v3640, 0
    %3648 = vmatprep.subr.mxu0 0.0
    %3649 = vmatpush1.msra.mxu0 0.0
    %3650 = vmatprep.subr.mxu0 0.0
    %3651 = vmatpush1.msra.mxu0 0.0
    %3652 = vmatprep.subr.mxu0 0.0
    %3653 = vmatpush1.msra.mxu0 0.0
    %3654 = vmatprep.subr.mxu0 0.0
    %3655 = vmatpush1.msra.mxu0 0.0
    %3656 = vmatprep.subr.mxu0 0.0
    %3657 = vmatpush1.msra.mxu0 0.0
    %3658 = vmatprep.subr.mxu0 0.0
    %3659 = vmatpush1.msra.mxu0 0.0
    %3660 = vmatprep.subr.mxu0 0.0
    %3661 = vmatpush1.msra.mxu0 0.0
    %3662 = vmatprep.subr.mxu0 0.0
    %3663 = vmatpush1.msra.mxu0 0.0
    %3664 = vmatprep.subr.mxu0 0.0
    %3665 = vmatpush1.msra.mxu0 0.0
    %3666 = vmatprep.subr.mxu0 0.0
    %3667 = vmatpush1.msra.mxu0 0.0
    %3668 = vmatprep.subr.mxu0 0.0
    %3669 = vmatpush1.msra.mxu0 0.0
    %3670 = vmatprep.subr.mxu0 0.0
    %3671 = vmatpush1.msra.mxu0 0.0
    %3672 = vmatprep.subr.mxu0 0.0
    %3673 = vmatpush1.msra.mxu0 0.0
    %3674 = vmatprep.subr.mxu0 0.0
    %3675 = vmatpush1.msra.mxu0 0.0
    %3676 = vmatprep.subr.mxu0 0.0
    %3677 = vmatpush1.msra.mxu0 0.0
    %3678 = vmatprep.subr.mxu0 0.0
    %3679 = vmatpush1.msra.mxu0 %v3643
    %3680 = vmatprep.subr.mxu0 0.0
    %3681 = vmatpush2.msra.mxu0 0.0
    %3682 = vmatprep.subr.mxu0 0.0
    %3683 = vmatpush2.msra.mxu0 0.0
    %3684 = vmatprep.subr.mxu0 0.0
    %3685 = vmatpush2.msra.mxu0 0.0
    %3686 = vmatprep.subr.mxu0 0.0
    %3687 = vmatpush2.msra.mxu0 0.0
    %3688 = vmatprep.subr.mxu0 0.0
    %3689 = vmatpush2.msra.mxu0 0.0
    %3690 = vmatprep.subr.mxu0 0.0
    %3691 = vmatpush2.msra.mxu0 0.0
    %3692 = vmatprep.subr.mxu0 0.0
    %3693 = vmatpush2.msra.mxu0 0.0
    %3694 = vmatprep.subr.mxu0 0.0
    %3695 = vmatpush2.msra.mxu0 0.0
    %3696 = vmatprep.subr.mxu0 0.0
    %3697 = vmatpush2.msra.mxu0 0.0
    %3698 = vmatprep.subr.mxu0 0.0
    %3699 = vmatpush2.msra.mxu0 0.0
    %3700 = vmatprep.subr.mxu0 0.0
    %3701 = vmatpush2.msra.mxu0 0.0
    %3702 = vmatprep.subr.mxu0 0.0
    %3703 = vmatpush2.msra.mxu0 0.0
    %3704 = vmatprep.subr.mxu0 0.0
    %3705 = vmatpush2.msra.mxu0 0.0
    %3706 = vmatprep.subr.mxu0 0.0
    %3707 = vmatpush2.msra.mxu0 0.0
    %3708 = vmatprep.subr.mxu0 0.0
    %3709 = vmatpush2.msra.mxu0 0.0
    %3710 = vmatprep.subr.mxu0 0.0
    %3711 = vmatpush2.msra.mxu0 0.0
    %3712 = vmatprep.mubr.f32.mxu0 0.0
    %3713 = vmatmul.mubr.f32.gmra.mxu0 %v3646
    %v3714 = vpop.f32.mrf.mxu0
    %v3715 = vadd.f32 0.0, %v3714
    %v3716 = vpop.f32.mrf.mxu0
    %3717 = vdwg.mxu0
    %3719 = vrot.lane.b32.xlu0 %v3715, 32
    %v3720 = vpop.permute.xlu0 %3719
    %v3722 = vsel %vm1789, %v3548, %v3720
    %3724 = vrot.lane.b32.xlu0 %v3385, 64
    %v3725 = vpop.permute.xlu0 %3724
    %v3726 = vsel %vm1789, %v3385, 0
    %v3728 = vsel %vm1789, %v3725, 0
    %3730 = vmatprep.subr.mxu0 0.0
    %3731 = vmatpush1.xpose.msra.mxu0 0.0
    %3732 = vmatprep.subr.mxu0 0.0
    %3733 = vmatpush1.xpose.msra.mxu0 0.0
    %3734 = vmatprep.subr.mxu0 0.0
    %3735 = vmatpush1.xpose.msra.mxu0 0.0
    %3736 = vmatprep.subr.mxu0 0.0
    %3737 = vmatpush1.xpose.msra.mxu0 0.0
    %3738 = vmatprep.subr.mxu0 0.0
    %3739 = vmatpush1.xpose.msra.mxu0 0.0
    %3740 = vmatprep.subr.mxu0 0.0
    %3741 = vmatpush1.xpose.msra.mxu0 0.0
    %3742 = vmatprep.subr.mxu0 0.0
    %3743 = vmatpush1.xpose.msra.mxu0 0.0
    %3744 = vmatprep.subr.mxu0 0.0
    %3745 = vmatpush1.xpose.msra.mxu0 0.0
    %3746 = vmatprep.subr.mxu0 0.0
    %3747 = vmatpush1.xpose.msra.mxu0 0.0
    %3748 = vmatprep.subr.mxu0 0.0
    %3749 = vmatpush1.xpose.msra.mxu0 0.0
    %3750 = vmatprep.subr.mxu0 0.0
    %3751 = vmatpush1.xpose.msra.mxu0 0.0
    %3752 = vmatprep.subr.mxu0 0.0
    %3753 = vmatpush1.xpose.msra.mxu0 0.0
    %3754 = vmatprep.subr.mxu0 0.0
    %3755 = vmatpush1.xpose.msra.mxu0 0.0
    %3756 = vmatprep.subr.mxu0 0.0
    %3757 = vmatpush1.xpose.msra.mxu0 0.0
    %3758 = vmatprep.subr.mxu0 0.0
    %3759 = vmatpush1.xpose.msra.mxu0 0.0
    %3760 = vmatprep.subr.mxu0 0.0
    %3761 = vmatpush1.xpose.msra.mxu0 %v3728
    %3762 = vmatprep.subr.mxu0 0.0
    %3763 = vmatpush2.xpose.msra.mxu0 0.0
    %3764 = vmatprep.subr.mxu0 0.0
    %3765 = vmatpush2.xpose.msra.mxu0 0.0
    %3766 = vmatprep.subr.mxu0 0.0
    %3767 = vmatpush2.xpose.msra.mxu0 0.0
    %3768 = vmatprep.subr.mxu0 0.0
    %3769 = vmatpush2.xpose.msra.mxu0 0.0
    %3770 = vmatprep.subr.mxu0 0.0
    %3771 = vmatpush2.xpose.msra.mxu0 0.0
    %3772 = vmatprep.subr.mxu0 0.0
    %3773 = vmatpush2.xpose.msra.mxu0 0.0
    %3774 = vmatprep.subr.mxu0 0.0
    %3775 = vmatpush2.xpose.msra.mxu0 0.0
    %3776 = vmatprep.subr.mxu0 0.0
    %3777 = vmatpush2.xpose.msra.mxu0 0.0
    %3778 = vmatprep.subr.mxu0 0.0
    %3779 = vmatpush2.xpose.msra.mxu0 0.0
    %3780 = vmatprep.subr.mxu0 0.0
    %3781 = vmatpush2.xpose.msra.mxu0 0.0
    %3782 = vmatprep.subr.mxu0 0.0
    %3783 = vmatpush2.xpose.msra.mxu0 0.0
    %3784 = vmatprep.subr.mxu0 0.0
    %3785 = vmatpush2.xpose.msra.mxu0 0.0
    %3786 = vmatprep.subr.mxu0 0.0
    %3787 = vmatpush2.xpose.msra.mxu0 0.0
    %3788 = vmatprep.subr.mxu0 0.0
    %3789 = vmatpush2.xpose.msra.mxu0 0.0
    %3790 = vmatprep.subr.mxu0 0.0
    %3791 = vmatpush2.xpose.msra.mxu0 0.0
    %3792 = vmatprep.subr.mxu0 0.0
    %3793 = vmatpush2.xpose.msra.mxu0 0.0
    %3794 = vmatprep.mubr.f32.mxu0 0.0
    %3795 = vmatmul.mubr.f32.gmra.mxu0 %v3726
    %v3796 = vpop.f32.mrf.mxu0
    %v3797 = vadd.f32 0.0, %v3796
    %v3798 = vpop.f32.mrf.mxu0
    %3799 = vdwg.mxu0
    %v3800 = vmul.f32 %v3797, 0.17677669
    %v3801 = vsel %vm777, %v3800, -inf
    %3802 = vmax.xlane.f32.xlu0 %v3801
    %v3803 = vpop.xlane.xlu0 %3802
    %v3804 = vsub.f32 %v3800, %v3803
    %v3805 = vmul.f32 %v3804, 1.442695
    %v3806 = vpow.pop %v3805
    %v3807 = vsel %vm777, %v3806, 0.0
    %3808 = vadd.xlane.f32.xlu0 %v3807
    %v3809 = vpop.xlane.xlu0 %3808
    %v3810 = vrcp.pop %v3809
    %v3811 = vmul.f32 %v3806, %v3810
    %v3813 = vsel %vm777, %v3811, 0
    %3815 = vmatprep.subr.mxu0 0.0
    %3816 = vmatpush1.msra.mxu0 0.0
    %3817 = vmatprep.subr.mxu0 0.0
    %3818 = vmatpush1.msra.mxu0 0.0
    %3819 = vmatprep.subr.mxu0 0.0
    %3820 = vmatpush1.msra.mxu0 0.0
    %3821 = vmatprep.subr.mxu0 0.0
    %3822 = vmatpush1.msra.mxu0 0.0
    %3823 = vmatprep.subr.mxu0 0.0
    %3824 = vmatpush1.msra.mxu0 0.0
    %3825 = vmatprep.subr.mxu0 0.0
    %3826 = vmatpush1.msra.mxu0 0.0
    %3827 = vmatprep.subr.mxu0 0.0
    %3828 = vmatpush1.msra.mxu0 0.0
    %3829 = vmatprep.subr.mxu0 0.0
    %3830 = vmatpush1.msra.mxu0 0.0
    %3831 = vmatprep.subr.mxu0 0.0
    %3832 = vmatpush1.msra.mxu0 0.0
    %3833 = vmatprep.subr.mxu0 0.0
    %3834 = vmatpush1.msra.mxu0 0.0
    %3835 = vmatprep.subr.mxu0 0.0
    %3836 = vmatpush1.msra.mxu0 0.0
    %3837 = vmatprep.subr.mxu0 0.0
    %3838 = vmatpush1.msra.mxu0 0.0
    %3839 = vmatprep.subr.mxu0 0.0
    %3840 = vmatpush1.msra.mxu0 0.0
    %3841 = vmatprep.subr.mxu0 0.0
    %3842 = vmatpush1.msra.mxu0 0.0
    %3843 = vmatprep.subr.mxu0 0.0
    %3844 = vmatpush1.msra.mxu0 0.0
    %3845 = vmatprep.subr.mxu0 0.0
    %3846 = vmatpush1.msra.mxu0 %v3387
    %3847 = vmatprep.subr.mxu0 0.0
    %3848 = vmatpush2.msra.mxu0 0.0
    %3849 = vmatprep.subr.mxu0 0.0
    %3850 = vmatpush2.msra.mxu0 0.0
    %3851 = vmatprep.subr.mxu0 0.0
    %3852 = vmatpush2.msra.mxu0 0.0
    %3853 = vmatprep.subr.mxu0 0.0
    %3854 = vmatpush2.msra.mxu0 0.0
    %3855 = vmatprep.subr.mxu0 0.0
    %3856 = vmatpush2.msra.mxu0 0.0
    %3857 = vmatprep.subr.mxu0 0.0
    %3858 = vmatpush2.msra.mxu0 0.0
    %3859 = vmatprep.subr.mxu0 0.0
    %3860 = vmatpush2.msra.mxu0 0.0
    %3861 = vmatprep.subr.mxu0 0.0
    %3862 = vmatpush2.msra.mxu0 0.0
    %3863 = vmatprep.subr.mxu0 0.0
    %3864 = vmatpush2.msra.mxu0 0.0
    %3865 = vmatprep.subr.mxu0 0.0
    %3866 = vmatpush2.msra.mxu0 0.0
    %3867 = vmatprep.subr.mxu0 0.0
    %3868 = vmatpush2.msra.mxu0 0.0
    %3869 = vmatprep.subr.mxu0 0.0
    %3870 = vmatpush2.msra.mxu0 0.0
    %3871 = vmatprep.subr.mxu0 0.0
    %3872 = vmatpush2.msra.mxu0 0.0
    %3873 = vmatprep.subr.mxu0 0.0
    %3874 = vmatpush2.msra.mxu0 0.0
    %3875 = vmatprep.subr.mxu0 0.0
    %3876 = vmatpush2.msra.mxu0 0.0
    %3877 = vmatprep.subr.mxu0 0.0
    %3878 = vmatpush2.msra.mxu0 0.0
    %3879 = vmatprep.mubr.f32.mxu0 0.0
    %3880 = vmatmul.mubr.f32.gmra.mxu0 %v3813
    %v3881 = vpop.f32.mrf.mxu0
    %v3882 = vadd.f32 0.0, %v3881
    %v3883 = vpop.f32.mrf.mxu0
    %3884 = vdwg.mxu0
    %3885 = vrot.lane.b32.xlu0 %v3385, 96
    %v3886 = vpop.permute.xlu0 %3885
    %3887 = vrot.lane.b32.xlu0 %v3385, 32
    %v3888 = vpop.permute.xlu0 %3887
    %v3889 = vsel %vm1789, %v3886, 0
    %v3891 = vsel %vm1789, %v3888, 0
    %3893 = vmatprep.subr.mxu0 0.0
    %3894 = vmatpush1.xpose.msra.mxu0 0.0
    %3895 = vmatprep.subr.mxu0 0.0
    %3896 = vmatpush1.xpose.msra.mxu0 0.0
    %3897 = vmatprep.subr.mxu0 0.0
    %3898 = vmatpush1.xpose.msra.mxu0 0.0
    %3899 = vmatprep.subr.mxu0 0.0
    %3900 = vmatpush1.xpose.msra.mxu0 0.0
    %3901 = vmatprep.subr.mxu0 0.0
    %3902 = vmatpush1.xpose.msra.mxu0 0.0
    %3903 = vmatprep.subr.mxu0 0.0
    %3904 = vmatpush1.xpose.msra.mxu0 0.0
    %3905 = vmatprep.subr.mxu0 0.0
    %3906 = vmatpush1.xpose.msra.mxu0 0.0
    %3907 = vmatprep.subr.mxu0 0.0
    %3908 = vmatpush1.xpose.msra.mxu0 0.0
    %3909 = vmatprep.subr.mxu0 0.0
    %3910 = vmatpush1.xpose.msra.mxu0 0.0
    %3911 = vmatprep.subr.mxu0 0.0
    %3912 = vmatpush1.xpose.msra.mxu0 0.0
    %3913 = vmatprep.subr.mxu0 0.0
    %3914 = vmatpush1.xpose.msra.mxu0 0.0
    %3915 = vmatprep.subr.mxu0 0.0
    %3916 = vmatpush1.xpose.msra.mxu0 0.0
    %3917 = vmatprep.subr.mxu0 0.0
    %3918 = vmatpush1.xpose.msra.mxu0 0.0
    %3919 = vmatprep.subr.mxu0 0.0
    %3920 = vmatpush1.xpose.msra.mxu0 0.0
    %3921 = vmatprep.subr.mxu0 0.0
    %3922 = vmatpush1.xpose.msra.mxu0 0.0
    %3923 = vmatprep.subr.mxu0 0.0
    %3924 = vmatpush1.xpose.msra.mxu0 %v3891
    %3925 = vmatprep.subr.mxu0 0.0
    %3926 = vmatpush2.xpose.msra.mxu0 0.0
    %3927 = vmatprep.subr.mxu0 0.0
    %3928 = vmatpush2.xpose.msra.mxu0 0.0
    %3929 = vmatprep.subr.mxu0 0.0
    %3930 = vmatpush2.xpose.msra.mxu0 0.0
    %3931 = vmatprep.subr.mxu0 0.0
    %3932 = vmatpush2.xpose.msra.mxu0 0.0
    %3933 = vmatprep.subr.mxu0 0.0
    %3934 = vmatpush2.xpose.msra.mxu0 0.0
    %3935 = vmatprep.subr.mxu0 0.0
    %3936 = vmatpush2.xpose.msra.mxu0 0.0
    %3937 = vmatprep.subr.mxu0 0.0
    %3938 = vmatpush2.xpose.msra.mxu0 0.0
    %3939 = vmatprep.subr.mxu0 0.0
    %3940 = vmatpush2.xpose.msra.mxu0 0.0
    %3941 = vmatprep.subr.mxu0 0.0
    %3942 = vmatpush2.xpose.msra.mxu0 0.0
    %3943 = vmatprep.subr.mxu0 0.0
    %3944 = vmatpush2.xpose.msra.mxu0 0.0
    %3945 = vmatprep.subr.mxu0 0.0
    %3946 = vmatpush2.xpose.msra.mxu0 0.0
    %3947 = vmatprep.subr.mxu0 0.0
    %3948 = vmatpush2.xpose.msra.mxu0 0.0
    %3949 = vmatprep.subr.mxu0 0.0
    %3950 = vmatpush2.xpose.msra.mxu0 0.0
    %3951 = vmatprep.subr.mxu0 0.0
    %3952 = vmatpush2.xpose.msra.mxu0 0.0
    %3953 = vmatprep.subr.mxu0 0.0
    %3954 = vmatpush2.xpose.msra.mxu0 0.0
    %3955 = vmatprep.subr.mxu0 0.0
    %3956 = vmatpush2.xpose.msra.mxu0 0.0
    %3957 = vmatprep.mubr.f32.mxu0 0.0
    %3958 = vmatmul.mubr.f32.gmra.mxu0 %v3889
    %v3959 = vpop.f32.mrf.mxu0
    %v3960 = vadd.f32 0.0, %v3959
    %v3961 = vpop.f32.mrf.mxu0
    %3962 = vdwg.mxu0
    %v3963 = vmul.f32 %v3960, 0.17677669
    %v3964 = vsel %vm777, %v3963, -inf
    %3965 = vmax.xlane.f32.xlu0 %v3964
    %v3966 = vpop.xlane.xlu0 %3965
    %v3967 = vsub.f32 %v3963, %v3966
    %v3968 = vmul.f32 %v3967, 1.442695
    %v3969 = vpow.pop %v3968
    %v3970 = vsel %vm777, %v3969, 0.0
    %3971 = vadd.xlane.f32.xlu0 %v3970
    %v3972 = vpop.xlane.xlu0 %3971
    %v3973 = vrcp.pop %v3972
    %v3974 = vmul.f32 %v3969, %v3973
    %3976 = vrot.lane.b32.xlu0 %v3387, 96
    %v3977 = vpop.permute.xlu0 %3976
    %v3980 = vsel %vm777, %v3974, 0
    %3982 = vmatprep.subr.mxu0 0.0
    %3983 = vmatpush1.msra.mxu0 0.0
    %3984 = vmatprep.subr.mxu0 0.0
    %3985 = vmatpush1.msra.mxu0 0.0
    %3986 = vmatprep.subr.mxu0 0.0
    %3987 = vmatpush1.msra.mxu0 0.0
    %3988 = vmatprep.subr.mxu0 0.0
    %3989 = vmatpush1.msra.mxu0 0.0
    %3990 = vmatprep.subr.mxu0 0.0
    %3991 = vmatpush1.msra.mxu0 0.0
    %3992 = vmatprep.subr.mxu0 0.0
    %3993 = vmatpush1.msra.mxu0 0.0
    %3994 = vmatprep.subr.mxu0 0.0
    %3995 = vmatpush1.msra.mxu0 0.0
    %3996 = vmatprep.subr.mxu0 0.0
    %3997 = vmatpush1.msra.mxu0 0.0
    %3998 = vmatprep.subr.mxu0 0.0
    %3999 = vmatpush1.msra.mxu0 0.0
    %4000 = vmatprep.subr.mxu0 0.0
    %4001 = vmatpush1.msra.mxu0 0.0
    %4002 = vmatprep.subr.mxu0 0.0
    %4003 = vmatpush1.msra.mxu0 0.0
    %4004 = vmatprep.subr.mxu0 0.0
    %4005 = vmatpush1.msra.mxu0 0.0
    %4006 = vmatprep.subr.mxu0 0.0
    %4007 = vmatpush1.msra.mxu0 0.0
    %4008 = vmatprep.subr.mxu0 0.0
    %4009 = vmatpush1.msra.mxu0 0.0
    %4010 = vmatprep.subr.mxu0 0.0
    %4011 = vmatpush1.msra.mxu0 0.0
    %4012 = vmatprep.subr.mxu0 0.0
    %4013 = vmatpush1.msra.mxu0 %v3977
    %4014 = vmatprep.subr.mxu0 0.0
    %4015 = vmatpush2.msra.mxu0 0.0
    %4016 = vmatprep.subr.mxu0 0.0
    %4017 = vmatpush2.msra.mxu0 0.0
    %4018 = vmatprep.subr.mxu0 0.0
    %4019 = vmatpush2.msra.mxu0 0.0
    %4020 = vmatprep.subr.mxu0 0.0
    %4021 = vmatpush2.msra.mxu0 0.0
    %4022 = vmatprep.subr.mxu0 0.0
    %4023 = vmatpush2.msra.mxu0 0.0
    %4024 = vmatprep.subr.mxu0 0.0
    %4025 = vmatpush2.msra.mxu0 0.0
    %4026 = vmatprep.subr.mxu0 0.0
    %4027 = vmatpush2.msra.mxu0 0.0
    %4028 = vmatprep.subr.mxu0 0.0
    %4029 = vmatpush2.msra.mxu0 0.0
    %4030 = vmatprep.subr.mxu0 0.0
    %4031 = vmatpush2.msra.mxu0 0.0
    %4032 = vmatprep.subr.mxu0 0.0
    %4033 = vmatpush2.msra.mxu0 0.0
    %4034 = vmatprep.subr.mxu0 0.0
    %4035 = vmatpush2.msra.mxu0 0.0
    %4036 = vmatprep.subr.mxu0 0.0
    %4037 = vmatpush2.msra.mxu0 0.0
    %4038 = vmatprep.subr.mxu0 0.0
    %4039 = vmatpush2.msra.mxu0 0.0
    %4040 = vmatprep.subr.mxu0 0.0
    %4041 = vmatpush2.msra.mxu0 0.0
    %4042 = vmatprep.subr.mxu0 0.0
    %4043 = vmatpush2.msra.mxu0 0.0
    %4044 = vmatprep.subr.mxu0 0.0
    %4045 = vmatpush2.msra.mxu0 0.0
    %4046 = vmatprep.mubr.f32.mxu0 0.0
    %4047 = vmatmul.mubr.f32.gmra.mxu0 %v3980
    %v4048 = vpop.f32.mrf.mxu0
    %v4049 = vadd.f32 0.0, %v4048
    %v4050 = vpop.f32.mrf.mxu0
    %4051 = vdwg.mxu0
    %4053 = vrot.lane.b32.xlu0 %v4049, 32
    %v4054 = vpop.permute.xlu0 %4053
    %v4056 = vsel %vm1789, %v3882, %v4054
    %v4058 = vsel %vm628, %v3722, 0
    %v4061 = vsel %vm628, %v4056, 0
    %4063 = vmatprep.subr.mxu0 0.0
    %4064 = vmatpush1.msra.mxu0 0.0
    %4065 = vmatprep.subr.mxu0 0.0
    %4066 = vmatpush1.msra.mxu0 0.0
    %4067 = vmatprep.subr.mxu0 0.0
    %4068 = vmatpush1.msra.mxu0 0.0
    %4069 = vmatprep.subr.mxu0 0.0
    %4070 = vmatpush1.msra.mxu0 0.0
    %4071 = vmatprep.subr.mxu0 0.0
    %4072 = vmatpush1.msra.mxu0 0.0
    %4073 = vmatprep.subr.mxu0 0.0
    %4074 = vmatpush1.msra.mxu0 0.0
    %4075 = vmatprep.subr.mxu0 0.0
    %4076 = vmatpush1.msra.mxu0 0.0
    %4077 = vmatprep.subr.mxu0 0.0
    %4078 = vmatpush1.msra.mxu0 0.0
    %4079 = vmatprep.subr.mxu0 0.0
    %4080 = vmatpush1.msra.mxu0 %v551
    %4081 = vmatprep.subr.mxu0 0.0
    %4082 = vmatpush1.msra.mxu0 %v550
    %4083 = vmatprep.subr.mxu0 0.0
    %4084 = vmatpush1.msra.mxu0 %v549
    %4085 = vmatprep.subr.mxu0 0.0
    %4086 = vmatpush1.msra.mxu0 %v548
    %4087 = vmatprep.subr.mxu0 0.0
    %4088 = vmatpush1.msra.mxu0 %v547
    %4089 = vmatprep.subr.mxu0 0.0
    %4090 = vmatpush1.msra.mxu0 %v546
    %4091 = vmatprep.subr.mxu0 0.0
    %4092 = vmatpush1.msra.mxu0 %v545
    %4093 = vmatprep.subr.mxu0 0.0
    %4094 = vmatpush1.msra.mxu0 %v544
    %4095 = vmatprep.subr.mxu0 0.0
    %4096 = vmatpush2.msra.mxu0 0.0
    %4097 = vmatprep.subr.mxu0 0.0
    %4098 = vmatpush2.msra.mxu0 0.0
    %4099 = vmatprep.subr.mxu0 0.0
    %4100 = vmatpush2.msra.mxu0 0.0
    %4101 = vmatprep.subr.mxu0 0.0
    %4102 = vmatpush2.msra.mxu0 0.0
    %4103 = vmatprep.subr.mxu0 0.0
    %4104 = vmatpush2.msra.mxu0 0.0
    %4105 = vmatprep.subr.mxu0 0.0
    %4106 = vmatpush2.msra.mxu0 0.0
    %4107 = vmatprep.subr.mxu0 0.0
    %4108 = vmatpush2.msra.mxu0 0.0
    %4109 = vmatprep.subr.mxu0 0.0
    %4110 = vmatpush2.msra.mxu0 0.0
    %4111 = vmatprep.subr.mxu0 0.0
    %4112 = vmatpush2.msra.mxu0 0.0
    %4113 = vmatprep.subr.mxu0 0.0
    %4114 = vmatpush2.msra.mxu0 0.0
    %4115 = vmatprep.subr.mxu0 0.0
    %4116 = vmatpush2.msra.mxu0 0.0
    %4117 = vmatprep.subr.mxu0 0.0
    %4118 = vmatpush2.msra.mxu0 0.0
    %4119 = vmatprep.subr.mxu0 0.0
    %4120 = vmatpush2.msra.mxu0 0.0
    %4121 = vmatprep.subr.mxu0 0.0
    %4122 = vmatpush2.msra.mxu0 0.0
    %4123 = vmatprep.subr.mxu0 0.0
    %4124 = vmatpush2.msra.mxu0 0.0
    %4125 = vmatprep.subr.mxu0 0.0
    %4126 = vmatpush2.msra.mxu0 0.0
    %4127 = vmatprep.mubr.f32.mxu0 0.0
    %4128 = vmatmul.mubr.f32.gmra.mxu0 %v4058
    %v4129 = vpop.f32.mrf.mxu0
    %v4130 = vadd.f32 0.0, %v4129
    %v4131 = vpop.f32.mrf.mxu0
    %4132 = vmatprep.mubr.f32.mxu0 0.0
    %4133 = vmatmul.mubr.f32.gmra.mxu0 %v4061
    %v4134 = vpop.f32.mrf.mxu0
    %v4135 = vadd.f32 0.0, %v4134
    %v4136 = vpop.f32.mrf.mxu0
    %4137 = vdwg.mxu0
    %v4139 = vlaneseq
    %v4140 = vshrl.u32 %v4139, 7
    %v4141 = vsub.s32 0, %v4140
    %v4142 = vrot.slane %v560, %v4141
    %v4145 = vsel %vm628, %v3280, 0
    %v4148 = vsel %vm628, %v3281, 0
    %4150 = vmatprep.subr.mxu0 0.0
    %4151 = vmatpush1.msra.mxu0 0.0
    %4152 = vmatprep.subr.mxu0 0.0
    %4153 = vmatpush1.msra.mxu0 0.0
    %4154 = vmatprep.subr.mxu0 0.0
    %4155 = vmatpush1.msra.mxu0 0.0
    %4156 = vmatprep.subr.mxu0 0.0
    %4157 = vmatpush1.msra.mxu0 0.0
    %4158 = vmatprep.subr.mxu0 0.0
    %4159 = vmatpush1.msra.mxu0 0.0
    %4160 = vmatprep.subr.mxu0 0.0
    %4161 = vmatpush1.msra.mxu0 0.0
    %4162 = vmatprep.subr.mxu0 0.0
    %4163 = vmatpush1.msra.mxu0 0.0
    %4164 = vmatprep.subr.mxu0 0.0
    %4165 = vmatpush1.msra.mxu0 0.0
    %4166 = vmatprep.subr.mxu0 0.0
    %4167 = vmatpush1.msra.mxu0 %v559
    %4168 = vmatprep.subr.mxu0 0.0
    %4169 = vmatpush1.msra.mxu0 %v558
    %4170 = vmatprep.subr.mxu0 0.0
    %4171 = vmatpush1.msra.mxu0 %v557
    %4172 = vmatprep.subr.mxu0 0.0
    %4173 = vmatpush1.msra.mxu0 %v556
    %4174 = vmatprep.subr.mxu0 0.0
    %4175 = vmatpush1.msra.mxu0 %v555
    %4176 = vmatprep.subr.mxu0 0.0
    %4177 = vmatpush1.msra.mxu0 %v554
    %4178 = vmatprep.subr.mxu0 0.0
    %4179 = vmatpush1.msra.mxu0 %v553
    %4180 = vmatprep.subr.mxu0 0.0
    %4181 = vmatpush1.msra.mxu0 %v552
    %4182 = vmatprep.subr.mxu0 0.0
    %4183 = vmatpush2.msra.mxu0 0.0
    %4184 = vmatprep.subr.mxu0 0.0
    %4185 = vmatpush2.msra.mxu0 0.0
    %4186 = vmatprep.subr.mxu0 0.0
    %4187 = vmatpush2.msra.mxu0 0.0
    %4188 = vmatprep.subr.mxu0 0.0
    %4189 = vmatpush2.msra.mxu0 0.0
    %4190 = vmatprep.subr.mxu0 0.0
    %4191 = vmatpush2.msra.mxu0 0.0
    %4192 = vmatprep.subr.mxu0 0.0
    %4193 = vmatpush2.msra.mxu0 0.0
    %4194 = vmatprep.subr.mxu0 0.0
    %4195 = vmatpush2.msra.mxu0 0.0
    %4196 = vmatprep.subr.mxu0 0.0
    %4197 = vmatpush2.msra.mxu0 0.0
    %4198 = vmatprep.subr.mxu0 0.0
    %4199 = vmatpush2.msra.mxu0 0.0
    %4200 = vmatprep.subr.mxu0 0.0
    %4201 = vmatpush2.msra.mxu0 0.0
    %4202 = vmatprep.subr.mxu0 0.0
    %4203 = vmatpush2.msra.mxu0 0.0
    %4204 = vmatprep.subr.mxu0 0.0
    %4205 = vmatpush2.msra.mxu0 0.0
    %4206 = vmatprep.subr.mxu0 0.0
    %4207 = vmatpush2.msra.mxu0 0.0
    %4208 = vmatprep.subr.mxu0 0.0
    %4209 = vmatpush2.msra.mxu0 0.0
    %4210 = vmatprep.subr.mxu0 0.0
    %4211 = vmatpush2.msra.mxu0 0.0
    %4212 = vmatprep.subr.mxu0 0.0
    %4213 = vmatpush2.msra.mxu0 0.0
    %4214 = vmatprep.mubr.f32.mxu0 0.0
    %4215 = vmatmul.mubr.f32.gmra.mxu0 %v4145
    %v4216 = vpop.f32.mrf.mxu0
    %v4217 = vadd.f32 %v4142, %v4216
    %v4218 = vpop.f32.mrf.mxu0
    %4219 = vmatprep.mubr.f32.mxu0 0.0
    %4220 = vmatmul.mubr.f32.gmra.mxu0 %v4148
    %v4221 = vpop.f32.mrf.mxu0
    %v4222 = vadd.f32 %v4142, %v4221
    %v4223 = vpop.f32.mrf.mxu0
    %4224 = vdwg.mxu0
    %v4225 = vxor.u32 %v4217, 2147483648
    %v4226 = vxor.u32 %v4222, 2147483648
    %v4227 = vmul.f32 %v4225, 1.442695
    %v4228 = vpow.pop %v4227
    %v4229 = vmul.f32 %v4226, 1.442695
    %v4230 = vpow.pop %v4229
    %v4231 = vadd.f32 %v4228, 1.0
    %v4232 = vadd.f32 %v4230, 1.0
    %v4233 = vrcp.pop %v4231
    %v4234 = vmul.f32 1.0, %v4233
    %v4235 = vrcp.pop %v4232
    %v4236 = vmul.f32 1.0, %v4235
    %v4237 = vmul.f32 %v4234, %v4130
    %v4238 = vmul.f32 %v4236, %v4135
    %v4239 = vsub.f32 1.0, %v4234
    %v4240 = vsub.f32 1.0, %v4236
    %v4241 = vmul.f32 %v4239, %v3280
    %v4242 = vmul.f32 %v4240, %v3281
    %v4243 = vadd.f32 %v4237, %v4241
    %v4244 = vadd.f32 %v4238, %v4242
    %v4246 = vrot.slane %v4243, 7
    %v4249 = vrot.slane %v4244, 6
    %vm4251 = vcmask 1040384
    %v4252 = vsel %vm4251, %v4246, %v4249
    %v4254 = vlaneseq
    %v4255 = vshrl.u32 %v4254, 7
    %v4256 = vsub.s32 0, %v4255
    %v4257 = vrot.slane %v569, %v4256
    %v4260 = vsel %vm628, %v4252, 0
    %4262 = vmatprep.subr.mxu0 0.0
    %4263 = vmatpush1.msra.mxu0 0.0
    %4264 = vmatprep.subr.mxu0 0.0
    %4265 = vmatpush1.msra.mxu0 0.0
    %4266 = vmatprep.subr.mxu0 0.0
    %4267 = vmatpush1.msra.mxu0 0.0
    %4268 = vmatprep.subr.mxu0 0.0
    %4269 = vmatpush1.msra.mxu0 0.0
    %4270 = vmatprep.subr.mxu0 0.0
    %4271 = vmatpush1.msra.mxu0 0.0
    %4272 = vmatprep.subr.mxu0 0.0
    %4273 = vmatpush1.msra.mxu0 0.0
    %4274 = vmatprep.subr.mxu0 0.0
    %4275 = vmatpush1.msra.mxu0 0.0
    %4276 = vmatprep.subr.mxu0 0.0
    %4277 = vmatpush1.msra.mxu0 0.0
    %4278 = vmatprep.subr.mxu0 0.0
    %4279 = vmatpush1.msra.mxu0 %v568
    %4280 = vmatprep.subr.mxu0 0.0
    %4281 = vmatpush1.msra.mxu0 %v567
    %4282 = vmatprep.subr.mxu0 0.0
    %4283 = vmatpush1.msra.mxu0 %v566
    %4284 = vmatprep.subr.mxu0 0.0
    %4285 = vmatpush1.msra.mxu0 %v565
    %4286 = vmatprep.subr.mxu0 0.0
    %4287 = vmatpush1.msra.mxu0 %v564
    %4288 = vmatprep.subr.mxu0 0.0
    %4289 = vmatpush1.msra.mxu0 %v563
    %4290 = vmatprep.subr.mxu0 0.0
    %4291 = vmatpush1.msra.mxu0 %v562
    %4292 = vmatprep.subr.mxu0 0.0
    %4293 = vmatpush1.msra.mxu0 %v561
    %4294 = vmatprep.subr.mxu0 0.0
    %4295 = vmatpush2.msra.mxu0 0.0
    %4296 = vmatprep.subr.mxu0 0.0
    %4297 = vmatpush2.msra.mxu0 0.0
    %4298 = vmatprep.subr.mxu0 0.0
    %4299 = vmatpush2.msra.mxu0 0.0
    %4300 = vmatprep.subr.mxu0 0.0
    %4301 = vmatpush2.msra.mxu0 0.0
    %4302 = vmatprep.subr.mxu0 0.0
    %4303 = vmatpush2.msra.mxu0 0.0
    %4304 = vmatprep.subr.mxu0 0.0
    %4305 = vmatpush2.msra.mxu0 0.0
    %4306 = vmatprep.subr.mxu0 0.0
    %4307 = vmatpush2.msra.mxu0 0.0
    %4308 = vmatprep.subr.mxu0 0.0
    %4309 = vmatpush2.msra.mxu0 0.0
    %4310 = vmatprep.subr.mxu0 0.0
    %4311 = vmatpush2.msra.mxu0 0.0
    %4312 = vmatprep.subr.mxu0 0.0
    %4313 = vmatpush2.msra.mxu0 0.0
    %4314 = vmatprep.subr.mxu0 0.0
    %4315 = vmatpush2.msra.mxu0 0.0
    %4316 = vmatprep.subr.mxu0 0.0
    %4317 = vmatpush2.msra.mxu0 0.0
    %4318 = vmatprep.subr.mxu0 0.0
    %4319 = vmatpush2.msra.mxu0 0.0
    %4320 = vmatprep.subr.mxu0 0.0
    %4321 = vmatpush2.msra.mxu0 0.0
    %4322 = vmatprep.subr.mxu0 0.0
    %4323 = vmatpush2.msra.mxu0 0.0
    %4324 = vmatprep.subr.mxu0 0.0
    %4325 = vmatpush2.msra.mxu0 0.0
    %4326 = vmatprep.mubr.f32.mxu0 0.0
    %4327 = vmatmul.mubr.f32.gmra.mxu0 %v4260
    %v4328 = vpop.f32.mrf.mxu0
    %v4329 = vadd.f32 %v4257, %v4328
    %v4330 = vpop.f32.mrf.mxu0
    %4331 = vdwg.mxu0
    %v4333 = vlaneseq
    %v4334 = vshrl.u32 %v4333, 7
    %v4335 = vsub.s32 0, %v4334
    %v4336 = vrot.slane %v578, %v4335
    %v4338 = vsel %vm628, %v4243, 0
    %v4340 = vsel %vm628, %v4244, 0
    %4342 = vmatprep.subr.mxu0 0.0
    %4343 = vmatpush1.msra.mxu0 0.0
    %4344 = vmatprep.subr.mxu0 0.0
    %4345 = vmatpush1.msra.mxu0 0.0
    %4346 = vmatprep.subr.mxu0 0.0
    %4347 = vmatpush1.msra.mxu0 0.0
    %4348 = vmatprep.subr.mxu0 0.0
    %4349 = vmatpush1.msra.mxu0 0.0
    %4350 = vmatprep.subr.mxu0 0.0
    %4351 = vmatpush1.msra.mxu0 0.0
    %4352 = vmatprep.subr.mxu0 0.0
    %4353 = vmatpush1.msra.mxu0 0.0
    %4354 = vmatprep.subr.mxu0 0.0
    %4355 = vmatpush1.msra.mxu0 0.0
    %4356 = vmatprep.subr.mxu0 0.0
    %4357 = vmatpush1.msra.mxu0 0.0
    %4358 = vmatprep.subr.mxu0 0.0
    %4359 = vmatpush1.msra.mxu0 %v577
    %4360 = vmatprep.subr.mxu0 0.0
    %4361 = vmatpush1.msra.mxu0 %v576
    %4362 = vmatprep.subr.mxu0 0.0
    %4363 = vmatpush1.msra.mxu0 %v575
    %4364 = vmatprep.subr.mxu0 0.0
    %4365 = vmatpush1.msra.mxu0 %v574
    %4366 = vmatprep.subr.mxu0 0.0
    %4367 = vmatpush1.msra.mxu0 %v573
    %4368 = vmatprep.subr.mxu0 0.0
    %4369 = vmatpush1.msra.mxu0 %v572
    %4370 = vmatprep.subr.mxu0 0.0
    %4371 = vmatpush1.msra.mxu0 %v571
    %4372 = vmatprep.subr.mxu0 0.0
    %4373 = vmatpush1.msra.mxu0 %v570
    %4374 = vmatprep.subr.mxu0 0.0
    %4375 = vmatpush2.msra.mxu0 0.0
    %4376 = vmatprep.subr.mxu0 0.0
    %4377 = vmatpush2.msra.mxu0 0.0
    %4378 = vmatprep.subr.mxu0 0.0
    %4379 = vmatpush2.msra.mxu0 0.0
    %4380 = vmatprep.subr.mxu0 0.0
    %4381 = vmatpush2.msra.mxu0 0.0
    %4382 = vmatprep.subr.mxu0 0.0
    %4383 = vmatpush2.msra.mxu0 0.0
    %4384 = vmatprep.subr.mxu0 0.0
    %4385 = vmatpush2.msra.mxu0 0.0
    %4386 = vmatprep.subr.mxu0 0.0
    %4387 = vmatpush2.msra.mxu0 0.0
    %4388 = vmatprep.subr.mxu0 0.0
    %4389 = vmatpush2.msra.mxu0 0.0
    %4390 = vmatprep.subr.mxu0 0.0
    %4391 = vmatpush2.msra.mxu0 0.0
    %4392 = vmatprep.subr.mxu0 0.0
    %4393 = vmatpush2.msra.mxu0 0.0
    %4394 = vmatprep.subr.mxu0 0.0
    %4395 = vmatpush2.msra.mxu0 0.0
    %4396 = vmatprep.subr.mxu0 0.0
    %4397 = vmatpush2.msra.mxu0 0.0
    %4398 = vmatprep.subr.mxu0 0.0
    %4399 = vmatpush2.msra.mxu0 0.0
    %4400 = vmatprep.subr.mxu0 0.0
    %4401 = vmatpush2.msra.mxu0 0.0
    %4402 = vmatprep.subr.mxu0 0.0
    %4403 = vmatpush2.msra.mxu0 0.0
    %4404 = vmatprep.subr.mxu0 0.0
    %4405 = vmatpush2.msra.mxu0 0.0
    %4406 = vmatprep.mubr.f32.mxu0 0.0
    %4407 = vmatmul.mubr.f32.gmra.mxu0 %v4338
    %v4408 = vpop.f32.mrf.mxu0
    %v4409 = vadd.f32 %v4336, %v4408
    %v4410 = vpop.f32.mrf.mxu0
    %4411 = vmatprep.mubr.f32.mxu0 0.0
    %4412 = vmatmul.mubr.f32.gmra.mxu0 %v4340
    %v4413 = vpop.f32.mrf.mxu0
    %v4414 = vadd.f32 %v4336, %v4413
    %v4415 = vpop.f32.mrf.mxu0
    %4416 = vdwg.mxu0
    %v4417 = vxor.u32 %v4409, 2147483648
    %v4418 = vxor.u32 %v4414, 2147483648
    %v4419 = vmul.f32 %v4417, 1.442695
    %v4420 = vpow.pop %v4419
    %v4421 = vmul.f32 %v4418, 1.442695
    %v4422 = vpow.pop %v4421
    %v4423 = vadd.f32 %v4420, 1.0
    %v4424 = vadd.f32 %v4422, 1.0
    %v4425 = vrcp.pop %v4423
    %v4426 = vmul.f32 1.0, %v4425
    %v4427 = vrcp.pop %v4424
    %v4428 = vmul.f32 1.0, %v4427
    %v4430 = vlaneseq
    %v4431 = vshrl.u32 %v4430, 7
    %v4432 = vsub.s32 0, %v4431
    %v4433 = vrot.slane %v588, %v4432
    %4435 = vmatprep.subr.mxu0 0.0
    %4436 = vmatpush1.msra.mxu0 0.0
    %4437 = vmatprep.subr.mxu0 0.0
    %4438 = vmatpush1.msra.mxu0 0.0
    %4439 = vmatprep.subr.mxu0 0.0
    %4440 = vmatpush1.msra.mxu0 0.0
    %4441 = vmatprep.subr.mxu0 0.0
    %4442 = vmatpush1.msra.mxu0 0.0
    %4443 = vmatprep.subr.mxu0 0.0
    %4444 = vmatpush1.msra.mxu0 0.0
    %4445 = vmatprep.subr.mxu0 0.0
    %4446 = vmatpush1.msra.mxu0 0.0
    %4447 = vmatprep.subr.mxu0 0.0
    %4448 = vmatpush1.msra.mxu0 0.0
    %4449 = vmatprep.subr.mxu0 0.0
    %4450 = vmatpush1.msra.mxu0 0.0
    %4451 = vmatprep.subr.mxu0 0.0
    %4452 = vmatpush1.msra.mxu0 %v587
    %4453 = vmatprep.subr.mxu0 0.0
    %4454 = vmatpush1.msra.mxu0 %v586
    %4455 = vmatprep.subr.mxu0 0.0
    %4456 = vmatpush1.msra.mxu0 %v585
    %4457 = vmatprep.subr.mxu0 0.0
    %4458 = vmatpush1.msra.mxu0 %v584
    %4459 = vmatprep.subr.mxu0 0.0
    %4460 = vmatpush1.msra.mxu0 %v583
    %4461 = vmatprep.subr.mxu0 0.0
    %4462 = vmatpush1.msra.mxu0 %v582
    %4463 = vmatprep.subr.mxu0 0.0
    %4464 = vmatpush1.msra.mxu0 %v581
    %4465 = vmatprep.subr.mxu0 0.0
    %4466 = vmatpush1.msra.mxu0 %v580
    %4467 = vmatprep.subr.mxu0 0.0
    %4468 = vmatpush2.msra.mxu0 0.0
    %4469 = vmatprep.subr.mxu0 0.0
    %4470 = vmatpush2.msra.mxu0 0.0
    %4471 = vmatprep.subr.mxu0 0.0
    %4472 = vmatpush2.msra.mxu0 0.0
    %4473 = vmatprep.subr.mxu0 0.0
    %4474 = vmatpush2.msra.mxu0 0.0
    %4475 = vmatprep.subr.mxu0 0.0
    %4476 = vmatpush2.msra.mxu0 0.0
    %4477 = vmatprep.subr.mxu0 0.0
    %4478 = vmatpush2.msra.mxu0 0.0
    %4479 = vmatprep.subr.mxu0 0.0
    %4480 = vmatpush2.msra.mxu0 0.0
    %4481 = vmatprep.subr.mxu0 0.0
    %4482 = vmatpush2.msra.mxu0 0.0
    %4483 = vmatprep.subr.mxu0 0.0
    %4484 = vmatpush2.msra.mxu0 0.0
    %4485 = vmatprep.subr.mxu0 0.0
    %4486 = vmatpush2.msra.mxu0 0.0
    %4487 = vmatprep.subr.mxu0 0.0
    %4488 = vmatpush2.msra.mxu0 0.0
    %4489 = vmatprep.subr.mxu0 0.0
    %4490 = vmatpush2.msra.mxu0 0.0
    %4491 = vmatprep.subr.mxu0 0.0
    %4492 = vmatpush2.msra.mxu0 0.0
    %4493 = vmatprep.subr.mxu0 0.0
    %4494 = vmatpush2.msra.mxu0 0.0
    %4495 = vmatprep.subr.mxu0 0.0
    %4496 = vmatpush2.msra.mxu0 0.0
    %4497 = vmatprep.subr.mxu0 0.0
    %4498 = vmatpush2.msra.mxu0 0.0
    %4499 = vmatprep.mubr.f32.mxu0 0.0
    %4500 = vmatmul.mubr.f32.gmra.mxu0 %v4338
    %v4501 = vpop.f32.mrf.mxu0
    %v4502 = vadd.f32 %v4433, %v4501
    %v4503 = vpop.f32.mrf.mxu0
    %4504 = vmatprep.mubr.f32.mxu0 0.0
    %4505 = vmatmul.mubr.f32.gmra.mxu0 %v4340
    %v4506 = vpop.f32.mrf.mxu0
    %v4507 = vadd.f32 %v4433, %v4506
    %v4508 = vpop.f32.mrf.mxu0
    %4509 = vdwg.mxu0
    %v4511 = vsel %vm1789, %v579, 0
    %4513 = vmatprep.subr.mxu0 0.0
    %4514 = vmatpush1.msra.mxu0 0.0
    %4515 = vmatprep.subr.mxu0 0.0
    %4516 = vmatpush1.msra.mxu0 0.0
    %4517 = vmatprep.subr.mxu0 0.0
    %4518 = vmatpush1.msra.mxu0 0.0
    %4519 = vmatprep.subr.mxu0 0.0
    %4520 = vmatpush1.msra.mxu0 0.0
    %4521 = vmatprep.subr.mxu0 0.0
    %4522 = vmatpush1.msra.mxu0 0.0
    %4523 = vmatprep.subr.mxu0 0.0
    %4524 = vmatpush1.msra.mxu0 0.0
    %4525 = vmatprep.subr.mxu0 0.0
    %4526 = vmatpush1.msra.mxu0 0.0
    %4527 = vmatprep.subr.mxu0 0.0
    %4528 = vmatpush1.msra.mxu0 0.0
    %4529 = vmatprep.subr.mxu0 0.0
    %4530 = vmatpush1.msra.mxu0 0.0
    %4531 = vmatprep.subr.mxu0 0.0
    %4532 = vmatpush1.msra.mxu0 0.0
    %4533 = vmatprep.subr.mxu0 0.0
    %4534 = vmatpush1.msra.mxu0 0.0
    %4535 = vmatprep.subr.mxu0 0.0
    %4536 = vmatpush1.msra.mxu0 0.0
    %4537 = vmatprep.subr.mxu0 0.0
    %4538 = vmatpush1.msra.mxu0 %v597
    %4539 = vmatprep.subr.mxu0 0.0
    %4540 = vmatpush1.msra.mxu0 %v596
    %4541 = vmatprep.subr.mxu0 0.0
    %4542 = vmatpush1.msra.mxu0 %v595
    %4543 = vmatprep.subr.mxu0 0.0
    %4544 = vmatpush1.msra.mxu0 %v594
    %4545 = vmatprep.subr.mxu0 0.0
    %4546 = vmatpush2.msra.mxu0 0.0
    %4547 = vmatprep.subr.mxu0 0.0
    %4548 = vmatpush2.msra.mxu0 0.0
    %4549 = vmatprep.subr.mxu0 0.0
    %4550 = vmatpush2.msra.mxu0 0.0
    %4551 = vmatprep.subr.mxu0 0.0
    %4552 = vmatpush2.msra.mxu0 0.0
    %4553 = vmatprep.subr.mxu0 0.0
    %4554 = vmatpush2.msra.mxu0 0.0
    %4555 = vmatprep.subr.mxu0 0.0
    %4556 = vmatpush2.msra.mxu0 0.0
    %4557 = vmatprep.subr.mxu0 0.0
    %4558 = vmatpush2.msra.mxu0 0.0
    %4559 = vmatprep.subr.mxu0 0.0
    %4560 = vmatpush2.msra.mxu0 0.0
    %4561 = vmatprep.subr.mxu0 0.0
    %4562 = vmatpush2.msra.mxu0 0.0
    %4563 = vmatprep.subr.mxu0 0.0
    %4564 = vmatpush2.msra.mxu0 0.0
    %4565 = vmatprep.subr.mxu0 0.0
    %4566 = vmatpush2.msra.mxu0 0.0
    %4567 = vmatprep.subr.mxu0 0.0
    %4568 = vmatpush2.msra.mxu0 0.0
    %4569 = vmatprep.subr.mxu0 0.0
    %4570 = vmatpush2.msra.mxu0 0.0
    %4571 = vmatprep.subr.mxu0 0.0
    %4572 = vmatpush2.msra.mxu0 0.0
    %4573 = vmatprep.subr.mxu0 0.0
    %4574 = vmatpush2.msra.mxu0 0.0
    %4575 = vmatprep.subr.mxu0 0.0
    %4576 = vmatpush2.msra.mxu0 0.0
    %4577 = vmatprep.mubr.f32.mxu0 0.0
    %4578 = vmatmul.mubr.f32.gmra.mxu0 %v4511
    %v4579 = vpop.f32.mrf.mxu0
    %v4580 = vadd.f32 0.0, %v4579
    %v4581 = vpop.f32.mrf.mxu0
    %4582 = vdwg.mxu0
    %v4584 = vsel %vm1789, %v4502, 0
    %v4587 = vsel %vm1789, %v4507, 0
    %4589 = vmatprep.subr.mxu0 0.0
    %4590 = vmatpush1.msra.mxu0 0.0
    %4591 = vmatprep.subr.mxu0 0.0
    %4592 = vmatpush1.msra.mxu0 0.0
    %4593 = vmatprep.subr.mxu0 0.0
    %4594 = vmatpush1.msra.mxu0 0.0
    %4595 = vmatprep.subr.mxu0 0.0
    %4596 = vmatpush1.msra.mxu0 0.0
    %4597 = vmatprep.subr.mxu0 0.0
    %4598 = vmatpush1.msra.mxu0 0.0
    %4599 = vmatprep.subr.mxu0 0.0
    %4600 = vmatpush1.msra.mxu0 0.0
    %4601 = vmatprep.subr.mxu0 0.0
    %4602 = vmatpush1.msra.mxu0 0.0
    %4603 = vmatprep.subr.mxu0 0.0
    %4604 = vmatpush1.msra.mxu0 0.0
    %4605 = vmatprep.subr.mxu0 0.0
    %4606 = vmatpush1.msra.mxu0 0.0
    %4607 = vmatprep.subr.mxu0 0.0
    %4608 = vmatpush1.msra.mxu0 0.0
    %4609 = vmatprep.subr.mxu0 0.0
    %4610 = vmatpush1.msra.mxu0 0.0
    %4611 = vmatprep.subr.mxu0 0.0
    %4612 = vmatpush1.msra.mxu0 0.0
    %4613 = vmatprep.subr.mxu0 0.0
    %4614 = vmatpush1.msra.mxu0 %v601
    %4615 = vmatprep.subr.mxu0 0.0
    %4616 = vmatpush1.msra.mxu0 %v600
    %4617 = vmatprep.subr.mxu0 0.0
    %4618 = vmatpush1.msra.mxu0 %v599
    %4619 = vmatprep.subr.mxu0 0.0
    %4620 = vmatpush1.msra.mxu0 %v598
    %4621 = vmatprep.subr.mxu0 0.0
    %4622 = vmatpush2.msra.mxu0 0.0
    %4623 = vmatprep.subr.mxu0 0.0
    %4624 = vmatpush2.msra.mxu0 0.0
    %4625 = vmatprep.subr.mxu0 0.0
    %4626 = vmatpush2.msra.mxu0 0.0
    %4627 = vmatprep.subr.mxu0 0.0
    %4628 = vmatpush2.msra.mxu0 0.0
    %4629 = vmatprep.subr.mxu0 0.0
    %4630 = vmatpush2.msra.mxu0 0.0
    %4631 = vmatprep.subr.mxu0 0.0
    %4632 = vmatpush2.msra.mxu0 0.0
    %4633 = vmatprep.subr.mxu0 0.0
    %4634 = vmatpush2.msra.mxu0 0.0
    %4635 = vmatprep.subr.mxu0 0.0
    %4636 = vmatpush2.msra.mxu0 0.0
    %4637 = vmatprep.subr.mxu0 0.0
    %4638 = vmatpush2.msra.mxu0 0.0
    %4639 = vmatprep.subr.mxu0 0.0
    %4640 = vmatpush2.msra.mxu0 0.0
    %4641 = vmatprep.subr.mxu0 0.0
    %4642 = vmatpush2.msra.mxu0 0.0
    %4643 = vmatprep.subr.mxu0 0.0
    %4644 = vmatpush2.msra.mxu0 0.0
    %4645 = vmatprep.subr.mxu0 0.0
    %4646 = vmatpush2.msra.mxu0 0.0
    %4647 = vmatprep.subr.mxu0 0.0
    %4648 = vmatpush2.msra.mxu0 0.0
    %4649 = vmatprep.subr.mxu0 0.0
    %4650 = vmatpush2.msra.mxu0 0.0
    %4651 = vmatprep.subr.mxu0 0.0
    %4652 = vmatpush2.msra.mxu0 0.0
    %4653 = vmatprep.mubr.f32.mxu0 0.0
    %4654 = vmatmul.mubr.f32.gmra.mxu0 %v4584
    %v4655 = vpop.f32.mrf.mxu0
    %v4656 = vadd.f32 0.0, %v4655
    %v4657 = vpop.f32.mrf.mxu0
    %4658 = vmatprep.mubr.f32.mxu0 0.0
    %4659 = vmatmul.mubr.f32.gmra.mxu0 %v4587
    %v4660 = vpop.f32.mrf.mxu0
    %v4661 = vadd.f32 0.0, %v4660
    %v4662 = vpop.f32.mrf.mxu0
    %4663 = vdwg.mxu0
    %v4664 = vlaneseq
    %v4665 = vshrl.u32 %v4664, 7
    %v4666 = vsub.s32 0, %v4665
    %v4667 = vrot.slane %v4580, %v4666
    %v4668 = vadd.f32 %v4667, %v4656
    %v4669 = vadd.f32 %v4667, %v4661
    %v4671 = vlaneseq
    %v4672 = vshrl.u32 %v4671, 7
    %v4673 = vsub.s32 0, %v4672
    %v4674 = vrot.slane %v602, %v4673
    %v4676 = vadd.f32 %v4668, %v4674
    %v4677 = vadd.f32 %v4669, %v4674
    %v4678 = vmax.f32 %v4676, 0.0
    %v4679 = vmax.f32 %v4677, 0.0
    %v4681 = vlaneseq
    %v4682 = vshrl.u32 %v4681, 7
    %v4683 = vsub.s32 0, %v4682
    %v4684 = vrot.slane %v607, %v4683
    %v4687 = vsel %vm1789, %v4678, 0
    %v4690 = vsel %vm1789, %v4679, 0
    %4692 = vmatprep.subr.mxu0 0.0
    %4693 = vmatpush1.msra.mxu0 0.0
    %4694 = vmatprep.subr.mxu0 0.0
    %4695 = vmatpush1.msra.mxu0 0.0
    %4696 = vmatprep.subr.mxu0 0.0
    %4697 = vmatpush1.msra.mxu0 0.0
    %4698 = vmatprep.subr.mxu0 0.0
    %4699 = vmatpush1.msra.mxu0 0.0
    %4700 = vmatprep.subr.mxu0 0.0
    %4701 = vmatpush1.msra.mxu0 0.0
    %4702 = vmatprep.subr.mxu0 0.0
    %4703 = vmatpush1.msra.mxu0 0.0
    %4704 = vmatprep.subr.mxu0 0.0
    %4705 = vmatpush1.msra.mxu0 0.0
    %4706 = vmatprep.subr.mxu0 0.0
    %4707 = vmatpush1.msra.mxu0 0.0
    %4708 = vmatprep.subr.mxu0 0.0
    %4709 = vmatpush1.msra.mxu0 0.0
    %4710 = vmatprep.subr.mxu0 0.0
    %4711 = vmatpush1.msra.mxu0 0.0
    %4712 = vmatprep.subr.mxu0 0.0
    %4713 = vmatpush1.msra.mxu0 0.0
    %4714 = vmatprep.subr.mxu0 0.0
    %4715 = vmatpush1.msra.mxu0 0.0
    %4716 = vmatprep.subr.mxu0 0.0
    %4717 = vmatpush1.msra.mxu0 %v606
    %4718 = vmatprep.subr.mxu0 0.0
    %4719 = vmatpush1.msra.mxu0 %v605
    %4720 = vmatprep.subr.mxu0 0.0
    %4721 = vmatpush1.msra.mxu0 %v604
    %4722 = vmatprep.subr.mxu0 0.0
    %4723 = vmatpush1.msra.mxu0 %v603
    %4724 = vmatprep.subr.mxu0 0.0
    %4725 = vmatpush2.msra.mxu0 0.0
    %4726 = vmatprep.subr.mxu0 0.0
    %4727 = vmatpush2.msra.mxu0 0.0
    %4728 = vmatprep.subr.mxu0 0.0
    %4729 = vmatpush2.msra.mxu0 0.0
    %4730 = vmatprep.subr.mxu0 0.0
    %4731 = vmatpush2.msra.mxu0 0.0
    %4732 = vmatprep.subr.mxu0 0.0
    %4733 = vmatpush2.msra.mxu0 0.0
    %4734 = vmatprep.subr.mxu0 0.0
    %4735 = vmatpush2.msra.mxu0 0.0
    %4736 = vmatprep.subr.mxu0 0.0
    %4737 = vmatpush2.msra.mxu0 0.0
    %4738 = vmatprep.subr.mxu0 0.0
    %4739 = vmatpush2.msra.mxu0 0.0
    %4740 = vmatprep.subr.mxu0 0.0
    %4741 = vmatpush2.msra.mxu0 0.0
    %4742 = vmatprep.subr.mxu0 0.0
    %4743 = vmatpush2.msra.mxu0 0.0
    %4744 = vmatprep.subr.mxu0 0.0
    %4745 = vmatpush2.msra.mxu0 0.0
    %4746 = vmatprep.subr.mxu0 0.0
    %4747 = vmatpush2.msra.mxu0 0.0
    %4748 = vmatprep.subr.mxu0 0.0
    %4749 = vmatpush2.msra.mxu0 0.0
    %4750 = vmatprep.subr.mxu0 0.0
    %4751 = vmatpush2.msra.mxu0 0.0
    %4752 = vmatprep.subr.mxu0 0.0
    %4753 = vmatpush2.msra.mxu0 0.0
    %4754 = vmatprep.subr.mxu0 0.0
    %4755 = vmatpush2.msra.mxu0 0.0
    %4756 = vmatprep.mubr.f32.mxu0 0.0
    %4757 = vmatmul.mubr.f32.gmra.mxu0 %v4687
    %v4758 = vpop.f32.mrf.mxu0
    %v4759 = vadd.f32 %v4684, %v4758
    %v4760 = vpop.f32.mrf.mxu0
    %4761 = vmatprep.mubr.f32.mxu0 0.0
    %4762 = vmatmul.mubr.f32.gmra.mxu0 %v4690
    %v4763 = vpop.f32.mrf.mxu0
    %v4764 = vadd.f32 %v4684, %v4763
    %v4765 = vpop.f32.mrf.mxu0
    %4766 = vdwg.mxu0
    %4767 = vmatprep.subr.mxu0 0.0
    %4768 = vmatpush1.msra.mxu0 0.0
    %4769 = vmatprep.subr.mxu0 0.0
    %4770 = vmatpush1.msra.mxu0 0.0
    %4771 = vmatprep.subr.mxu0 0.0
    %4772 = vmatpush1.msra.mxu0 0.0
    %4773 = vmatprep.subr.mxu0 0.0
    %4774 = vmatpush1.msra.mxu0 0.0
    %4775 = vmatprep.subr.mxu0 0.0
    %4776 = vmatpush1.msra.mxu0 0.0
    %4777 = vmatprep.subr.mxu0 0.0
    %4778 = vmatpush1.msra.mxu0 0.0
    %4779 = vmatprep.subr.mxu0 0.0
    %4780 = vmatpush1.msra.mxu0 0.0
    %4781 = vmatprep.subr.mxu0 0.0
    %4782 = vmatpush1.msra.mxu0 0.0
    %4783 = vmatprep.subr.mxu0 0.0
    %4784 = vmatpush1.msra.mxu0 0.0
    %4785 = vmatprep.subr.mxu0 0.0
    %4786 = vmatpush1.msra.mxu0 0.0
    %4787 = vmatprep.subr.mxu0 0.0
    %4788 = vmatpush1.msra.mxu0 0.0
    %4789 = vmatprep.subr.mxu0 0.0
    %4790 = vmatpush1.msra.mxu0 0.0
    %4791 = vmatprep.subr.mxu0 0.0
    %4792 = vmatpush1.msra.mxu0 %v611
    %4793 = vmatprep.subr.mxu0 0.0
    %4794 = vmatpush1.msra.mxu0 %v610
    %4795 = vmatprep.subr.mxu0 0.0
    %4796 = vmatpush1.msra.mxu0 %v609
    %4797 = vmatprep.subr.mxu0 0.0
    %4798 = vmatpush1.msra.mxu0 %v608
    %4799 = vmatprep.subr.mxu0 0.0
    %4800 = vmatpush2.msra.mxu0 0.0
    %4801 = vmatprep.subr.mxu0 0.0
    %4802 = vmatpush2.msra.mxu0 0.0
    %4803 = vmatprep.subr.mxu0 0.0
    %4804 = vmatpush2.msra.mxu0 0.0
    %4805 = vmatprep.subr.mxu0 0.0
    %4806 = vmatpush2.msra.mxu0 0.0
    %4807 = vmatprep.subr.mxu0 0.0
    %4808 = vmatpush2.msra.mxu0 0.0
    %4809 = vmatprep.subr.mxu0 0.0
    %4810 = vmatpush2.msra.mxu0 0.0
    %4811 = vmatprep.subr.mxu0 0.0
    %4812 = vmatpush2.msra.mxu0 0.0
    %4813 = vmatprep.subr.mxu0 0.0
    %4814 = vmatpush2.msra.mxu0 0.0
    %4815 = vmatprep.subr.mxu0 0.0
    %4816 = vmatpush2.msra.mxu0 0.0
    %4817 = vmatprep.subr.mxu0 0.0
    %4818 = vmatpush2.msra.mxu0 0.0
    %4819 = vmatprep.subr.mxu0 0.0
    %4820 = vmatpush2.msra.mxu0 0.0
    %4821 = vmatprep.subr.mxu0 0.0
    %4822 = vmatpush2.msra.mxu0 0.0
    %4823 = vmatprep.subr.mxu0 0.0
    %4824 = vmatpush2.msra.mxu0 0.0
    %4825 = vmatprep.subr.mxu0 0.0
    %4826 = vmatpush2.msra.mxu0 0.0
    %4827 = vmatprep.subr.mxu0 0.0
    %4828 = vmatpush2.msra.mxu0 0.0
    %4829 = vmatprep.subr.mxu0 0.0
    %4830 = vmatpush2.msra.mxu0 0.0
    %4831 = vmatprep.mubr.f32.mxu0 0.0
    %4832 = vmatmul.mubr.f32.gmra.mxu0 %v4511
    %v4833 = vpop.f32.mrf.mxu0
    %v4834 = vadd.f32 0.0, %v4833
    %v4835 = vpop.f32.mrf.mxu0
    %4836 = vdwg.mxu0
    %4837 = vmatprep.subr.mxu0 0.0
    %4838 = vmatpush1.msra.mxu0 0.0
    %4839 = vmatprep.subr.mxu0 0.0
    %4840 = vmatpush1.msra.mxu0 0.0
    %4841 = vmatprep.subr.mxu0 0.0
    %4842 = vmatpush1.msra.mxu0 0.0
    %4843 = vmatprep.subr.mxu0 0.0
    %4844 = vmatpush1.msra.mxu0 0.0
    %4845 = vmatprep.subr.mxu0 0.0
    %4846 = vmatpush1.msra.mxu0 0.0
    %4847 = vmatprep.subr.mxu0 0.0
    %4848 = vmatpush1.msra.mxu0 0.0
    %4849 = vmatprep.subr.mxu0 0.0
    %4850 = vmatpush1.msra.mxu0 0.0
    %4851 = vmatprep.subr.mxu0 0.0
    %4852 = vmatpush1.msra.mxu0 0.0
    %4853 = vmatprep.subr.mxu0 0.0
    %4854 = vmatpush1.msra.mxu0 %v619
    %4855 = vmatprep.subr.mxu0 0.0
    %4856 = vmatpush1.msra.mxu0 %v618
    %4857 = vmatprep.subr.mxu0 0.0
    %4858 = vmatpush1.msra.mxu0 %v617
    %4859 = vmatprep.subr.mxu0 0.0
    %4860 = vmatpush1.msra.mxu0 %v616
    %4861 = vmatprep.subr.mxu0 0.0
    %4862 = vmatpush1.msra.mxu0 %v615
    %4863 = vmatprep.subr.mxu0 0.0
    %4864 = vmatpush1.msra.mxu0 %v614
    %4865 = vmatprep.subr.mxu0 0.0
    %4866 = vmatpush1.msra.mxu0 %v613
    %4867 = vmatprep.subr.mxu0 0.0
    %4868 = vmatpush1.msra.mxu0 %v612
    %4869 = vmatprep.subr.mxu0 0.0
    %4870 = vmatpush2.msra.mxu0 0.0
    %4871 = vmatprep.subr.mxu0 0.0
    %4872 = vmatpush2.msra.mxu0 0.0
    %4873 = vmatprep.subr.mxu0 0.0
    %4874 = vmatpush2.msra.mxu0 0.0
    %4875 = vmatprep.subr.mxu0 0.0
    %4876 = vmatpush2.msra.mxu0 0.0
    %4877 = vmatprep.subr.mxu0 0.0
    %4878 = vmatpush2.msra.mxu0 0.0
    %4879 = vmatprep.subr.mxu0 0.0
    %4880 = vmatpush2.msra.mxu0 0.0
    %4881 = vmatprep.subr.mxu0 0.0
    %4882 = vmatpush2.msra.mxu0 0.0
    %4883 = vmatprep.subr.mxu0 0.0
    %4884 = vmatpush2.msra.mxu0 0.0
    %4885 = vmatprep.subr.mxu0 0.0
    %4886 = vmatpush2.msra.mxu0 0.0
    %4887 = vmatprep.subr.mxu0 0.0
    %4888 = vmatpush2.msra.mxu0 0.0
    %4889 = vmatprep.subr.mxu0 0.0
    %4890 = vmatpush2.msra.mxu0 0.0
    %4891 = vmatprep.subr.mxu0 0.0
    %4892 = vmatpush2.msra.mxu0 0.0
    %4893 = vmatprep.subr.mxu0 0.0
    %4894 = vmatpush2.msra.mxu0 0.0
    %4895 = vmatprep.subr.mxu0 0.0
    %4896 = vmatpush2.msra.mxu0 0.0
    %4897 = vmatprep.subr.mxu0 0.0
    %4898 = vmatpush2.msra.mxu0 0.0
    %4899 = vmatprep.subr.mxu0 0.0
    %4900 = vmatpush2.msra.mxu0 0.0
    %4901 = vmatprep.mubr.f32.mxu0 0.0
    %4902 = vmatmul.mubr.f32.gmra.mxu0 %v4338
    %v4903 = vpop.f32.mrf.mxu0
    %v4904 = vadd.f32 0.0, %v4903
    %v4905 = vpop.f32.mrf.mxu0
    %4906 = vmatprep.mubr.f32.mxu0 0.0
    %4907 = vmatmul.mubr.f32.gmra.mxu0 %v4340
    %v4908 = vpop.f32.mrf.mxu0
    %v4909 = vadd.f32 0.0, %v4908
    %v4910 = vpop.f32.mrf.mxu0
    %4911 = vdwg.mxu0
    %v4912 = vlaneseq
    %v4913 = vshrl.u32 %v4912, 7
    %v4914 = vsub.s32 0, %v4913
    %v4915 = vrot.slane %v4834, %v4914
    %v4916 = vadd.f32 %v4915, %v4904
    %v4917 = vadd.f32 %v4915, %v4909
    %v4919 = vlaneseq
    %v4920 = vshrl.u32 %v4919, 7
    %v4921 = vsub.s32 0, %v4920
    %v4922 = vrot.slane %v620, %v4921
    %v4924 = vadd.f32 %v4916, %v4922
    %v4925 = vadd.f32 %v4917, %v4922
    %v4926 = vmax.f32 %v4924, 0.0
    %v4927 = vmax.f32 %v4925, 0.0
    %v4929 = vlaneseq
    %v4930 = vshrl.u32 %v4929, 7
    %v4931 = vsub.s32 0, %v4930
    %v4932 = vrot.slane %v625, %v4931
    %v4935 = vsel %vm1789, %v4926, 0
    %v4938 = vsel %vm1789, %v4927, 0
    %4940 = vmatprep.subr.mxu0 0.0
    %4941 = vmatpush1.msra.mxu0 0.0
    %4942 = vmatprep.subr.mxu0 0.0
    %4943 = vmatpush1.msra.mxu0 0.0
    %4944 = vmatprep.subr.mxu0 0.0
    %4945 = vmatpush1.msra.mxu0 0.0
    %4946 = vmatprep.subr.mxu0 0.0
    %4947 = vmatpush1.msra.mxu0 0.0
    %4948 = vmatprep.subr.mxu0 0.0
    %4949 = vmatpush1.msra.mxu0 0.0
    %4950 = vmatprep.subr.mxu0 0.0
    %4951 = vmatpush1.msra.mxu0 0.0
    %4952 = vmatprep.subr.mxu0 0.0
    %4953 = vmatpush1.msra.mxu0 0.0
    %4954 = vmatprep.subr.mxu0 0.0
    %4955 = vmatpush1.msra.mxu0 0.0
    %4956 = vmatprep.subr.mxu0 0.0
    %4957 = vmatpush1.msra.mxu0 0.0
    %4958 = vmatprep.subr.mxu0 0.0
    %4959 = vmatpush1.msra.mxu0 0.0
    %4960 = vmatprep.subr.mxu0 0.0
    %4961 = vmatpush1.msra.mxu0 0.0
    %4962 = vmatprep.subr.mxu0 0.0
    %4963 = vmatpush1.msra.mxu0 0.0
    %4964 = vmatprep.subr.mxu0 0.0
    %4965 = vmatpush1.msra.mxu0 %v624
    %4966 = vmatprep.subr.mxu0 0.0
    %4967 = vmatpush1.msra.mxu0 %v623
    %4968 = vmatprep.subr.mxu0 0.0
    %4969 = vmatpush1.msra.mxu0 %v622
    %4970 = vmatprep.subr.mxu0 0.0
    %4971 = vmatpush1.msra.mxu0 %v621
    %4972 = vmatprep.subr.mxu0 0.0
    %4973 = vmatpush2.msra.mxu0 0.0
    %4974 = vmatprep.subr.mxu0 0.0
    %4975 = vmatpush2.msra.mxu0 0.0
    %4976 = vmatprep.subr.mxu0 0.0
    %4977 = vmatpush2.msra.mxu0 0.0
    %4978 = vmatprep.subr.mxu0 0.0
    %4979 = vmatpush2.msra.mxu0 0.0
    %4980 = vmatprep.subr.mxu0 0.0
    %4981 = vmatpush2.msra.mxu0 0.0
    %4982 = vmatprep.subr.mxu0 0.0
    %4983 = vmatpush2.msra.mxu0 0.0
    %4984 = vmatprep.subr.mxu0 0.0
    %4985 = vmatpush2.msra.mxu0 0.0
    %4986 = vmatprep.subr.mxu0 0.0
    %4987 = vmatpush2.msra.mxu0 0.0
    %4988 = vmatprep.subr.mxu0 0.0
    %4989 = vmatpush2.msra.mxu0 0.0
    %4990 = vmatprep.subr.mxu0 0.0
    %4991 = vmatpush2.msra.mxu0 0.0
    %4992 = vmatprep.subr.mxu0 0.0
    %4993 = vmatpush2.msra.mxu0 0.0
    %4994 = vmatprep.subr.mxu0 0.0
    %4995 = vmatpush2.msra.mxu0 0.0
    %4996 = vmatprep.subr.mxu0 0.0
    %4997 = vmatpush2.msra.mxu0 0.0
    %4998 = vmatprep.subr.mxu0 0.0
    %4999 = vmatpush2.msra.mxu0 0.0
    %5000 = vmatprep.subr.mxu0 0.0
    %5001 = vmatpush2.msra.mxu0 0.0
    %5002 = vmatprep.subr.mxu0 0.0
    %5003 = vmatpush2.msra.mxu0 0.0
    %5004 = vmatprep.mubr.f32.mxu0 0.0
    %5005 = vmatmul.mubr.f32.gmra.mxu0 %v4935
    %v5006 = vpop.f32.mrf.mxu0
    %v5007 = vadd.f32 %v4932, %v5006
    %v5008 = vpop.f32.mrf.mxu0
    %5009 = vmatprep.mubr.f32.mxu0 0.0
    %5010 = vmatmul.mubr.f32.gmra.mxu0 %v4938
    %v5011 = vpop.f32.mrf.mxu0
    %v5012 = vadd.f32 %v4932, %v5011
    %v5013 = vpop.f32.mrf.mxu0
    %5014 = vdwg.mxu0
    %v5016 = vlaneseq
    %v5017 = vshrl.u32 %v5016, 7
    %v5018 = vsub.s32 0, %v5017
    %v5019 = vrot.slane %v593, %v5018
    %5021 = vmatprep.subr.mxu0 0.0
    %5022 = vmatpush1.msra.mxu0 0.0
    %5023 = vmatprep.subr.mxu0 0.0
    %5024 = vmatpush1.msra.mxu0 0.0
    %5025 = vmatprep.subr.mxu0 0.0
    %5026 = vmatpush1.msra.mxu0 0.0
    %5027 = vmatprep.subr.mxu0 0.0
    %5028 = vmatpush1.msra.mxu0 0.0
    %5029 = vmatprep.subr.mxu0 0.0
    %5030 = vmatpush1.msra.mxu0 0.0
    %5031 = vmatprep.subr.mxu0 0.0
    %5032 = vmatpush1.msra.mxu0 0.0
    %5033 = vmatprep.subr.mxu0 0.0
    %5034 = vmatpush1.msra.mxu0 0.0
    %5035 = vmatprep.subr.mxu0 0.0
    %5036 = vmatpush1.msra.mxu0 0.0
    %5037 = vmatprep.subr.mxu0 0.0
    %5038 = vmatpush1.msra.mxu0 0.0
    %5039 = vmatprep.subr.mxu0 0.0
    %5040 = vmatpush1.msra.mxu0 0.0
    %5041 = vmatprep.subr.mxu0 0.0
    %5042 = vmatpush1.msra.mxu0 0.0
    %5043 = vmatprep.subr.mxu0 0.0
    %5044 = vmatpush1.msra.mxu0 0.0
    %5045 = vmatprep.subr.mxu0 0.0
    %5046 = vmatpush1.msra.mxu0 %v592
    %5047 = vmatprep.subr.mxu0 0.0
    %5048 = vmatpush1.msra.mxu0 %v591
    %5049 = vmatprep.subr.mxu0 0.0
    %5050 = vmatpush1.msra.mxu0 %v590
    %5051 = vmatprep.subr.mxu0 0.0
    %5052 = vmatpush1.msra.mxu0 %v589
    %5053 = vmatprep.subr.mxu0 0.0
    %5054 = vmatpush2.msra.mxu0 0.0
    %5055 = vmatprep.subr.mxu0 0.0
    %5056 = vmatpush2.msra.mxu0 0.0
    %5057 = vmatprep.subr.mxu0 0.0
    %5058 = vmatpush2.msra.mxu0 0.0
    %5059 = vmatprep.subr.mxu0 0.0
    %5060 = vmatpush2.msra.mxu0 0.0
    %5061 = vmatprep.subr.mxu0 0.0
    %5062 = vmatpush2.msra.mxu0 0.0
    %5063 = vmatprep.subr.mxu0 0.0
    %5064 = vmatpush2.msra.mxu0 0.0
    %5065 = vmatprep.subr.mxu0 0.0
    %5066 = vmatpush2.msra.mxu0 0.0
    %5067 = vmatprep.subr.mxu0 0.0
    %5068 = vmatpush2.msra.mxu0 0.0
    %5069 = vmatprep.subr.mxu0 0.0
    %5070 = vmatpush2.msra.mxu0 0.0
    %5071 = vmatprep.subr.mxu0 0.0
    %5072 = vmatpush2.msra.mxu0 0.0
    %5073 = vmatprep.subr.mxu0 0.0
    %5074 = vmatpush2.msra.mxu0 0.0
    %5075 = vmatprep.subr.mxu0 0.0
    %5076 = vmatpush2.msra.mxu0 0.0
    %5077 = vmatprep.subr.mxu0 0.0
    %5078 = vmatpush2.msra.mxu0 0.0
    %5079 = vmatprep.subr.mxu0 0.0
    %5080 = vmatpush2.msra.mxu0 0.0
    %5081 = vmatprep.subr.mxu0 0.0
    %5082 = vmatpush2.msra.mxu0 0.0
    %5083 = vmatprep.subr.mxu0 0.0
    %5084 = vmatpush2.msra.mxu0 0.0
    %5085 = vmatprep.mubr.f32.mxu0 0.0
    %5086 = vmatmul.mubr.f32.gmra.mxu0 %v4584
    %v5087 = vpop.f32.mrf.mxu0
    %v5088 = vadd.f32 %v5019, %v5087
    %v5089 = vpop.f32.mrf.mxu0
    %5090 = vmatprep.mubr.f32.mxu0 0.0
    %5091 = vmatmul.mubr.f32.gmra.mxu0 %v4587
    %v5092 = vpop.f32.mrf.mxu0
    %v5093 = vadd.f32 %v5019, %v5092
    %v5094 = vpop.f32.mrf.mxu0
    %5095 = vdwg.mxu0
    %5096 = vst.msk [vmem:[#allocation35] sm:$0xff] %vm628, %v5088
    %5097 = vst.msk [vmem:[#allocation35 + $0x8] sm:$0xff] %vm628, %v5093
    %vm5098 = vcmask 58368
    %5099 = vst.msk [vmem:[#allocation36] sm:$0x3] %vm5098, %v4329
    %vm5100 = vcmask 7168
    %5101 = vst.msk [vmem:[%s77] sm:$0xff] %vm5100, %v4426
    %5102 = vst.msk [vmem:[%s77 + $0x8] sm:$0xff] %vm5100, %v4428
    %5103 = vst.msk [vmem:[#allocation38] sm:$0xff] %vm777, %v4759
    %5104 = vst.msk [vmem:[#allocation38 + $0x8] sm:$0xff] %vm777, %v4764
    %5105 = vst.msk [vmem:[#allocation39] sm:$0xff] %vm1130, %v5007
    %5106 = vst.msk [vmem:[#allocation39 + $0x8] sm:$0xff] %vm1130, %v5012
    // Predicated region
    $region226: #{_lambda_.1} parent=1 // pred_check
      _
    $region227: #{_lambda_.1} parent=1 // pred_check_branch
      %5108 = sbr.rel (0) target = $region229
    $region228: #{_lambda_.1} parent=1 // pred_region
      %s5110 = ssub.s32 256, 256
      %5111 = vsyncadd [#allocation5], %s5110
      %s5112 = sshll.u32 [#allocation35], 4
      %s5113 = int_to_ptr.vmem [resolvable:$true] %s5112
      %5118 = dma.vmem_to_hbm [thread:$0]  %s5113, 256, %s73, [#allocation5], 128, 128, 8
    $region229: #{_lambda_.1} parent=1 // pred_fallthru
      _
    // Predicated region
    $region230: #{_lambda_.1} parent=1 // pred_check
      _
    $region231: #{_lambda_.1} parent=1 // pred_check_branch
      %5120 = sbr.rel (0) target = $region233
    $region232: #{_lambda_.1} parent=1 // pred_region
      %s5122 = ssub.s32 32, 32
      %5123 = vsyncadd [#allocation37], %s5122
      %s5125 = sshll.u32 [#allocation36], 4
      %s5126 = int_to_ptr.vmem [resolvable:$true] %s5125
      %5128 = dma.vmem_to_hbm [thread:$0]  %s5126, 32, %s75, [#allocation37]
    $region233: #{_lambda_.1} parent=1 // pred_fallthru
      _
    // Predicated region
    $region234: #{_lambda_.1} parent=1 // pred_check
      _
    $region235: #{_lambda_.1} parent=1 // pred_check_branch
      %5130 = sbr.rel (0) target = $region237
    $region236: #{_lambda_.1} parent=1 // pred_region
      _
    $region237: #{_lambda_.1} parent=1 // pred_fallthru
      _
    // Predicated region
    $region238: #{_lambda_.1} parent=1 // pred_check
      _
    $region239: #{_lambda_.1} parent=1 // pred_check_branch
      %5132 = sbr.rel (0) target = $region241
    $region240: #{_lambda_.1} parent=1 // pred_region
      %s5134 = ssub.s32 256, 256
      %5135 = vsyncadd [#allocation37], %s5134
      %s5136 = sshll.u32 [#allocation38], 4
      %s5137 = int_to_ptr.vmem [resolvable:$true] %s5136
      %5142 = dma.vmem_to_hbm [thread:$0]  %s5137, 256, %s79, [#allocation37], 128, 128, 8
    $region241: #{_lambda_.1} parent=1 // pred_fallthru
      _
    // Predicated region
    $region242: #{_lambda_.1} parent=1 // pred_check
      _
    $region243: #{_lambda_.1} parent=1 // pred_check_branch
      %5144 = sbr.rel (0) target = $region245
    $region244: #{_lambda_.1} parent=1 // pred_region
      %s5146 = ssub.s32 256, 256
      %5147 = vsyncadd [#allocation40], %s5146
      %s5148 = sshll.u32 [#allocation39], 4
      %s5149 = int_to_ptr.vmem [resolvable:$true] %s5148
      %5154 = dma.vmem_to_hbm [thread:$0]  %s5149, 256, %s81, [#allocation40], 128, 128, 8
    $region245: #{_lambda_.1} parent=1 // pred_fallthru
      _
    // Predicated region
    $region246: #{_lambda_.1} parent=1 // pred_check
      _
    $region247: #{_lambda_.1} parent=1 // pred_check_branch
      %5156 = sbr.rel (0) target = $region249
    $region248: #{_lambda_.1} parent=1 // pred_region
      %5157 = dma.done [#allocation5], 256
    $region249: #{_lambda_.1} parent=1 // pred_fallthru
      _
    // Predicated region
    $region250: #{_lambda_.1} parent=1 // pred_check
      _
    $region251: #{_lambda_.1} parent=1 // pred_check_branch
      %5159 = sbr.rel (0) target = $region253
    $region252: #{_lambda_.1} parent=1 // pred_region
      %5160 = dma.done [#allocation37], 32
    $region253: #{_lambda_.1} parent=1 // pred_fallthru
      _
    // Predicated region
    $region254: #{_lambda_.1} parent=1 // pred_check
      _
    $region255: #{_lambda_.1} parent=1 // pred_check_branch
      %5162 = sbr.rel (0) target = $region257
    $region256: #{_lambda_.1} parent=1 // pred_region
      _
    $region257: #{_lambda_.1} parent=1 // pred_fallthru
      _
    // Predicated region
    $region258: #{_lambda_.1} parent=1 // pred_check
      _
    $region259: #{_lambda_.1} parent=1 // pred_check_branch
      %5164 = sbr.rel (0) target = $region261
    $region260: #{_lambda_.1} parent=1 // pred_region
      %5165 = dma.done [#allocation37], 256
    $region261: #{_lambda_.1} parent=1 // pred_fallthru
      _
    // Predicated region
    $region262: #{_lambda_.1} parent=1 // pred_check
      _
    $region263: #{_lambda_.1} parent=1 // pred_check_branch
      %5167 = sbr.rel (0) target = $region265
    $region264: #{_lambda_.1} parent=1 // pred_region
      %5168 = dma.done [#allocation40], 256
    $region265: #{_lambda_.1} parent=1 // pred_fallthru
      _
    %5169 = vsyncpa [#allocation4], 1
    %5170 = vsyncpa [#allocation7], 1
    %5171 = vsyncpa [#allocation10], 1
    %5172 = vsyncpa [#allocation13], 1
    %5173 = vsyncpa [#allocation16], 1
    %5174 = vsyncpa [#allocation19], 1
    %5175 = vsyncpa [#allocation22], 1
    %5176 = vsyncpa [#allocation25], 1
    %5177 = vsyncpa [#allocation28], 1
    %5178 = vsyncpa [#allocation31], 1
    %5179 = vsyncpa [#allocation34], 1
    %5180 = vsyncpa [#allocation5], 1
    %5181 = vsyncpa [#allocation37], 1
    %5182 = vsyncpa [#allocation40], 1

</llo_original>
